<compile_context>
chip_gen: v7x
topology: tpu7x:2x2x1
jax: 0.10.0
libtpu: 0.0.40
codegen_flags: <defaults>
</compile_context>

<pallas_src>
import math

import jax
import jax.numpy as jnp
from jax.experimental import pallas as pl
from jax.experimental.pallas import tpu as pltpu

# Board.numpy_shape (synthetic, small): C x H x W
C, H, W = 4, 32, 32
FEATURES_DIM = 128
N_OTHERS = 16
BOARD_REGION = C * H * W
OBS_DIM = BOARD_REGION + N_OTHERS

# conv geometry (valid padding): conv1 k=8 s=4, conv2 k=4 s=2
K1, S1 = 8, 4
K2, S2 = 4, 2
OH1 = (H - K1) // S1 + 1          # 7
OW1 = (W - K1) // S1 + 1          # 7
OH2 = (OH1 - K2) // S2 + 1        # 2
OW2 = (OW1 - K2) // S2 + 1        # 2
C1, C2 = 32, 64
N_FLATTEN = C2 * OH2 * OW2        # 256

# fused-kernel geometry
N_H1_ROWS = S2 * (OH2 - 1) + K2   # 6: h1 rows actually consumed by conv2
N_H1_COLS = S2 * (OW2 - 1) + K2   # 6: h1 cols actually consumed by conv2
STRIP_K = K1 * W * C              # 1024: one board row-strip, flattened (kh, w, c)
H1_N = N_H1_COLS * C1             # 192: conv1 output lanes (ow, c1)
H2_N = OH2 * OW2 * C2             # 256: conv2 output lanes (oh2, ow2, c2)


def _round_up(v, m):
    return ((v + m - 1) // m) * m


# ------------------------------ fused kernel ------------------------------- #
def _fused_net_kernel(strips_ref, oth_ref,
                      w1_ref, b1_ref, w2_ref, b2_ref,
                      lw_ref, lb_ref, m1w_ref, m1b_ref, m2w_ref, m2b_ref,
                      fwa_ref, fwb_ref, fb_ref,
                      out_ref):
    f32 = jnp.float32
    bf16 = jnp.bfloat16
    tb = out_ref.shape[0]

    # conv1 + conv2 fused per h1 row (only the 6 rows conv2 reads are computed).
    h2 = jnp.zeros((tb, H2_N), f32)
    for r in range(N_H1_ROWS):
        h1r = jnp.dot(strips_ref[r], w1_ref[...], preferred_element_type=f32)
        h1r = jnp.maximum(h1r + b1_ref[...], 0.0).astype(bf16)        # (tb, 192)
        h2 = h2 + jnp.dot(h1r, w2_ref[r], preferred_element_type=f32)  # (tb, 256)
    h2 = jnp.maximum(h2 + b2_ref[...], 0.0).astype(bf16)

    # flatten + linear (flatten order folded into lw in the wrapper).
    bf = jnp.dot(h2, lw_ref[...], preferred_element_type=f32) + lb_ref[...]
    bf = jnp.maximum(bf, 0.0).astype(bf16)                             # (tb, 128)

    # others MLP: Linear+Tanh, Linear+Tanh.
    m = jnp.tanh(jnp.dot(oth_ref[...], m1w_ref[...], preferred_element_type=f32)
                 + m1b_ref[...]).astype(bf16)
    m = jnp.tanh(jnp.dot(m, m2w_ref[...], preferred_element_type=f32)
                 + m2b_ref[...]).astype(bf16)

    # final: concat-free — split weight, two partial matmuls into one accumulator.
    y = (jnp.dot(bf, fwa_ref[...], preferred_element_type=f32)
         + jnp.dot(m, fwb_ref[...], preferred_element_type=f32)
         + fb_ref[...])
    out_ref[...] = jnp.tanh(y)


# ------------------------------- wrapper ----------------------------------- #
def net_forward(params, x):
    B = x.shape[0]
    f32, bf16 = jnp.float32, jnp.bfloat16

    # TB samples per grid step (review: 32-128).  For production B this gives a
    # multi-step grid (>= 2 steps keeps both v7x TensorCores busy); for the tiny
    # test batch we pad up to one 8-sublane-aligned step.
    TB = min(64, _round_up(B, 8))
    B_pad = _round_up(B, TB)

    # ---- activations: overlapping board row-strips, one per used h1 row ------
    board = x[:, :BOARD_REGION].reshape(B, C, H, W).transpose(0, 2, 3, 1)  # NHWC
    bflat = board.reshape(B, H, W * C)                                     # (B, 32, 128)
    strips = jnp.stack(
        [bflat[:, S1 * r:S1 * r + K1, :].reshape(B, STRIP_K)
         for r in range(N_H1_ROWS)], axis=0).astype(bf16)                  # (6, B, 1024)
    oth = x[:, BOARD_REGION:].astype(bf16)                                 # (B, 16)
    if B_pad != B:
        strips = jnp.pad(strips, ((0, 0), (0, B_pad - B), (0, 0)))
        oth = jnp.pad(oth, ((0, B_pad - B), (0, 0)))

    # ---- one-time weight relayouts (would be cached once in deployment) ------
    # conv1 as a row-strip matmul: W1strip[(kh, w, c), (ow, c1)], zero-padded
    # where kw = w - 4*ow is outside the 8-wide window.
    w1p = params["conv1_w"].transpose(2, 3, 1, 0).reshape(K1, K1 * C, C1)  # (kh, kw*C+c, c1)
    w1s = jnp.zeros((K1, W * C, N_H1_COLS, C1), f32)
    for ow in range(N_H1_COLS):
        w1s = w1s.at[:, S1 * C * ow:S1 * C * ow + K1 * C, ow, :].set(w1p)
    w1s = w1s.reshape(STRIP_K, H1_N).astype(bf16)
    b1t = jnp.tile(params["conv1_b"], N_H1_COLS).reshape(1, H1_N).astype(f32)

    # conv2 as per-h1-row matmuls into the flattened (oh2, ow2, c2) output.
    w2p = params["conv2_w"].transpose(2, 3, 1, 0)                          # (kh2, kw2, c1, c2)
    w2r = jnp.zeros((N_H1_ROWS, N_H1_COLS, C1, OH2, OW2, C2), f32)
    for r in range(N_H1_ROWS):
        for oh2 in range(OH2):
            kh2 = r - S2 * oh2
            if 0 <= kh2 < K2:
                for ow2 in range(OW2):
                    for kw2 in range(K2):
                        w2r = w2r.at[r, S2 * ow2 + kw2, :, oh2, ow2, :].set(
                            w2p[kh2, kw2])
    w2r = w2r.reshape(N_H1_ROWS, H1_N, H2_N).astype(bf16)
    b2t = jnp.tile(params["conv2_b"], OH2 * OW2).reshape(1, H2_N).astype(f32)

    # linear: permute rows from torch NCHW-flatten (c2, oh2, ow2) to (oh2, ow2, c2).
    lw = (params["lin_w"].reshape(C2, OH2, OW2, FEATURES_DIM)
          .transpose(1, 2, 0, 3).reshape(H2_N, FEATURES_DIM).astype(bf16))
    lb = params["lin_b"].reshape(1, FEATURES_DIM).astype(f32)
    m1w = params["mlp1_w"].astype(bf16)
    m1b = params["mlp1_b"].reshape(1, FEATURES_DIM).astype(f32)
    m2w = params["mlp2_w"].astype(bf16)
    m2b = params["mlp2_b"].reshape(1, FEATURES_DIM).astype(f32)
    fwa = params["final_w"][:FEATURES_DIM].astype(bf16)
    fwb = params["final_w"][FEATURES_DIM:].astype(bf16)
    fb = params["final_b"].reshape(1, FEATURES_DIM).astype(f32)

    def cw2(shape):   # constant (weight-resident) 2-D block
        return pl.BlockSpec(shape, lambda i: (0, 0))

    out = pl.pallas_call(
        _fused_net_kernel,
        out_shape=jax.ShapeDtypeStruct((B_pad, FEATURES_DIM), jnp.float32),
        grid=(B_pad // TB,),
        in_specs=[
            pl.BlockSpec((N_H1_ROWS, TB, STRIP_K), lambda i: (0, i, 0)),     # strips
            pl.BlockSpec((TB, N_OTHERS), lambda i: (i, 0)),                  # others
            cw2((STRIP_K, H1_N)), cw2((1, H1_N)),                            # conv1 w,b
            pl.BlockSpec((N_H1_ROWS, H1_N, H2_N), lambda i: (0, 0, 0)),      # conv2 w
            cw2((1, H2_N)),                                                  # conv2 b
            cw2((H2_N, FEATURES_DIM)), cw2((1, FEATURES_DIM)),               # linear w,b
            cw2((N_OTHERS, FEATURES_DIM)), cw2((1, FEATURES_DIM)),           # mlp1 w,b
            cw2((FEATURES_DIM, FEATURES_DIM)), cw2((1, FEATURES_DIM)),       # mlp2 w,b
            cw2((FEATURES_DIM, FEATURES_DIM)),                               # final w (board)
            cw2((FEATURES_DIM, FEATURES_DIM)),                               # final w (others)
            cw2((1, FEATURES_DIM)),                                          # final b
        ],
        out_specs=pl.BlockSpec((TB, FEATURES_DIM), lambda i: (i, 0)),
        compiler_params=pltpu.CompilerParams(
            dimension_semantics=("parallel",)),
    )(strips, oth, w1s, b1t, w2r, b2t, lw, lb, m1w, m1b, m2w, m2b, fwa, fwb, fb)
    return out[:B]


# ---------------------- deterministic parameter init ----------------------- #
def _uniform(key, shape, fan_in):
    bound = 1.0 / math.sqrt(fan_in)
    return jax.random.uniform(key, shape, jnp.float32, -bound, bound)


def init_params(key):
    ks = jax.random.split(key, 12)
    p = {}
    p["conv1_w"] = _uniform(ks[0], (C1, C, K1, K1), C * K1 * K1)
    p["conv1_b"] = _uniform(ks[1], (C1,), C * K1 * K1)
    p["conv2_w"] = _uniform(ks[2], (C2, C1, K2, K2), C1 * K2 * K2)
    p["conv2_b"] = _uniform(ks[3], (C2,), C1 * K2 * K2)
    p["lin_w"] = _uniform(ks[4], (N_FLATTEN, FEATURES_DIM), N_FLATTEN)
    p["lin_b"] = _uniform(ks[5], (FEATURES_DIM,), N_FLATTEN)
    p["mlp1_w"] = _uniform(ks[6], (N_OTHERS, FEATURES_DIM), N_OTHERS)
    p["mlp1_b"] = _uniform(ks[7], (FEATURES_DIM,), N_OTHERS)
    p["mlp2_w"] = _uniform(ks[8], (FEATURES_DIM, FEATURES_DIM), FEATURES_DIM)
    p["mlp2_b"] = _uniform(ks[9], (FEATURES_DIM,), FEATURES_DIM)
    p["final_w"] = _uniform(ks[10], (2 * FEATURES_DIM, FEATURES_DIM), 2 * FEATURES_DIM)
    p["final_b"] = _uniform(ks[11], (FEATURES_DIM,), 2 * FEATURES_DIM)
    return p


# ------------------------ pure-JAX reference check ------------------------- #
def net_forward_ref(params, x):
    B = x.shape[0]
    board = x[:, :BOARD_REGION].reshape(B, C, H, W)
    h1 = jax.nn.relu(
        jax.lax.conv_general_dilated(
            board, params["conv1_w"], (S1, S1), "VALID",
            dimension_numbers=("NCHW", "OIHW", "NCHW"))
        + params["conv1_b"][None, :, None, None])
    h2 = jax.nn.relu(
        jax.lax.conv_general_dilated(
            h1, params["conv2_w"], (S2, S2), "VALID",
            dimension_numbers=("NCHW", "OIHW", "NCHW"))
        + params["conv2_b"][None, :, None, None])
    flat = h2.reshape(B, -1)
    bf = jax.nn.relu(flat @ params["lin_w"] + params["lin_b"])
    m = jnp.tanh(x[:, BOARD_REGION:] @ params["mlp1_w"] + params["mlp1_b"])
    m = jnp.tanh(m @ params["mlp2_w"] + params["mlp2_b"])
    cat = jnp.concatenate([bf, m], axis=1)
    return jnp.tanh(cat @ params["final_w"] + params["final_b"])


if __name__ == "__main__":
    params = init_params(jax.random.PRNGKey(1))
    x = jax.random.normal(jax.random.PRNGKey(0), (2, OBS_DIM), jnp.float32)

    out = jax.block_until_ready(jax.jit(net_forward)(params, x))
    ref = net_forward_ref(params, x)

    assert out.shape == (2, FEATURES_DIM), out.shape
    assert jnp.allclose(out, ref, atol=3e-2, rtol=3e-2), "Pallas/reference mismatch"
    print("KERNEL_OK")
</pallas_src>

<mosaic_0001>
module attributes {stable_mosaic.version = 11 : i64} {
  func.func @_fused_net_kernel(%arg0: i32, %arg1: memref<6x8x1024xbf16, #tpu.memory_space<vmem>>, %arg2: memref<8x16xbf16, #tpu.memory_space<vmem>>, %arg3: memref<1024x192xbf16, #tpu.memory_space<vmem>>, %arg4: memref<1x192xf32, #tpu.memory_space<vmem>>, %arg5: memref<6x192x256xbf16, #tpu.memory_space<vmem>>, %arg6: memref<1x256xf32, #tpu.memory_space<vmem>>, %arg7: memref<256x128xbf16, #tpu.memory_space<vmem>>, %arg8: memref<1x128xf32, #tpu.memory_space<vmem>>, %arg9: memref<16x128xbf16, #tpu.memory_space<vmem>>, %arg10: memref<1x128xf32, #tpu.memory_space<vmem>>, %arg11: memref<128x128xbf16, #tpu.memory_space<vmem>>, %arg12: memref<1x128xf32, #tpu.memory_space<vmem>>, %arg13: memref<128x128xbf16, #tpu.memory_space<vmem>>, %arg14: memref<128x128xbf16, #tpu.memory_space<vmem>>, %arg15: memref<1x128xf32, #tpu.memory_space<vmem>>, %arg16: memref<8x128xf32, #tpu.memory_space<vmem>>) attributes {dimension_semantics = [#tpu.dimension_semantics<parallel>], iteration_bounds = array<i64: 1>, scalar_prefetch = 0 : i64, scratch_operands = 0 : i64, tpu.core_type = #tpu.core_type<tc>, window_params = [{transform_indices = @transform_0, window_bounds = array<i64: 6, 8, 1024>}, {transform_indices = @transform_1, window_bounds = array<i64: 8, 16>}, {pipeline_mode = #tpu.pipeline_mode<synchronous>, transform_indices = @transform_2, window_bounds = array<i64: 1024, 192>}, {pipeline_mode = #tpu.pipeline_mode<synchronous>, transform_indices = @transform_3, window_bounds = array<i64: 1, 192>}, {pipeline_mode = #tpu.pipeline_mode<synchronous>, transform_indices = @transform_4, window_bounds = array<i64: 6, 192, 256>}, {pipeline_mode = #tpu.pipeline_mode<synchronous>, transform_indices = @transform_5, window_bounds = array<i64: 1, 256>}, {pipeline_mode = #tpu.pipeline_mode<synchronous>, transform_indices = @transform_6, window_bounds = array<i64: 256, 128>}, {pipeline_mode = #tpu.pipeline_mode<synchronous>, transform_indices = @transform_7, window_bounds = array<i64: 1, 128>}, {pipeline_mode = #tpu.pipeline_mode<synchronous>, transform_indices = @transform_8, window_bounds = array<i64: 16, 128>}, {pipeline_mode = #tpu.pipeline_mode<synchronous>, transform_indices = @transform_9, window_bounds = array<i64: 1, 128>}, {pipeline_mode = #tpu.pipeline_mode<synchronous>, transform_indices = @transform_10, window_bounds = array<i64: 128, 128>}, {pipeline_mode = #tpu.pipeline_mode<synchronous>, transform_indices = @transform_11, window_bounds = array<i64: 1, 128>}, {pipeline_mode = #tpu.pipeline_mode<synchronous>, transform_indices = @transform_12, window_bounds = array<i64: 128, 128>}, {pipeline_mode = #tpu.pipeline_mode<synchronous>, transform_indices = @transform_13, window_bounds = array<i64: 128, 128>}, {pipeline_mode = #tpu.pipeline_mode<synchronous>, transform_indices = @transform_14, window_bounds = array<i64: 1, 128>}, {transform_indices = @transform_15, window_bounds = array<i64: 8, 128>}]} {
    %cst = arith.constant 0.000000e+00 : f32
    %0 = vector.broadcast %cst : f32 to vector<8x256xf32>
    %c0 = arith.constant 0 : index
    %c0_0 = arith.constant 0 : index
    %c0_1 = arith.constant 0 : index
    %1 = vector.load %arg1[%c0, %c0_0, %c0_1] : memref<6x8x1024xbf16, #tpu.memory_space<vmem>>, vector<1x8x1024xbf16>
    %2 = vector.shape_cast %1 : vector<1x8x1024xbf16> to vector<8x1024xbf16>
    %c0_2 = arith.constant 0 : index
    %c0_3 = arith.constant 0 : index
    %3 = vector.load %arg3[%c0_2, %c0_3] : memref<1024x192xbf16, #tpu.memory_space<vmem>>, vector<1024x192xbf16>
    %cst_4 = arith.constant dense<0.000000e+00> : vector<8x192xf32>
    %4 = tpu.matmul %2, %3, %cst_4 {dimension_numbers = #tpu.dot_dimension_numbers<[1], [0], [0], [1], [0, 0, 1, 1], [], []>} : vector<8x1024xbf16>, vector<1024x192xbf16>, vector<8x192xf32> -> vector<8x192xf32>
    %c0_5 = arith.constant 0 : index
    %c0_6 = arith.constant 0 : index
    %5 = vector.load %arg4[%c0_5, %c0_6] : memref<1x192xf32, #tpu.memory_space<vmem>>, vector<1x192xf32>
    %6 = vector.broadcast %5 : vector<1x192xf32> to vector<8x192xf32>
    %7 = arith.addf %4, %6 : vector<8x192xf32>
    %cst_7 = arith.constant 0.000000e+00 : f32
    %8 = vector.broadcast %cst_7 : f32 to vector<8x192xf32>
    %9 = arith.maximumf %7, %8 : vector<8x192xf32>
    %10 = arith.truncf %9 : vector<8x192xf32> to vector<8x192xbf16>
    %c0_8 = arith.constant 0 : index
    %c0_9 = arith.constant 0 : index
    %c0_10 = arith.constant 0 : index
    %11 = vector.load %arg5[%c0_8, %c0_9, %c0_10] : memref<6x192x256xbf16, #tpu.memory_space<vmem>>, vector<1x192x256xbf16>
    %12 = vector.shape_cast %11 : vector<1x192x256xbf16> to vector<192x256xbf16>
    %cst_11 = arith.constant dense<0.000000e+00> : vector<8x256xf32>
    %13 = tpu.matmul %10, %12, %cst_11 {dimension_numbers = #tpu.dot_dimension_numbers<[1], [0], [0], [1], [0, 0, 1, 1], [], []>} : vector<8x192xbf16>, vector<192x256xbf16>, vector<8x256xf32> -> vector<8x256xf32>
    %14 = arith.addf %0, %13 : vector<8x256xf32>
    %c1 = arith.constant 1 : index
    %c0_12 = arith.constant 0 : index
    %c0_13 = arith.constant 0 : index
    %15 = vector.load %arg1[%c1, %c0_12, %c0_13] : memref<6x8x1024xbf16, #tpu.memory_space<vmem>>, vector<1x8x1024xbf16>
    %16 = vector.shape_cast %15 : vector<1x8x1024xbf16> to vector<8x1024xbf16>
    %c0_14 = arith.constant 0 : index
    %c0_15 = arith.constant 0 : index
    %17 = vector.load %arg3[%c0_14, %c0_15] : memref<1024x192xbf16, #tpu.memory_space<vmem>>, vector<1024x192xbf16>
    %cst_16 = arith.constant dense<0.000000e+00> : vector<8x192xf32>
    %18 = tpu.matmul %16, %17, %cst_16 {dimension_numbers = #tpu.dot_dimension_numbers<[1], [0], [0], [1], [0, 0, 1, 1], [], []>} : vector<8x1024xbf16>, vector<1024x192xbf16>, vector<8x192xf32> -> vector<8x192xf32>
    %c0_17 = arith.constant 0 : index
    %c0_18 = arith.constant 0 : index
    %19 = vector.load %arg4[%c0_17, %c0_18] : memref<1x192xf32, #tpu.memory_space<vmem>>, vector<1x192xf32>
    %20 = vector.broadcast %19 : vector<1x192xf32> to vector<8x192xf32>
    %21 = arith.addf %18, %20 : vector<8x192xf32>
    %cst_19 = arith.constant 0.000000e+00 : f32
    %22 = vector.broadcast %cst_19 : f32 to vector<8x192xf32>
    %23 = arith.maximumf %21, %22 : vector<8x192xf32>
    %24 = arith.truncf %23 : vector<8x192xf32> to vector<8x192xbf16>
    %c1_20 = arith.constant 1 : index
    %c0_21 = arith.constant 0 : index
    %c0_22 = arith.constant 0 : index
    %25 = vector.load %arg5[%c1_20, %c0_21, %c0_22] : memref<6x192x256xbf16, #tpu.memory_space<vmem>>, vector<1x192x256xbf16>
    %26 = vector.shape_cast %25 : vector<1x192x256xbf16> to vector<192x256xbf16>
    %cst_23 = arith.constant dense<0.000000e+00> : vector<8x256xf32>
    %27 = tpu.matmul %24, %26, %cst_23 {dimension_numbers = #tpu.dot_dimension_numbers<[1], [0], [0], [1], [0, 0, 1, 1], [], []>} : vector<8x192xbf16>, vector<192x256xbf16>, vector<8x256xf32> -> vector<8x256xf32>
    %28 = arith.addf %14, %27 : vector<8x256xf32>
    %c2 = arith.constant 2 : index
    %c0_24 = arith.constant 0 : index
    %c0_25 = arith.constant 0 : index
    %29 = vector.load %arg1[%c2, %c0_24, %c0_25] : memref<6x8x1024xbf16, #tpu.memory_space<vmem>>, vector<1x8x1024xbf16>
    %30 = vector.shape_cast %29 : vector<1x8x1024xbf16> to vector<8x1024xbf16>
    %c0_26 = arith.constant 0 : index
    %c0_27 = arith.constant 0 : index
    %31 = vector.load %arg3[%c0_26, %c0_27] : memref<1024x192xbf16, #tpu.memory_space<vmem>>, vector<1024x192xbf16>
    %cst_28 = arith.constant dense<0.000000e+00> : vector<8x192xf32>
    %32 = tpu.matmul %30, %31, %cst_28 {dimension_numbers = #tpu.dot_dimension_numbers<[1], [0], [0], [1], [0, 0, 1, 1], [], []>} : vector<8x1024xbf16>, vector<1024x192xbf16>, vector<8x192xf32> -> vector<8x192xf32>
    %c0_29 = arith.constant 0 : index
    %c0_30 = arith.constant 0 : index
    %33 = vector.load %arg4[%c0_29, %c0_30] : memref<1x192xf32, #tpu.memory_space<vmem>>, vector<1x192xf32>
    %34 = vector.broadcast %33 : vector<1x192xf32> to vector<8x192xf32>
    %35 = arith.addf %32, %34 : vector<8x192xf32>
    %cst_31 = arith.constant 0.000000e+00 : f32
    %36 = vector.broadcast %cst_31 : f32 to vector<8x192xf32>
    %37 = arith.maximumf %35, %36 : vector<8x192xf32>
    %38 = arith.truncf %37 : vector<8x192xf32> to vector<8x192xbf16>
    %c2_32 = arith.constant 2 : index
    %c0_33 = arith.constant 0 : index
    %c0_34 = arith.constant 0 : index
    %39 = vector.load %arg5[%c2_32, %c0_33, %c0_34] : memref<6x192x256xbf16, #tpu.memory_space<vmem>>, vector<1x192x256xbf16>
    %40 = vector.shape_cast %39 : vector<1x192x256xbf16> to vector<192x256xbf16>
    %cst_35 = arith.constant dense<0.000000e+00> : vector<8x256xf32>
    %41 = tpu.matmul %38, %40, %cst_35 {dimension_numbers = #tpu.dot_dimension_numbers<[1], [0], [0], [1], [0, 0, 1, 1], [], []>} : vector<8x192xbf16>, vector<192x256xbf16>, vector<8x256xf32> -> vector<8x256xf32>
    %42 = arith.addf %28, %41 : vector<8x256xf32>
    %c3 = arith.constant 3 : index
    %c0_36 = arith.constant 0 : index
    %c0_37 = arith.constant 0 : index
    %43 = vector.load %arg1[%c3, %c0_36, %c0_37] : memref<6x8x1024xbf16, #tpu.memory_space<vmem>>, vector<1x8x1024xbf16>
    %44 = vector.shape_cast %43 : vector<1x8x1024xbf16> to vector<8x1024xbf16>
    %c0_38 = arith.constant 0 : index
    %c0_39 = arith.constant 0 : index
    %45 = vector.load %arg3[%c0_38, %c0_39] : memref<1024x192xbf16, #tpu.memory_space<vmem>>, vector<1024x192xbf16>
    %cst_40 = arith.constant dense<0.000000e+00> : vector<8x192xf32>
    %46 = tpu.matmul %44, %45, %cst_40 {dimension_numbers = #tpu.dot_dimension_numbers<[1], [0], [0], [1], [0, 0, 1, 1], [], []>} : vector<8x1024xbf16>, vector<1024x192xbf16>, vector<8x192xf32> -> vector<8x192xf32>
    %c0_41 = arith.constant 0 : index
    %c0_42 = arith.constant 0 : index
    %47 = vector.load %arg4[%c0_41, %c0_42] : memref<1x192xf32, #tpu.memory_space<vmem>>, vector<1x192xf32>
    %48 = vector.broadcast %47 : vector<1x192xf32> to vector<8x192xf32>
    %49 = arith.addf %46, %48 : vector<8x192xf32>
    %cst_43 = arith.constant 0.000000e+00 : f32
    %50 = vector.broadcast %cst_43 : f32 to vector<8x192xf32>
    %51 = arith.maximumf %49, %50 : vector<8x192xf32>
    %52 = arith.truncf %51 : vector<8x192xf32> to vector<8x192xbf16>
    %c3_44 = arith.constant 3 : index
    %c0_45 = arith.constant 0 : index
    %c0_46 = arith.constant 0 : index
    %53 = vector.load %arg5[%c3_44, %c0_45, %c0_46] : memref<6x192x256xbf16, #tpu.memory_space<vmem>>, vector<1x192x256xbf16>
    %54 = vector.shape_cast %53 : vector<1x192x256xbf16> to vector<192x256xbf16>
    %cst_47 = arith.constant dense<0.000000e+00> : vector<8x256xf32>
    %55 = tpu.matmul %52, %54, %cst_47 {dimension_numbers = #tpu.dot_dimension_numbers<[1], [0], [0], [1], [0, 0, 1, 1], [], []>} : vector<8x192xbf16>, vector<192x256xbf16>, vector<8x256xf32> -> vector<8x256xf32>
    %56 = arith.addf %42, %55 : vector<8x256xf32>
    %c4 = arith.constant 4 : index
    %c0_48 = arith.constant 0 : index
    %c0_49 = arith.constant 0 : index
    %57 = vector.load %arg1[%c4, %c0_48, %c0_49] : memref<6x8x1024xbf16, #tpu.memory_space<vmem>>, vector<1x8x1024xbf16>
    %58 = vector.shape_cast %57 : vector<1x8x1024xbf16> to vector<8x1024xbf16>
    %c0_50 = arith.constant 0 : index
    %c0_51 = arith.constant 0 : index
    %59 = vector.load %arg3[%c0_50, %c0_51] : memref<1024x192xbf16, #tpu.memory_space<vmem>>, vector<1024x192xbf16>
    %cst_52 = arith.constant dense<0.000000e+00> : vector<8x192xf32>
    %60 = tpu.matmul %58, %59, %cst_52 {dimension_numbers = #tpu.dot_dimension_numbers<[1], [0], [0], [1], [0, 0, 1, 1], [], []>} : vector<8x1024xbf16>, vector<1024x192xbf16>, vector<8x192xf32> -> vector<8x192xf32>
    %c0_53 = arith.constant 0 : index
    %c0_54 = arith.constant 0 : index
    %61 = vector.load %arg4[%c0_53, %c0_54] : memref<1x192xf32, #tpu.memory_space<vmem>>, vector<1x192xf32>
    %62 = vector.broadcast %61 : vector<1x192xf32> to vector<8x192xf32>
    %63 = arith.addf %60, %62 : vector<8x192xf32>
    %cst_55 = arith.constant 0.000000e+00 : f32
    %64 = vector.broadcast %cst_55 : f32 to vector<8x192xf32>
    %65 = arith.maximumf %63, %64 : vector<8x192xf32>
    %66 = arith.truncf %65 : vector<8x192xf32> to vector<8x192xbf16>
    %c4_56 = arith.constant 4 : index
    %c0_57 = arith.constant 0 : index
    %c0_58 = arith.constant 0 : index
    %67 = vector.load %arg5[%c4_56, %c0_57, %c0_58] : memref<6x192x256xbf16, #tpu.memory_space<vmem>>, vector<1x192x256xbf16>
    %68 = vector.shape_cast %67 : vector<1x192x256xbf16> to vector<192x256xbf16>
    %cst_59 = arith.constant dense<0.000000e+00> : vector<8x256xf32>
    %69 = tpu.matmul %66, %68, %cst_59 {dimension_numbers = #tpu.dot_dimension_numbers<[1], [0], [0], [1], [0, 0, 1, 1], [], []>} : vector<8x192xbf16>, vector<192x256xbf16>, vector<8x256xf32> -> vector<8x256xf32>
    %70 = arith.addf %56, %69 : vector<8x256xf32>
    %c5 = arith.constant 5 : index
    %c0_60 = arith.constant 0 : index
    %c0_61 = arith.constant 0 : index
    %71 = vector.load %arg1[%c5, %c0_60, %c0_61] : memref<6x8x1024xbf16, #tpu.memory_space<vmem>>, vector<1x8x1024xbf16>
    %72 = vector.shape_cast %71 : vector<1x8x1024xbf16> to vector<8x1024xbf16>
    %c0_62 = arith.constant 0 : index
    %c0_63 = arith.constant 0 : index
    %73 = vector.load %arg3[%c0_62, %c0_63] : memref<1024x192xbf16, #tpu.memory_space<vmem>>, vector<1024x192xbf16>
    %cst_64 = arith.constant dense<0.000000e+00> : vector<8x192xf32>
    %74 = tpu.matmul %72, %73, %cst_64 {dimension_numbers = #tpu.dot_dimension_numbers<[1], [0], [0], [1], [0, 0, 1, 1], [], []>} : vector<8x1024xbf16>, vector<1024x192xbf16>, vector<8x192xf32> -> vector<8x192xf32>
    %c0_65 = arith.constant 0 : index
    %c0_66 = arith.constant 0 : index
    %75 = vector.load %arg4[%c0_65, %c0_66] : memref<1x192xf32, #tpu.memory_space<vmem>>, vector<1x192xf32>
    %76 = vector.broadcast %75 : vector<1x192xf32> to vector<8x192xf32>
    %77 = arith.addf %74, %76 : vector<8x192xf32>
    %cst_67 = arith.constant 0.000000e+00 : f32
    %78 = vector.broadcast %cst_67 : f32 to vector<8x192xf32>
    %79 = arith.maximumf %77, %78 : vector<8x192xf32>
    %80 = arith.truncf %79 : vector<8x192xf32> to vector<8x192xbf16>
    %c5_68 = arith.constant 5 : index
    %c0_69 = arith.constant 0 : index
    %c0_70 = arith.constant 0 : index
    %81 = vector.load %arg5[%c5_68, %c0_69, %c0_70] : memref<6x192x256xbf16, #tpu.memory_space<vmem>>, vector<1x192x256xbf16>
    %82 = vector.shape_cast %81 : vector<1x192x256xbf16> to vector<192x256xbf16>
    %cst_71 = arith.constant dense<0.000000e+00> : vector<8x256xf32>
    %83 = tpu.matmul %80, %82, %cst_71 {dimension_numbers = #tpu.dot_dimension_numbers<[1], [0], [0], [1], [0, 0, 1, 1], [], []>} : vector<8x192xbf16>, vector<192x256xbf16>, vector<8x256xf32> -> vector<8x256xf32>
    %84 = arith.addf %70, %83 : vector<8x256xf32>
    %c0_72 = arith.constant 0 : index
    %c0_73 = arith.constant 0 : index
    %85 = vector.load %arg6[%c0_72, %c0_73] : memref<1x256xf32, #tpu.memory_space<vmem>>, vector<1x256xf32>
    %86 = vector.broadcast %85 : vector<1x256xf32> to vector<8x256xf32>
    %87 = arith.addf %84, %86 : vector<8x256xf32>
    %cst_74 = arith.constant 0.000000e+00 : f32
    %88 = vector.broadcast %cst_74 : f32 to vector<8x256xf32>
    %89 = arith.maximumf %87, %88 : vector<8x256xf32>
    %90 = arith.truncf %89 : vector<8x256xf32> to vector<8x256xbf16>
    %c0_75 = arith.constant 0 : index
    %c0_76 = arith.constant 0 : index
    %91 = vector.load %arg7[%c0_75, %c0_76] : memref<256x128xbf16, #tpu.memory_space<vmem>>, vector<256x128xbf16>
    %cst_77 = arith.constant dense<0.000000e+00> : vector<8x128xf32>
    %92 = tpu.matmul %90, %91, %cst_77 {dimension_numbers = #tpu.dot_dimension_numbers<[1], [0], [0], [1], [0, 0, 1, 1], [], []>} : vector<8x256xbf16>, vector<256x128xbf16>, vector<8x128xf32> -> vector<8x128xf32>
    %c0_78 = arith.constant 0 : index
    %c0_79 = arith.constant 0 : index
    %93 = vector.load %arg8[%c0_78, %c0_79] : memref<1x128xf32, #tpu.memory_space<vmem>>, vector<1x128xf32>
    %94 = vector.broadcast %93 : vector<1x128xf32> to vector<8x128xf32>
    %95 = arith.addf %92, %94 : vector<8x128xf32>
    %cst_80 = arith.constant 0.000000e+00 : f32
    %96 = vector.broadcast %cst_80 : f32 to vector<8x128xf32>
    %97 = arith.maximumf %95, %96 : vector<8x128xf32>
    %98 = arith.truncf %97 : vector<8x128xf32> to vector<8x128xbf16>
    %c0_81 = arith.constant 0 : index
    %c0_82 = arith.constant 0 : index
    %99 = vector.load %arg2[%c0_81, %c0_82] : memref<8x16xbf16, #tpu.memory_space<vmem>>, vector<8x16xbf16>
    %c0_83 = arith.constant 0 : index
    %c0_84 = arith.constant 0 : index
    %100 = vector.load %arg9[%c0_83, %c0_84] : memref<16x128xbf16, #tpu.memory_space<vmem>>, vector<16x128xbf16>
    %cst_85 = arith.constant dense<0.000000e+00> : vector<8x128xf32>
    %101 = tpu.matmul %99, %100, %cst_85 {dimension_numbers = #tpu.dot_dimension_numbers<[1], [0], [0], [1], [0, 0, 1, 1], [], []>} : vector<8x16xbf16>, vector<16x128xbf16>, vector<8x128xf32> -> vector<8x128xf32>
    %c0_86 = arith.constant 0 : index
    %c0_87 = arith.constant 0 : index
    %102 = vector.load %arg10[%c0_86, %c0_87] : memref<1x128xf32, #tpu.memory_space<vmem>>, vector<1x128xf32>
    %103 = vector.broadcast %102 : vector<1x128xf32> to vector<8x128xf32>
    %104 = arith.addf %101, %103 : vector<8x128xf32>
    %105 = math.tanh %104 : vector<8x128xf32>
    %106 = arith.truncf %105 : vector<8x128xf32> to vector<8x128xbf16>
    %c0_88 = arith.constant 0 : index
    %c0_89 = arith.constant 0 : index
    %107 = vector.load %arg11[%c0_88, %c0_89] : memref<128x128xbf16, #tpu.memory_space<vmem>>, vector<128x128xbf16>
    %cst_90 = arith.constant dense<0.000000e+00> : vector<8x128xf32>
    %108 = tpu.matmul %106, %107, %cst_90 {dimension_numbers = #tpu.dot_dimension_numbers<[1], [0], [0], [1], [0, 0, 1, 1], [], []>} : vector<8x128xbf16>, vector<128x128xbf16>, vector<8x128xf32> -> vector<8x128xf32>
    %c0_91 = arith.constant 0 : index
    %c0_92 = arith.constant 0 : index
    %109 = vector.load %arg12[%c0_91, %c0_92] : memref<1x128xf32, #tpu.memory_space<vmem>>, vector<1x128xf32>
    %110 = vector.broadcast %109 : vector<1x128xf32> to vector<8x128xf32>
    %111 = arith.addf %108, %110 : vector<8x128xf32>
    %112 = math.tanh %111 : vector<8x128xf32>
    %113 = arith.truncf %112 : vector<8x128xf32> to vector<8x128xbf16>
    %c0_93 = arith.constant 0 : index
    %c0_94 = arith.constant 0 : index
    %114 = vector.load %arg13[%c0_93, %c0_94] : memref<128x128xbf16, #tpu.memory_space<vmem>>, vector<128x128xbf16>
    %cst_95 = arith.constant dense<0.000000e+00> : vector<8x128xf32>
    %115 = tpu.matmul %98, %114, %cst_95 {dimension_numbers = #tpu.dot_dimension_numbers<[1], [0], [0], [1], [0, 0, 1, 1], [], []>} : vector<8x128xbf16>, vector<128x128xbf16>, vector<8x128xf32> -> vector<8x128xf32>
    %c0_96 = arith.constant 0 : index
    %c0_97 = arith.constant 0 : index
    %116 = vector.load %arg14[%c0_96, %c0_97] : memref<128x128xbf16, #tpu.memory_space<vmem>>, vector<128x128xbf16>
    %cst_98 = arith.constant dense<0.000000e+00> : vector<8x128xf32>
    %117 = tpu.matmul %113, %116, %cst_98 {dimension_numbers = #tpu.dot_dimension_numbers<[1], [0], [0], [1], [0, 0, 1, 1], [], []>} : vector<8x128xbf16>, vector<128x128xbf16>, vector<8x128xf32> -> vector<8x128xf32>
    %118 = arith.addf %115, %117 : vector<8x128xf32>
    %c0_99 = arith.constant 0 : index
    %c0_100 = arith.constant 0 : index
    %119 = vector.load %arg15[%c0_99, %c0_100] : memref<1x128xf32, #tpu.memory_space<vmem>>, vector<1x128xf32>
    %120 = vector.broadcast %119 : vector<1x128xf32> to vector<8x128xf32>
    %121 = arith.addf %118, %120 : vector<8x128xf32>
    %122 = math.tanh %121 : vector<8x128xf32>
    %c0_101 = arith.constant 0 : index
    %c0_102 = arith.constant 0 : index
    %123 = vector.load %arg16[%c0_101, %c0_102] : memref<8x128xf32, #tpu.memory_space<vmem>>, vector<8x128xf32>
    tpu.vector_store %arg16[%c0_101, %c0_102], %122 {strides = array<i32>} : memref<8x128xf32, #tpu.memory_space<vmem>>, vector<8x128xf32>,
    return
  }
  func.func @transform_0(%arg0: i32) -> (i32, i32, i32) {
    %c0_i32 = arith.constant 0 : i32
    %c0_i32_0 = arith.constant 0 : i32
    %c0_i32_1 = arith.constant 0 : i32
    return %c0_i32, %arg0, %c0_i32_0 : i32, i32, i32
  }
  func.func @transform_1(%arg0: i32) -> (i32, i32) {
    %c0_i32 = arith.constant 0 : i32
    %c0_i32_0 = arith.constant 0 : i32
    return %arg0, %c0_i32 : i32, i32
  }
  func.func @transform_2(%arg0: i32) -> (i32, i32) {
    %c0_i32 = arith.constant 0 : i32
    %c0_i32_0 = arith.constant 0 : i32
    %c0_i32_1 = arith.constant 0 : i32
    return %c0_i32, %c0_i32_0 : i32, i32
  }
  func.func @transform_3(%arg0: i32) -> (i32, i32) {
    %c0_i32 = arith.constant 0 : i32
    %c0_i32_0 = arith.constant 0 : i32
    %c0_i32_1 = arith.constant 0 : i32
    return %c0_i32, %c0_i32_0 : i32, i32
  }
  func.func @transform_4(%arg0: i32) -> (i32, i32, i32) {
    %c0_i32 = arith.constant 0 : i32
    %c0_i32_0 = arith.constant 0 : i32
    %c0_i32_1 = arith.constant 0 : i32
    %c0_i32_2 = arith.constant 0 : i32
    return %c0_i32, %c0_i32_0, %c0_i32_1 : i32, i32, i32
  }
  func.func @transform_5(%arg0: i32) -> (i32, i32) {
    %c0_i32 = arith.constant 0 : i32
    %c0_i32_0 = arith.constant 0 : i32
    %c0_i32_1 = arith.constant 0 : i32
    return %c0_i32, %c0_i32_0 : i32, i32
  }
  func.func @transform_6(%arg0: i32) -> (i32, i32) {
    %c0_i32 = arith.constant 0 : i32
    %c0_i32_0 = arith.constant 0 : i32
    %c0_i32_1 = arith.constant 0 : i32
    return %c0_i32, %c0_i32_0 : i32, i32
  }
  func.func @transform_7(%arg0: i32) -> (i32, i32) {
    %c0_i32 = arith.constant 0 : i32
    %c0_i32_0 = arith.constant 0 : i32
    %c0_i32_1 = arith.constant 0 : i32
    return %c0_i32, %c0_i32_0 : i32, i32
  }
  func.func @transform_8(%arg0: i32) -> (i32, i32) {
    %c0_i32 = arith.constant 0 : i32
    %c0_i32_0 = arith.constant 0 : i32
    %c0_i32_1 = arith.constant 0 : i32
    return %c0_i32, %c0_i32_0 : i32, i32
  }
  func.func @transform_9(%arg0: i32) -> (i32, i32) {
    %c0_i32 = arith.constant 0 : i32
    %c0_i32_0 = arith.constant 0 : i32
    %c0_i32_1 = arith.constant 0 : i32
    return %c0_i32, %c0_i32_0 : i32, i32
  }
  func.func @transform_10(%arg0: i32) -> (i32, i32) {
    %c0_i32 = arith.constant 0 : i32
    %c0_i32_0 = arith.constant 0 : i32
    %c0_i32_1 = arith.constant 0 : i32
    return %c0_i32, %c0_i32_0 : i32, i32
  }
  func.func @transform_11(%arg0: i32) -> (i32, i32) {
    %c0_i32 = arith.constant 0 : i32
    %c0_i32_0 = arith.constant 0 : i32
    %c0_i32_1 = arith.constant 0 : i32
    return %c0_i32, %c0_i32_0 : i32, i32
  }
  func.func @transform_12(%arg0: i32) -> (i32, i32) {
    %c0_i32 = arith.constant 0 : i32
    %c0_i32_0 = arith.constant 0 : i32
    %c0_i32_1 = arith.constant 0 : i32
    return %c0_i32, %c0_i32_0 : i32, i32
  }
  func.func @transform_13(%arg0: i32) -> (i32, i32) {
    %c0_i32 = arith.constant 0 : i32
    %c0_i32_0 = arith.constant 0 : i32
    %c0_i32_1 = arith.constant 0 : i32
    return %c0_i32, %c0_i32_0 : i32, i32
  }
  func.func @transform_14(%arg0: i32) -> (i32, i32) {
    %c0_i32 = arith.constant 0 : i32
    %c0_i32_0 = arith.constant 0 : i32
    %c0_i32_1 = arith.constant 0 : i32
    return %c0_i32, %c0_i32_0 : i32, i32
  }
  func.func @transform_15(%arg0: i32) -> (i32, i32) {
    %c0_i32 = arith.constant 0 : i32
    %c0_i32_0 = arith.constant 0 : i32
    return %arg0, %c0_i32 : i32, i32
  }
}

</mosaic_0001>

<llo_original>
// kernel: tile.13
$region0: #{tile.13}
  #allocation0 [shape = 's32[1]{0}', space=sflag, size = 0x4, scoped, tag = 'scoped memory for tile.13']
  %s0 = inlined_call_operand.vmem [shape: f32[32], index: 0, kind: input, shape index: {}]
  %s1 = inlined_call_operand.vmem [shape: f32[6,32], index: 1, kind: output, shape index: {}]
  // Predicated region
  $region2: #{tile.13} parent=0 // pred_check
    _
  $region3: #{tile.13} parent=0 // pred_check_branch
    %3 = sbr.rel (0) target = $region5
  $region4: #{tile.13} parent=0 // pred_region
    _
  $region5: #{tile.13} parent=0 // pred_fallthru
    _
  %v4 = vld [vmem:[%s0] ss:$0 sm:$0xff]
  %5 = vst [vmem:[%s1] sm:$0xff] %v4

// kernel: tile.14
$region0: #{tile.14}
  %s0 = inlined_call_operand.vmem [shape: f32[6,32], index: 0, kind: input, shape index: {}]
  %s1 = inlined_call_operand.vmem [shape: f32[1,192], index: 1, kind: output, shape index: {}]
  $region1: #{tile.14} parent=0
    #allocation0 [shape = 'u8[8192]{0}', space=vmem, size = 0x2000, scoped, tag = 'scoped mem for output reshape']
    %s2 = smov 3
    %v3 = vld [vmem:[%s0] ss:$4 sm:%s2]
    %vm4 = vcmask 261120
    %5 = vst.msk [vmem:[#allocation0] ss:$8 sm:$0x3] %vm4, %v3
    %s6 = scalar_lea.vmem %s0, 3
    %v7 = vld [vmem:[%s6] sm:$0x1]
    %8 = vrot.lane.b32.xlu0 %v7, 96
    %v9 = vpop.permute.xlu0 %8
    %vm10 = vcmask 1048320
    %11 = vst.msk [vmem:[#allocation0] sm:$0x1] %vm10, %v9
    %s12 = scalar_lea.vmem %s0, 2
    %v13 = vld [vmem:[%s12] sm:$0x1]
    %14 = vrot.lane.b32.xlu0 %v13, 64
    %v15 = vpop.permute.xlu0 %14
    %vm16 = vcmask 785920
    %17 = vst.msk [vmem:[#allocation0] sm:$0x1] %vm16, %v15
    %s18 = scalar_lea.vmem %s0, 1
    %s19 = smov 3
    %v20 = vld [vmem:[%s18] ss:$4 sm:%s19]
    %21 = vrot.lane.b32.xlu0 %v20, 32
    %v22 = vpop.permute.xlu0 %21
    %vm23 = vcmask 523520
    %24 = vst.msk [vmem:[#allocation0] ss:$8 sm:$0x3] %vm23, %v22
    %s26 = sshllo.u32 0, 1
    %v28 = vld [vmem:[#allocation0] sm:%s26]
    %s29 = sshllo.u32 0, 1
    %30 = vst [vmem:[%s1] sm:%s29] %v28
    %s31 = scalar_lea.vmem [#allocation0], 8
    %v32 = vld [vmem:[%s31] sm:%s26]
    %s33 = sshllo.u32 0, 1
    %s34 = scalar_lea.vmem %s1, 1
    %35 = vst [vmem:[%s34] sm:%s33] %v32

// kernel: tile.18
$region0: #{tile.18}
  #allocation0 [shape = 's32[1]{0}', space=sflag, size = 0x4, scoped, tag = 'scoped memory for tile.18']
  %s0 = inlined_call_operand.vmem [shape: f32[64], index: 0, kind: input, shape index: {}]
  %s1 = inlined_call_operand.vmem [shape: f32[4,64], index: 1, kind: output, shape index: {}]
  // Predicated region
  $region2: #{tile.18} parent=0 // pred_check
    _
  $region3: #{tile.18} parent=0 // pred_check_branch
    %3 = sbr.rel (0) target = $region5
  $region4: #{tile.18} parent=0 // pred_region
    _
  $region5: #{tile.18} parent=0 // pred_fallthru
    _
  %v4 = vld [vmem:[%s0] ss:$0 sm:$0xff]
  %5 = vst [vmem:[%s1] sm:$0xf] %v4

// kernel: tile.19
$region0: #{tile.19}
  %s0 = inlined_call_operand.vmem [shape: f32[4,64], index: 0, kind: input, shape index: {}]
  %s1 = inlined_call_operand.vmem [shape: f32[1,256], index: 1, kind: output, shape index: {}]
  $region1: #{tile.19} parent=0
    #allocation0 [shape = 'u8[8192]{0}', space=vmem, size = 0x2000, scoped, tag = 'scoped mem for output reshape']
    #allocation1 [shape = 'u8[4096]{0}', space=vmem, size = 0x1000, scoped, tag = 'scoped mem for input reshape']
    %s3 = sshllo.u32 0, 4
    %v4 = vld [vmem:[%s0] sm:%s3]
    %5 = vst [vmem:[#allocation1] sm:%s3] %v4
    %s6 = smov 3
    %v7 = vld [vmem:[#allocation1] ss:$2 sm:%s6]
    %vm8 = vcmask 523264
    %9 = vst.msk [vmem:[#allocation0] ss:$8 sm:$0x3] %vm8, %v7
    %s10 = scalar_lea.vmem [#allocation1], 1
    %s11 = smov 3
    %v12 = vld [vmem:[%s10] ss:$2 sm:%s11]
    %13 = vrot.lane.b32.xlu0 %v12, 64
    %v14 = vpop.permute.xlu0 %13
    %vm15 = vcmask 1048064
    %16 = vst.msk [vmem:[#allocation0] ss:$8 sm:$0x3] %vm15, %v14
    %s18 = sshllo.u32 0, 1
    %v20 = vld [vmem:[#allocation0] sm:%s18]
    %s21 = sshllo.u32 0, 1
    %22 = vst [vmem:[%s1] sm:%s21] %v20
    %s23 = scalar_lea.vmem [#allocation0], 8
    %v24 = vld [vmem:[%s23] sm:%s18]
    %s25 = sshllo.u32 0, 1
    %s26 = scalar_lea.vmem %s1, 1
    %27 = vst [vmem:[%s26] sm:%s25] %v24

// kernel: net_forward.1
$region0: #{net_forward.1}
  #allocation0 [shape = 'u32[]', space=smem, size = 0x4, offset = 0x4, fixed_abs, tag = 'smem constant byte address 0x4 - core index']
  #allocation1 [shape = 'u32[144,128]{1,0:T(1,128)}', space=vmem, size = 0x12000, scoped, tag = 'internal scratch']
  %s0 = inlined_call_operand.vmem [shape: bf16[6,8,1024], index: 0, kind: input, shape index: {}]
  %s1 = inlined_call_operand.vmem [shape: bf16[8,16], index: 1, kind: input, shape index: {}]
  %s2 = inlined_call_operand.vmem [shape: bf16[1024,192], index: 2, kind: input, shape index: {}]
  %s3 = inlined_call_operand.vmem [shape: f32[1,192], index: 3, kind: input, shape index: {}]
  %s4 = inlined_call_operand.vmem [shape: bf16[6,192,256], index: 4, kind: input, shape index: {}]
  %s5 = inlined_call_operand.vmem [shape: f32[1,256], index: 5, kind: input, shape index: {}]
  %s6 = inlined_call_operand.vmem [shape: bf16[256,128], index: 6, kind: input, shape index: {}]
  %s7 = inlined_call_operand.vmem [shape: f32[1,128], index: 7, kind: input, shape index: {}]
  %s8 = inlined_call_operand.vmem [shape: bf16[16,128], index: 8, kind: input, shape index: {}]
  %s9 = inlined_call_operand.vmem [shape: f32[1,128], index: 9, kind: input, shape index: {}]
  %s10 = inlined_call_operand.vmem [shape: bf16[128,128], index: 10, kind: input, shape index: {}]
  %s11 = inlined_call_operand.vmem [shape: f32[1,128], index: 11, kind: input, shape index: {}]
  %s12 = inlined_call_operand.vmem [shape: bf16[128,128], index: 12, kind: input, shape index: {}]
  %s13 = inlined_call_operand.vmem [shape: bf16[128,128], index: 13, kind: input, shape index: {}]
  %s14 = inlined_call_operand.vmem [shape: f32[1,128], index: 14, kind: input, shape index: {}]
  %s15 = inlined_call_operand.vmem [shape: f32[8,128], index: 15, kind: output, shape index: {}]
  %s16 = sld [smem:[#allocation0]]
  $region70: #{net_forward.1} parent=0
    _
  %s18 = ssub.s32 1, %s16
  %s19 = scalar_select 0, %s18, %s16
  // Predicated region
  $region2: #{net_forward.1} parent=0 // pred_check
    _
  $region3: #{net_forward.1} parent=0 // pred_check_branch
    %21 = sbr.rel (0) target = $region5
  $region4: #{net_forward.1} parent=0 // pred_region
    _
  $region5: #{net_forward.1} parent=0 // pred_fallthru
    _
  // Predicated region
  $region6: #{net_forward.1} parent=0 // pred_check
    _
  $region7: #{net_forward.1} parent=0 // pred_check_branch
    %23 = sbr.rel (0) target = $region9
  $region8: #{net_forward.1} parent=0 // pred_region
    _
  $region9: #{net_forward.1} parent=0 // pred_fallthru
    _
  // Predicated region
  $region10: #{net_forward.1} parent=0 // pred_check
    _
  $region11: #{net_forward.1} parent=0 // pred_check_branch
    %25 = sbr.rel (0) target = $region13
  $region12: #{net_forward.1} parent=0 // pred_region
    _
  $region13: #{net_forward.1} parent=0 // pred_fallthru
    _
  // Predicated region
  $region14: #{net_forward.1} parent=0 // pred_check
    _
  $region15: #{net_forward.1} parent=0 // pred_check_branch
    %27 = sbr.rel (0) target = $region17
  $region16: #{net_forward.1} parent=0 // pred_region
    _
  $region17: #{net_forward.1} parent=0 // pred_fallthru
    _
  // Predicated region
  $region18: #{net_forward.1} parent=0 // pred_check
    _
  $region19: #{net_forward.1} parent=0 // pred_check_branch
    %29 = sbr.rel (0) target = $region21
  $region20: #{net_forward.1} parent=0 // pred_region
    _
  $region21: #{net_forward.1} parent=0 // pred_fallthru
    _
  // Predicated region
  $region22: #{net_forward.1} parent=0 // pred_check
    _
  $region23: #{net_forward.1} parent=0 // pred_check_branch
    %31 = sbr.rel (0) target = $region25
  $region24: #{net_forward.1} parent=0 // pred_region
    _
  $region25: #{net_forward.1} parent=0 // pred_fallthru
    _
  // Predicated region
  $region26: #{net_forward.1} parent=0 // pred_check
    _
  $region27: #{net_forward.1} parent=0 // pred_check_branch
    %33 = sbr.rel (0) target = $region29
  $region28: #{net_forward.1} parent=0 // pred_region
    _
  $region29: #{net_forward.1} parent=0 // pred_fallthru
    _
  // Predicated region
  $region30: #{net_forward.1} parent=0 // pred_check
    _
  $region31: #{net_forward.1} parent=0 // pred_check_branch
    %35 = sbr.rel (0) target = $region33
  $region32: #{net_forward.1} parent=0 // pred_region
    _
  $region33: #{net_forward.1} parent=0 // pred_fallthru
    _
  // Predicated region
  $region34: #{net_forward.1} parent=0 // pred_check
    _
  $region35: #{net_forward.1} parent=0 // pred_check_branch
    %37 = sbr.rel (0) target = $region37
  $region36: #{net_forward.1} parent=0 // pred_region
    _
  $region37: #{net_forward.1} parent=0 // pred_fallthru
    _
  // Predicated region
  $region38: #{net_forward.1} parent=0 // pred_check
    _
  $region39: #{net_forward.1} parent=0 // pred_check_branch
    %39 = sbr.rel (0) target = $region41
  $region40: #{net_forward.1} parent=0 // pred_region
    _
  $region41: #{net_forward.1} parent=0 // pred_fallthru
    _
  // Predicated region
  $region42: #{net_forward.1} parent=0 // pred_check
    _
  $region43: #{net_forward.1} parent=0 // pred_check_branch
    %41 = sbr.rel (0) target = $region45
  $region44: #{net_forward.1} parent=0 // pred_region
    _
  $region45: #{net_forward.1} parent=0 // pred_fallthru
    _
  // Predicated region
  $region46: #{net_forward.1} parent=0 // pred_check
    _
  $region47: #{net_forward.1} parent=0 // pred_check_branch
    %43 = sbr.rel (0) target = $region49
  $region48: #{net_forward.1} parent=0 // pred_region
    _
  $region49: #{net_forward.1} parent=0 // pred_fallthru
    _
  // Predicated region
  $region50: #{net_forward.1} parent=0 // pred_check
    _
  $region51: #{net_forward.1} parent=0 // pred_check_branch
    %45 = sbr.rel (0) target = $region53
  $region52: #{net_forward.1} parent=0 // pred_region
    _
  $region53: #{net_forward.1} parent=0 // pred_fallthru
    _
  // Predicated region
  $region54: #{net_forward.1} parent=0 // pred_check
    _
  $region55: #{net_forward.1} parent=0 // pred_check_branch
    %47 = sbr.rel (0) target = $region57
  $region56: #{net_forward.1} parent=0 // pred_region
    _
  $region57: #{net_forward.1} parent=0 // pred_fallthru
    _
  // Predicated region
  $region58: #{net_forward.1} parent=0 // pred_check
    _
  $region59: #{net_forward.1} parent=0 // pred_check_branch
    %49 = sbr.rel (0) target = $region61
  $region60: #{net_forward.1} parent=0 // pred_region
    _
  $region61: #{net_forward.1} parent=0 // pred_fallthru
    _
  %v51 = vld [vmem:[%s0] sm:$0xff]
  %v52 = vld [vmem:[%s0 + $0x8] sm:$0xff]
  %v53 = vld [vmem:[%s0 + $0x10] sm:$0xff]
  %v54 = vld [vmem:[%s0 + $0x18] sm:$0xff]
  %v55 = vld [vmem:[%s2] sm:$0xff]
  %v56 = vld [vmem:[%s2 + $0x8] sm:$0xff]
  %v57 = vld [vmem:[%s2 + $0x10] sm:$0xff]
  %v58 = vld [vmem:[%s2 + $0x18] sm:$0xff]
  %v59 = vld [vmem:[%s2 + $0x20] sm:$0xff]
  %v60 = vld [vmem:[%s2 + $0x28] sm:$0xff]
  %v61 = vld [vmem:[%s2 + $0x30] sm:$0xff]
  %v62 = vld [vmem:[%s2 + $0x38] sm:$0xff]
  %v63 = vld [vmem:[%s2 + $0x40] sm:$0xff]
  %v64 = vld [vmem:[%s2 + $0x48] sm:$0xff]
  %v65 = vld [vmem:[%s2 + $0x50] sm:$0xff]
  %v66 = vld [vmem:[%s2 + $0x58] sm:$0xff]
  %v67 = vld [vmem:[%s2 + $0x60] sm:$0xff]
  %v68 = vld [vmem:[%s2 + $0x68] sm:$0xff]
  %v69 = vld [vmem:[%s2 + $0x70] sm:$0xff]
  %v70 = vld [vmem:[%s2 + $0x78] sm:$0xff]
  %v71 = vld [vmem:[%s2 + $0x80] sm:$0xff]
  %v72 = vld [vmem:[%s2 + $0x88] sm:$0xff]
  %v73 = vld [vmem:[%s2 + $0x90] sm:$0xff]
  %v74 = vld [vmem:[%s2 + $0x98] sm:$0xff]
  %v75 = vld [vmem:[%s2 + $0xa0] sm:$0xff]
  %v76 = vld [vmem:[%s2 + $0xa8] sm:$0xff]
  %v77 = vld [vmem:[%s2 + $0xb0] sm:$0xff]
  %v78 = vld [vmem:[%s2 + $0xb8] sm:$0xff]
  %v79 = vld [vmem:[%s2 + $0xc0] sm:$0xff]
  %v80 = vld [vmem:[%s2 + $0xc8] sm:$0xff]
  %v81 = vld [vmem:[%s2 + $0xd0] sm:$0xff]
  %v82 = vld [vmem:[%s2 + $0xd8] sm:$0xff]
  %v83 = vld [vmem:[%s2 + $0xe0] sm:$0xff]
  %v84 = vld [vmem:[%s2 + $0xe8] sm:$0xff]
  %v85 = vld [vmem:[%s2 + $0xf0] sm:$0xff]
  %v86 = vld [vmem:[%s2 + $0xf8] sm:$0xff]
  %v87 = vld [vmem:[%s2 + $0x100] sm:$0xff]
  %v88 = vld [vmem:[%s2 + $0x108] sm:$0xff]
  %v89 = vld [vmem:[%s2 + $0x110] sm:$0xff]
  %v90 = vld [vmem:[%s2 + $0x118] sm:$0xff]
  %v91 = vld [vmem:[%s2 + $0x120] sm:$0xff]
  %v92 = vld [vmem:[%s2 + $0x128] sm:$0xff]
  %v93 = vld [vmem:[%s2 + $0x130] sm:$0xff]
  %v94 = vld [vmem:[%s2 + $0x138] sm:$0xff]
  %v95 = vld [vmem:[%s2 + $0x140] sm:$0xff]
  %v96 = vld [vmem:[%s2 + $0x148] sm:$0xff]
  %v97 = vld [vmem:[%s2 + $0x150] sm:$0xff]
  %v98 = vld [vmem:[%s2 + $0x158] sm:$0xff]
  %v99 = vld [vmem:[%s2 + $0x160] sm:$0xff]
  %v100 = vld [vmem:[%s2 + $0x168] sm:$0xff]
  %v101 = vld [vmem:[%s2 + $0x170] sm:$0xff]
  %v102 = vld [vmem:[%s2 + $0x178] sm:$0xff]
  %v103 = vld [vmem:[%s2 + $0x180] sm:$0xff]
  %v104 = vld [vmem:[%s2 + $0x188] sm:$0xff]
  %v105 = vld [vmem:[%s2 + $0x190] sm:$0xff]
  %v106 = vld [vmem:[%s2 + $0x198] sm:$0xff]
  %v107 = vld [vmem:[%s2 + $0x1a0] sm:$0xff]
  %v108 = vld [vmem:[%s2 + $0x1a8] sm:$0xff]
  %v109 = vld [vmem:[%s2 + $0x1b0] sm:$0xff]
  %v110 = vld [vmem:[%s2 + $0x1b8] sm:$0xff]
  %v111 = vld [vmem:[%s2 + $0x1c0] sm:$0xff]
  %v112 = vld [vmem:[%s2 + $0x1c8] sm:$0xff]
  %v113 = vld [vmem:[%s2 + $0x1d0] sm:$0xff]
  %v114 = vld [vmem:[%s2 + $0x1d8] sm:$0xff]
  %v115 = vld [vmem:[%s2 + $0x1e0] sm:$0xff]
  %v116 = vld [vmem:[%s2 + $0x1e8] sm:$0xff]
  %v117 = vld [vmem:[%s2 + $0x1f0] sm:$0xff]
  %v118 = vld [vmem:[%s2 + $0x1f8] sm:$0xff]
  %v119 = vld [vmem:[%s2 + $0x200] sm:$0xff]
  %v120 = vld [vmem:[%s2 + $0x208] sm:$0xff]
  %v121 = vld [vmem:[%s2 + $0x210] sm:$0xff]
  %v122 = vld [vmem:[%s2 + $0x218] sm:$0xff]
  %v123 = vld [vmem:[%s2 + $0x220] sm:$0xff]
  %v124 = vld [vmem:[%s2 + $0x228] sm:$0xff]
  %v125 = vld [vmem:[%s2 + $0x230] sm:$0xff]
  %v126 = vld [vmem:[%s2 + $0x238] sm:$0xff]
  %v127 = vld [vmem:[%s2 + $0x240] sm:$0xff]
  %v128 = vld [vmem:[%s2 + $0x248] sm:$0xff]
  %v129 = vld [vmem:[%s2 + $0x250] sm:$0xff]
  %v130 = vld [vmem:[%s2 + $0x258] sm:$0xff]
  %v131 = vld [vmem:[%s2 + $0x260] sm:$0xff]
  %v132 = vld [vmem:[%s2 + $0x268] sm:$0xff]
  %v133 = vld [vmem:[%s2 + $0x270] sm:$0xff]
  %v134 = vld [vmem:[%s2 + $0x278] sm:$0xff]
  %v135 = vld [vmem:[%s2 + $0x280] sm:$0xff]
  %v136 = vld [vmem:[%s2 + $0x288] sm:$0xff]
  %v137 = vld [vmem:[%s2 + $0x290] sm:$0xff]
  %v138 = vld [vmem:[%s2 + $0x298] sm:$0xff]
  %v139 = vld [vmem:[%s2 + $0x2a0] sm:$0xff]
  %v140 = vld [vmem:[%s2 + $0x2a8] sm:$0xff]
  %v141 = vld [vmem:[%s2 + $0x2b0] sm:$0xff]
  %v142 = vld [vmem:[%s2 + $0x2b8] sm:$0xff]
  %v143 = vld [vmem:[%s2 + $0x2c0] sm:$0xff]
  %v144 = vld [vmem:[%s2 + $0x2c8] sm:$0xff]
  %v145 = vld [vmem:[%s2 + $0x2d0] sm:$0xff]
  %v146 = vld [vmem:[%s2 + $0x2d8] sm:$0xff]
  %v147 = vld [vmem:[%s2 + $0x2e0] sm:$0xff]
  %v148 = vld [vmem:[%s2 + $0x2e8] sm:$0xff]
  %v149 = vld [vmem:[%s2 + $0x2f0] sm:$0xff]
  %v150 = vld [vmem:[%s2 + $0x2f8] sm:$0xff]
  %v151 = vld [vmem:[%s2 + $0x300] sm:$0xff]
  %v152 = vld [vmem:[%s2 + $0x308] sm:$0xff]
  %v153 = vld [vmem:[%s2 + $0x310] sm:$0xff]
  %v154 = vld [vmem:[%s2 + $0x318] sm:$0xff]
  %v155 = vld [vmem:[%s2 + $0x320] sm:$0xff]
  %v156 = vld [vmem:[%s2 + $0x328] sm:$0xff]
  %v157 = vld [vmem:[%s2 + $0x330] sm:$0xff]
  %v158 = vld [vmem:[%s2 + $0x338] sm:$0xff]
  %v159 = vld [vmem:[%s2 + $0x340] sm:$0xff]
  %v160 = vld [vmem:[%s2 + $0x348] sm:$0xff]
  %v161 = vld [vmem:[%s2 + $0x350] sm:$0xff]
  %v162 = vld [vmem:[%s2 + $0x358] sm:$0xff]
  %v163 = vld [vmem:[%s2 + $0x360] sm:$0xff]
  %v164 = vld [vmem:[%s2 + $0x368] sm:$0xff]
  %v165 = vld [vmem:[%s2 + $0x370] sm:$0xff]
  %v166 = vld [vmem:[%s2 + $0x378] sm:$0xff]
  %v167 = vld [vmem:[%s2 + $0x380] sm:$0xff]
  %v168 = vld [vmem:[%s2 + $0x388] sm:$0xff]
  %v169 = vld [vmem:[%s2 + $0x390] sm:$0xff]
  %v170 = vld [vmem:[%s2 + $0x398] sm:$0xff]
  %v171 = vld [vmem:[%s2 + $0x3a0] sm:$0xff]
  %v172 = vld [vmem:[%s2 + $0x3a8] sm:$0xff]
  %v173 = vld [vmem:[%s2 + $0x3b0] sm:$0xff]
  %v174 = vld [vmem:[%s2 + $0x3b8] sm:$0xff]
  %v175 = vld [vmem:[%s2 + $0x3c0] sm:$0xff]
  %v176 = vld [vmem:[%s2 + $0x3c8] sm:$0xff]
  %v177 = vld [vmem:[%s2 + $0x3d0] sm:$0xff]
  %v178 = vld [vmem:[%s2 + $0x3d8] sm:$0xff]
  %v179 = vld [vmem:[%s2 + $0x3e0] sm:$0xff]
  %v180 = vld [vmem:[%s2 + $0x3e8] sm:$0xff]
  %v181 = vld [vmem:[%s2 + $0x3f0] sm:$0xff]
  %v182 = vld [vmem:[%s2 + $0x3f8] sm:$0xff]
  %v183 = vld [vmem:[%s3] sm:$0x3]
  %v185 = vlaneseq
  %v186 = vshrl.u32 %v185, 7
  %v187 = vsub.s32 0, %v186
  %v188 = vrot.slane %v183, %v187
  %v189 = vlaneseq
  %v190 = vshrl.u32 %v189, 7
  %v191 = vsub.s32 1, %v190
  %v192 = vrot.slane %v183, %v191
  %v199 = vunpack.c.l.b16 %v51
  %v200 = vunpack.c.h.b16 %v51
  %v201 = vunpack.c.l.b16 %v52
  %v202 = vunpack.c.h.b16 %v52
  %v203 = vunpack.c.l.b16 %v53
  %v204 = vunpack.c.h.b16 %v53
  %v205 = vunpack.c.l.b16 %v54
  %v206 = vunpack.c.h.b16 %v54
  %v207 = vpack.c.b16 %v199, %v199
  %v208 = vpack.c.b16 %v200, %v200
  %v209 = vpack.c.b16 %v201, %v201
  %v210 = vpack.c.b16 %v202, %v202
  %v211 = vpack.c.b16 %v203, %v203
  %v212 = vpack.c.b16 %v204, %v204
  %v213 = vpack.c.b16 %v205, %v205
  %v214 = vpack.c.b16 %v206, %v206
  %v351 = vunpack.c.l.b16 %v55
  %v352 = vunpack.c.h.b16 %v55
  %v353 = vunpack.c.l.b16 %v56
  %v354 = vunpack.c.h.b16 %v56
  %v355 = vunpack.c.l.b16 %v57
  %v356 = vunpack.c.h.b16 %v57
  %v357 = vunpack.c.l.b16 %v58
  %v358 = vunpack.c.h.b16 %v58
  %v359 = vunpack.c.l.b16 %v59
  %v360 = vunpack.c.h.b16 %v59
  %v361 = vunpack.c.l.b16 %v60
  %v362 = vunpack.c.h.b16 %v60
  %v363 = vunpack.c.l.b16 %v61
  %v364 = vunpack.c.h.b16 %v61
  %v365 = vunpack.c.l.b16 %v62
  %v366 = vunpack.c.h.b16 %v62
  %v367 = vunpack.c.l.b16 %v63
  %v368 = vunpack.c.h.b16 %v63
  %v369 = vunpack.c.l.b16 %v64
  %v370 = vunpack.c.h.b16 %v64
  %v371 = vunpack.c.l.b16 %v65
  %v372 = vunpack.c.h.b16 %v65
  %v373 = vunpack.c.l.b16 %v66
  %v374 = vunpack.c.h.b16 %v66
  %v375 = vunpack.c.l.b16 %v67
  %v376 = vunpack.c.h.b16 %v67
  %v377 = vunpack.c.l.b16 %v68
  %v378 = vunpack.c.h.b16 %v68
  %v379 = vunpack.c.l.b16 %v69
  %v380 = vunpack.c.h.b16 %v69
  %v381 = vunpack.c.l.b16 %v70
  %v382 = vunpack.c.h.b16 %v70
  %v383 = vunpack.c.l.b16 %v71
  %v384 = vunpack.c.h.b16 %v71
  %v385 = vunpack.c.l.b16 %v72
  %v386 = vunpack.c.h.b16 %v72
  %v387 = vunpack.c.l.b16 %v73
  %v388 = vunpack.c.h.b16 %v73
  %v389 = vunpack.c.l.b16 %v74
  %v390 = vunpack.c.h.b16 %v74
  %v391 = vunpack.c.l.b16 %v75
  %v392 = vunpack.c.h.b16 %v75
  %v393 = vunpack.c.l.b16 %v76
  %v394 = vunpack.c.h.b16 %v76
  %v395 = vunpack.c.l.b16 %v77
  %v396 = vunpack.c.h.b16 %v77
  %v397 = vunpack.c.l.b16 %v78
  %v398 = vunpack.c.h.b16 %v78
  %v399 = vunpack.c.l.b16 %v79
  %v400 = vunpack.c.h.b16 %v79
  %v401 = vunpack.c.l.b16 %v80
  %v402 = vunpack.c.h.b16 %v80
  %v403 = vunpack.c.l.b16 %v81
  %v404 = vunpack.c.h.b16 %v81
  %v405 = vunpack.c.l.b16 %v82
  %v406 = vunpack.c.h.b16 %v82
  %v407 = vunpack.c.l.b16 %v83
  %v408 = vunpack.c.h.b16 %v83
  %v409 = vunpack.c.l.b16 %v84
  %v410 = vunpack.c.h.b16 %v84
  %v411 = vunpack.c.l.b16 %v85
  %v412 = vunpack.c.h.b16 %v85
  %v413 = vunpack.c.l.b16 %v86
  %v414 = vunpack.c.h.b16 %v86
  %v415 = vunpack.c.l.b16 %v87
  %v416 = vunpack.c.h.b16 %v87
  %v417 = vunpack.c.l.b16 %v88
  %v418 = vunpack.c.h.b16 %v88
  %v419 = vunpack.c.l.b16 %v89
  %v420 = vunpack.c.h.b16 %v89
  %v421 = vunpack.c.l.b16 %v90
  %v422 = vunpack.c.h.b16 %v90
  %v423 = vunpack.c.l.b16 %v91
  %v424 = vunpack.c.h.b16 %v91
  %v425 = vunpack.c.l.b16 %v92
  %v426 = vunpack.c.h.b16 %v92
  %v427 = vunpack.c.l.b16 %v93
  %v428 = vunpack.c.h.b16 %v93
  %v429 = vunpack.c.l.b16 %v94
  %v430 = vunpack.c.h.b16 %v94
  %v431 = vunpack.c.l.b16 %v95
  %v432 = vunpack.c.h.b16 %v95
  %v433 = vunpack.c.l.b16 %v96
  %v434 = vunpack.c.h.b16 %v96
  %v435 = vunpack.c.l.b16 %v97
  %v436 = vunpack.c.h.b16 %v97
  %v437 = vunpack.c.l.b16 %v98
  %v438 = vunpack.c.h.b16 %v98
  %v439 = vunpack.c.l.b16 %v99
  %v440 = vunpack.c.h.b16 %v99
  %v441 = vunpack.c.l.b16 %v100
  %v442 = vunpack.c.h.b16 %v100
  %v443 = vunpack.c.l.b16 %v101
  %v444 = vunpack.c.h.b16 %v101
  %v445 = vunpack.c.l.b16 %v102
  %v446 = vunpack.c.h.b16 %v102
  %v447 = vunpack.c.l.b16 %v103
  %v448 = vunpack.c.h.b16 %v103
  %v449 = vunpack.c.l.b16 %v104
  %v450 = vunpack.c.h.b16 %v104
  %v451 = vunpack.c.l.b16 %v105
  %v452 = vunpack.c.h.b16 %v105
  %v453 = vunpack.c.l.b16 %v106
  %v454 = vunpack.c.h.b16 %v106
  %v455 = vunpack.c.l.b16 %v107
  %v456 = vunpack.c.h.b16 %v107
  %v457 = vunpack.c.l.b16 %v108
  %v458 = vunpack.c.h.b16 %v108
  %v459 = vunpack.c.l.b16 %v109
  %v460 = vunpack.c.h.b16 %v109
  %v461 = vunpack.c.l.b16 %v110
  %v462 = vunpack.c.h.b16 %v110
  %v463 = vunpack.c.l.b16 %v111
  %v464 = vunpack.c.h.b16 %v111
  %v465 = vunpack.c.l.b16 %v112
  %v466 = vunpack.c.h.b16 %v112
  %v467 = vunpack.c.l.b16 %v113
  %v468 = vunpack.c.h.b16 %v113
  %v469 = vunpack.c.l.b16 %v114
  %v470 = vunpack.c.h.b16 %v114
  %v471 = vunpack.c.l.b16 %v115
  %v472 = vunpack.c.h.b16 %v115
  %v473 = vunpack.c.l.b16 %v116
  %v474 = vunpack.c.h.b16 %v116
  %v475 = vunpack.c.l.b16 %v117
  %v476 = vunpack.c.h.b16 %v117
  %v477 = vunpack.c.l.b16 %v118
  %v478 = vunpack.c.h.b16 %v118
  %v479 = vunpack.c.l.b16 %v119
  %v480 = vunpack.c.h.b16 %v119
  %v481 = vunpack.c.l.b16 %v120
  %v482 = vunpack.c.h.b16 %v120
  %v483 = vunpack.c.l.b16 %v121
  %v484 = vunpack.c.h.b16 %v121
  %v485 = vunpack.c.l.b16 %v122
  %v486 = vunpack.c.h.b16 %v122
  %v487 = vunpack.c.l.b16 %v123
  %v488 = vunpack.c.h.b16 %v123
  %v489 = vunpack.c.l.b16 %v124
  %v490 = vunpack.c.h.b16 %v124
  %v491 = vunpack.c.l.b16 %v125
  %v492 = vunpack.c.h.b16 %v125
  %v493 = vunpack.c.l.b16 %v126
  %v494 = vunpack.c.h.b16 %v126
  %v495 = vunpack.c.l.b16 %v127
  %v496 = vunpack.c.h.b16 %v127
  %v497 = vunpack.c.l.b16 %v128
  %v498 = vunpack.c.h.b16 %v128
  %v499 = vunpack.c.l.b16 %v129
  %v500 = vunpack.c.h.b16 %v129
  %v501 = vunpack.c.l.b16 %v130
  %v502 = vunpack.c.h.b16 %v130
  %v503 = vunpack.c.l.b16 %v131
  %v504 = vunpack.c.h.b16 %v131
  %v505 = vunpack.c.l.b16 %v132
  %v506 = vunpack.c.h.b16 %v132
  %v507 = vunpack.c.l.b16 %v133
  %v508 = vunpack.c.h.b16 %v133
  %v509 = vunpack.c.l.b16 %v134
  %v510 = vunpack.c.h.b16 %v134
  %v511 = vunpack.c.l.b16 %v135
  %v512 = vunpack.c.h.b16 %v135
  %v513 = vunpack.c.l.b16 %v136
  %v514 = vunpack.c.h.b16 %v136
  %v515 = vunpack.c.l.b16 %v137
  %v516 = vunpack.c.h.b16 %v137
  %v517 = vunpack.c.l.b16 %v138
  %v518 = vunpack.c.h.b16 %v138
  %v519 = vunpack.c.l.b16 %v139
  %v520 = vunpack.c.h.b16 %v139
  %v521 = vunpack.c.l.b16 %v140
  %v522 = vunpack.c.h.b16 %v140
  %v523 = vunpack.c.l.b16 %v141
  %v524 = vunpack.c.h.b16 %v141
  %v525 = vunpack.c.l.b16 %v142
  %v526 = vunpack.c.h.b16 %v142
  %v527 = vunpack.c.l.b16 %v143
  %v528 = vunpack.c.h.b16 %v143
  %v529 = vunpack.c.l.b16 %v144
  %v530 = vunpack.c.h.b16 %v144
  %v531 = vunpack.c.l.b16 %v145
  %v532 = vunpack.c.h.b16 %v145
  %v533 = vunpack.c.l.b16 %v146
  %v534 = vunpack.c.h.b16 %v146
  %v535 = vunpack.c.l.b16 %v147
  %v536 = vunpack.c.h.b16 %v147
  %v537 = vunpack.c.l.b16 %v148
  %v538 = vunpack.c.h.b16 %v148
  %v539 = vunpack.c.l.b16 %v149
  %v540 = vunpack.c.h.b16 %v149
  %v541 = vunpack.c.l.b16 %v150
  %v542 = vunpack.c.h.b16 %v150
  %v543 = vunpack.c.l.b16 %v151
  %v544 = vunpack.c.h.b16 %v151
  %v545 = vunpack.c.l.b16 %v152
  %v546 = vunpack.c.h.b16 %v152
  %v547 = vunpack.c.l.b16 %v153
  %v548 = vunpack.c.h.b16 %v153
  %v549 = vunpack.c.l.b16 %v154
  %v550 = vunpack.c.h.b16 %v154
  %v551 = vunpack.c.l.b16 %v155
  %v552 = vunpack.c.h.b16 %v155
  %v553 = vunpack.c.l.b16 %v156
  %v554 = vunpack.c.h.b16 %v156
  %v555 = vunpack.c.l.b16 %v157
  %v556 = vunpack.c.h.b16 %v157
  %v557 = vunpack.c.l.b16 %v158
  %v558 = vunpack.c.h.b16 %v158
  %v559 = vunpack.c.l.b16 %v159
  %v560 = vunpack.c.h.b16 %v159
  %v561 = vunpack.c.l.b16 %v160
  %v562 = vunpack.c.h.b16 %v160
  %v563 = vunpack.c.l.b16 %v161
  %v564 = vunpack.c.h.b16 %v161
  %v565 = vunpack.c.l.b16 %v162
  %v566 = vunpack.c.h.b16 %v162
  %v567 = vunpack.c.l.b16 %v163
  %v568 = vunpack.c.h.b16 %v163
  %v569 = vunpack.c.l.b16 %v164
  %v570 = vunpack.c.h.b16 %v164
  %v571 = vunpack.c.l.b16 %v165
  %v572 = vunpack.c.h.b16 %v165
  %v573 = vunpack.c.l.b16 %v166
  %v574 = vunpack.c.h.b16 %v166
  %v575 = vunpack.c.l.b16 %v167
  %v576 = vunpack.c.h.b16 %v167
  %v577 = vunpack.c.l.b16 %v168
  %v578 = vunpack.c.h.b16 %v168
  %v579 = vunpack.c.l.b16 %v169
  %v580 = vunpack.c.h.b16 %v169
  %v581 = vunpack.c.l.b16 %v170
  %v582 = vunpack.c.h.b16 %v170
  %v583 = vunpack.c.l.b16 %v171
  %v584 = vunpack.c.h.b16 %v171
  %v585 = vunpack.c.l.b16 %v172
  %v586 = vunpack.c.h.b16 %v172
  %v587 = vunpack.c.l.b16 %v173
  %v588 = vunpack.c.h.b16 %v173
  %v589 = vunpack.c.l.b16 %v174
  %v590 = vunpack.c.h.b16 %v174
  %v591 = vunpack.c.l.b16 %v175
  %v592 = vunpack.c.h.b16 %v175
  %v593 = vunpack.c.l.b16 %v176
  %v594 = vunpack.c.h.b16 %v176
  %v595 = vunpack.c.l.b16 %v177
  %v596 = vunpack.c.h.b16 %v177
  %v597 = vunpack.c.l.b16 %v178
  %v598 = vunpack.c.h.b16 %v178
  %v599 = vunpack.c.l.b16 %v179
  %v600 = vunpack.c.h.b16 %v179
  %v601 = vunpack.c.l.b16 %v180
  %v602 = vunpack.c.h.b16 %v180
  %v603 = vunpack.c.l.b16 %v181
  %v604 = vunpack.c.h.b16 %v181
  %v605 = vunpack.c.l.b16 %v182
  %v606 = vunpack.c.h.b16 %v182
  %v607 = vpack.c.b16 %v353, %v351
  %v608 = vpack.c.b16 %v354, %v352
  %v609 = vpack.c.b16 %v357, %v355
  %v610 = vpack.c.b16 %v358, %v356
  %v611 = vpack.c.b16 %v361, %v359
  %v612 = vpack.c.b16 %v362, %v360
  %v613 = vpack.c.b16 %v365, %v363
  %v614 = vpack.c.b16 %v366, %v364
  %v615 = vpack.c.b16 %v369, %v367
  %v616 = vpack.c.b16 %v370, %v368
  %v617 = vpack.c.b16 %v373, %v371
  %v618 = vpack.c.b16 %v374, %v372
  %v619 = vpack.c.b16 %v377, %v375
  %v620 = vpack.c.b16 %v378, %v376
  %v621 = vpack.c.b16 %v381, %v379
  %v622 = vpack.c.b16 %v382, %v380
  %v623 = vpack.c.b16 %v385, %v383
  %v624 = vpack.c.b16 %v386, %v384
  %v625 = vpack.c.b16 %v389, %v387
  %v626 = vpack.c.b16 %v390, %v388
  %v627 = vpack.c.b16 %v393, %v391
  %v628 = vpack.c.b16 %v394, %v392
  %v629 = vpack.c.b16 %v397, %v395
  %v630 = vpack.c.b16 %v398, %v396
  %v631 = vpack.c.b16 %v401, %v399
  %v632 = vpack.c.b16 %v402, %v400
  %v633 = vpack.c.b16 %v405, %v403
  %v634 = vpack.c.b16 %v406, %v404
  %v635 = vpack.c.b16 %v409, %v407
  %v636 = vpack.c.b16 %v410, %v408
  %v637 = vpack.c.b16 %v413, %v411
  %v638 = vpack.c.b16 %v414, %v412
  %v639 = vpack.c.b16 %v417, %v415
  %v640 = vpack.c.b16 %v418, %v416
  %v641 = vpack.c.b16 %v421, %v419
  %v642 = vpack.c.b16 %v422, %v420
  %v643 = vpack.c.b16 %v425, %v423
  %v644 = vpack.c.b16 %v426, %v424
  %v645 = vpack.c.b16 %v429, %v427
  %v646 = vpack.c.b16 %v430, %v428
  %v647 = vpack.c.b16 %v433, %v431
  %v648 = vpack.c.b16 %v434, %v432
  %v649 = vpack.c.b16 %v437, %v435
  %v650 = vpack.c.b16 %v438, %v436
  %v651 = vpack.c.b16 %v441, %v439
  %v652 = vpack.c.b16 %v442, %v440
  %v653 = vpack.c.b16 %v445, %v443
  %v654 = vpack.c.b16 %v446, %v444
  %v655 = vpack.c.b16 %v449, %v447
  %v656 = vpack.c.b16 %v450, %v448
  %v657 = vpack.c.b16 %v453, %v451
  %v658 = vpack.c.b16 %v454, %v452
  %v659 = vpack.c.b16 %v457, %v455
  %v660 = vpack.c.b16 %v458, %v456
  %v661 = vpack.c.b16 %v461, %v459
  %v662 = vpack.c.b16 %v462, %v460
  %v663 = vpack.c.b16 %v465, %v463
  %v664 = vpack.c.b16 %v466, %v464
  %v665 = vpack.c.b16 %v469, %v467
  %v666 = vpack.c.b16 %v470, %v468
  %v667 = vpack.c.b16 %v473, %v471
  %v668 = vpack.c.b16 %v474, %v472
  %v669 = vpack.c.b16 %v477, %v475
  %v670 = vpack.c.b16 %v478, %v476
  %v671 = vpack.c.b16 %v481, %v479
  %v672 = vpack.c.b16 %v482, %v480
  %v673 = vpack.c.b16 %v485, %v483
  %v674 = vpack.c.b16 %v486, %v484
  %v675 = vpack.c.b16 %v489, %v487
  %v676 = vpack.c.b16 %v490, %v488
  %v677 = vpack.c.b16 %v493, %v491
  %v678 = vpack.c.b16 %v494, %v492
  %v679 = vpack.c.b16 %v497, %v495
  %v680 = vpack.c.b16 %v498, %v496
  %v681 = vpack.c.b16 %v501, %v499
  %v682 = vpack.c.b16 %v502, %v500
  %v683 = vpack.c.b16 %v505, %v503
  %v684 = vpack.c.b16 %v506, %v504
  %v685 = vpack.c.b16 %v509, %v507
  %v686 = vpack.c.b16 %v510, %v508
  %v687 = vpack.c.b16 %v513, %v511
  %v688 = vpack.c.b16 %v514, %v512
  %v689 = vpack.c.b16 %v517, %v515
  %v690 = vpack.c.b16 %v518, %v516
  %v691 = vpack.c.b16 %v521, %v519
  %v692 = vpack.c.b16 %v522, %v520
  %v693 = vpack.c.b16 %v525, %v523
  %v694 = vpack.c.b16 %v526, %v524
  %v695 = vpack.c.b16 %v529, %v527
  %v696 = vpack.c.b16 %v530, %v528
  %v697 = vpack.c.b16 %v533, %v531
  %v698 = vpack.c.b16 %v534, %v532
  %v699 = vpack.c.b16 %v537, %v535
  %v700 = vpack.c.b16 %v538, %v536
  %v701 = vpack.c.b16 %v541, %v539
  %v702 = vpack.c.b16 %v542, %v540
  %v703 = vpack.c.b16 %v545, %v543
  %v704 = vpack.c.b16 %v546, %v544
  %v705 = vpack.c.b16 %v549, %v547
  %v706 = vpack.c.b16 %v550, %v548
  %v707 = vpack.c.b16 %v553, %v551
  %v708 = vpack.c.b16 %v554, %v552
  %v709 = vpack.c.b16 %v557, %v555
  %v710 = vpack.c.b16 %v558, %v556
  %v711 = vpack.c.b16 %v561, %v559
  %v712 = vpack.c.b16 %v562, %v560
  %v713 = vpack.c.b16 %v565, %v563
  %v714 = vpack.c.b16 %v566, %v564
  %v715 = vpack.c.b16 %v569, %v567
  %v716 = vpack.c.b16 %v570, %v568
  %v717 = vpack.c.b16 %v573, %v571
  %v718 = vpack.c.b16 %v574, %v572
  %v719 = vpack.c.b16 %v577, %v575
  %v720 = vpack.c.b16 %v578, %v576
  %v721 = vpack.c.b16 %v581, %v579
  %v722 = vpack.c.b16 %v582, %v580
  %v723 = vpack.c.b16 %v585, %v583
  %v724 = vpack.c.b16 %v586, %v584
  %v725 = vpack.c.b16 %v589, %v587
  %v726 = vpack.c.b16 %v590, %v588
  %v727 = vpack.c.b16 %v593, %v591
  %v728 = vpack.c.b16 %v594, %v592
  %v729 = vpack.c.b16 %v597, %v595
  %v730 = vpack.c.b16 %v598, %v596
  %v731 = vpack.c.b16 %v601, %v599
  %v732 = vpack.c.b16 %v602, %v600
  %v733 = vpack.c.b16 %v605, %v603
  %v734 = vpack.c.b16 %v606, %v604
  %863 = vmatprep.subr.bf16.mxu0 %v608
  %864 = vmatpush1.bf16.msra.mxu0 %v607
  %865 = vmatprep.subr.bf16.mxu0 %v610
  %866 = vmatpush1.bf16.msra.mxu0 %v609
  %867 = vmatprep.subr.bf16.mxu0 %v612
  %868 = vmatpush1.bf16.msra.mxu0 %v611
  %869 = vmatprep.subr.bf16.mxu0 %v614
  %870 = vmatpush1.bf16.msra.mxu0 %v613
  %871 = vmatprep.subr.bf16.mxu0 %v616
  %872 = vmatpush1.bf16.msra.mxu0 %v615
  %873 = vmatprep.subr.bf16.mxu0 %v618
  %874 = vmatpush1.bf16.msra.mxu0 %v617
  %875 = vmatprep.subr.bf16.mxu0 %v620
  %876 = vmatpush1.bf16.msra.mxu0 %v619
  %877 = vmatprep.subr.bf16.mxu0 %v622
  %878 = vmatpush1.bf16.msra.mxu0 %v621
  %879 = vmatprep.subr.bf16.mxu0 %v624
  %880 = vmatpush1.bf16.msra.mxu0 %v623
  %881 = vmatprep.subr.bf16.mxu0 %v626
  %882 = vmatpush1.bf16.msra.mxu0 %v625
  %883 = vmatprep.subr.bf16.mxu0 %v628
  %884 = vmatpush1.bf16.msra.mxu0 %v627
  %885 = vmatprep.subr.bf16.mxu0 %v630
  %886 = vmatpush1.bf16.msra.mxu0 %v629
  %887 = vmatprep.subr.bf16.mxu0 %v632
  %888 = vmatpush1.bf16.msra.mxu0 %v631
  %889 = vmatprep.subr.bf16.mxu0 %v634
  %890 = vmatpush1.bf16.msra.mxu0 %v633
  %891 = vmatprep.subr.bf16.mxu0 %v636
  %892 = vmatpush1.bf16.msra.mxu0 %v635
  %893 = vmatprep.subr.bf16.mxu0 %v638
  %894 = vmatpush1.bf16.msra.mxu0 %v637
  %895 = vmatprep.mubr.bf16.mxu0 %v208
  %896 = vmatmul.mubr.bf16.gmra.mrb[0].mxu0 %v207
  %v897 = vpop.f32.mrb[0].mxu0
  %v898 = vadd.f32 %v188, %v897
  %v899 = vpop.f32.mrb[0].mxu0
  %v900 = vadd.f32 %v192, %v899
  %v901 = vpop.f32.mrb[0].mxu0
  %v902 = vpop.f32.mrb[0].mxu0
  %903 = vdwg.mxu0
  %904 = vmatprep.subr.bf16.mxu0 %v640
  %905 = vmatpush1.bf16.msra.mxu0 %v639
  %906 = vmatprep.subr.bf16.mxu0 %v642
  %907 = vmatpush1.bf16.msra.mxu0 %v641
  %908 = vmatprep.subr.bf16.mxu0 %v644
  %909 = vmatpush1.bf16.msra.mxu0 %v643
  %910 = vmatprep.subr.bf16.mxu0 %v646
  %911 = vmatpush1.bf16.msra.mxu0 %v645
  %912 = vmatprep.subr.bf16.mxu0 %v648
  %913 = vmatpush1.bf16.msra.mxu0 %v647
  %914 = vmatprep.subr.bf16.mxu0 %v650
  %915 = vmatpush1.bf16.msra.mxu0 %v649
  %916 = vmatprep.subr.bf16.mxu0 %v652
  %917 = vmatpush1.bf16.msra.mxu0 %v651
  %918 = vmatprep.subr.bf16.mxu0 %v654
  %919 = vmatpush1.bf16.msra.mxu0 %v653
  %920 = vmatprep.subr.bf16.mxu0 %v656
  %921 = vmatpush1.bf16.msra.mxu0 %v655
  %922 = vmatprep.subr.bf16.mxu0 %v658
  %923 = vmatpush1.bf16.msra.mxu0 %v657
  %924 = vmatprep.subr.bf16.mxu0 %v660
  %925 = vmatpush1.bf16.msra.mxu0 %v659
  %926 = vmatprep.subr.bf16.mxu0 %v662
  %927 = vmatpush1.bf16.msra.mxu0 %v661
  %928 = vmatprep.subr.bf16.mxu0 %v664
  %929 = vmatpush1.bf16.msra.mxu0 %v663
  %930 = vmatprep.subr.bf16.mxu0 %v666
  %931 = vmatpush1.bf16.msra.mxu0 %v665
  %932 = vmatprep.subr.bf16.mxu0 %v668
  %933 = vmatpush1.bf16.msra.mxu0 %v667
  %934 = vmatprep.subr.bf16.mxu0 %v670
  %935 = vmatpush1.bf16.msra.mxu0 %v669
  %936 = vmatprep.mubr.bf16.mxu0 %v210
  %937 = vmatmul.mubr.bf16.gmra.mrb[0].mxu0 %v209
  %v938 = vpop.f32.mrb[0].mxu0
  %v939 = vadd.f32 %v898, %v938
  %v940 = vpop.f32.mrb[0].mxu0
  %v941 = vadd.f32 %v900, %v940
  %v942 = vpop.f32.mrb[0].mxu0
  %v943 = vpop.f32.mrb[0].mxu0
  %944 = vdwg.mxu0
  %945 = vmatprep.subr.bf16.mxu0 %v672
  %946 = vmatpush1.bf16.msra.mxu0 %v671
  %947 = vmatprep.subr.bf16.mxu0 %v674
  %948 = vmatpush1.bf16.msra.mxu0 %v673
  %949 = vmatprep.subr.bf16.mxu0 %v676
  %950 = vmatpush1.bf16.msra.mxu0 %v675
  %951 = vmatprep.subr.bf16.mxu0 %v678
  %952 = vmatpush1.bf16.msra.mxu0 %v677
  %953 = vmatprep.subr.bf16.mxu0 %v680
  %954 = vmatpush1.bf16.msra.mxu0 %v679
  %955 = vmatprep.subr.bf16.mxu0 %v682
  %956 = vmatpush1.bf16.msra.mxu0 %v681
  %957 = vmatprep.subr.bf16.mxu0 %v684
  %958 = vmatpush1.bf16.msra.mxu0 %v683
  %959 = vmatprep.subr.bf16.mxu0 %v686
  %960 = vmatpush1.bf16.msra.mxu0 %v685
  %961 = vmatprep.subr.bf16.mxu0 %v688
  %962 = vmatpush1.bf16.msra.mxu0 %v687
  %963 = vmatprep.subr.bf16.mxu0 %v690
  %964 = vmatpush1.bf16.msra.mxu0 %v689
  %965 = vmatprep.subr.bf16.mxu0 %v692
  %966 = vmatpush1.bf16.msra.mxu0 %v691
  %967 = vmatprep.subr.bf16.mxu0 %v694
  %968 = vmatpush1.bf16.msra.mxu0 %v693
  %969 = vmatprep.subr.bf16.mxu0 %v696
  %970 = vmatpush1.bf16.msra.mxu0 %v695
  %971 = vmatprep.subr.bf16.mxu0 %v698
  %972 = vmatpush1.bf16.msra.mxu0 %v697
  %973 = vmatprep.subr.bf16.mxu0 %v700
  %974 = vmatpush1.bf16.msra.mxu0 %v699
  %975 = vmatprep.subr.bf16.mxu0 %v702
  %976 = vmatpush1.bf16.msra.mxu0 %v701
  %977 = vmatprep.mubr.bf16.mxu0 %v212
  %978 = vmatmul.mubr.bf16.gmra.mrb[0].mxu0 %v211
  %v979 = vpop.f32.mrb[0].mxu0
  %v980 = vadd.f32 %v939, %v979
  %v981 = vpop.f32.mrb[0].mxu0
  %v982 = vadd.f32 %v941, %v981
  %v983 = vpop.f32.mrb[0].mxu0
  %v984 = vpop.f32.mrb[0].mxu0
  %985 = vdwg.mxu0
  %986 = vmatprep.subr.bf16.mxu0 %v704
  %987 = vmatpush1.bf16.msra.mxu0 %v703
  %988 = vmatprep.subr.bf16.mxu0 %v706
  %989 = vmatpush1.bf16.msra.mxu0 %v705
  %990 = vmatprep.subr.bf16.mxu0 %v708
  %991 = vmatpush1.bf16.msra.mxu0 %v707
  %992 = vmatprep.subr.bf16.mxu0 %v710
  %993 = vmatpush1.bf16.msra.mxu0 %v709
  %994 = vmatprep.subr.bf16.mxu0 %v712
  %995 = vmatpush1.bf16.msra.mxu0 %v711
  %996 = vmatprep.subr.bf16.mxu0 %v714
  %997 = vmatpush1.bf16.msra.mxu0 %v713
  %998 = vmatprep.subr.bf16.mxu0 %v716
  %999 = vmatpush1.bf16.msra.mxu0 %v715
  %1000 = vmatprep.subr.bf16.mxu0 %v718
  %1001 = vmatpush1.bf16.msra.mxu0 %v717
  %1002 = vmatprep.subr.bf16.mxu0 %v720
  %1003 = vmatpush1.bf16.msra.mxu0 %v719
  %1004 = vmatprep.subr.bf16.mxu0 %v722
  %1005 = vmatpush1.bf16.msra.mxu0 %v721
  %1006 = vmatprep.subr.bf16.mxu0 %v724
  %1007 = vmatpush1.bf16.msra.mxu0 %v723
  %1008 = vmatprep.subr.bf16.mxu0 %v726
  %1009 = vmatpush1.bf16.msra.mxu0 %v725
  %1010 = vmatprep.subr.bf16.mxu0 %v728
  %1011 = vmatpush1.bf16.msra.mxu0 %v727
  %1012 = vmatprep.subr.bf16.mxu0 %v730
  %1013 = vmatpush1.bf16.msra.mxu0 %v729
  %1014 = vmatprep.subr.bf16.mxu0 %v732
  %1015 = vmatpush1.bf16.msra.mxu0 %v731
  %1016 = vmatprep.subr.bf16.mxu0 %v734
  %1017 = vmatpush1.bf16.msra.mxu0 %v733
  %1018 = vmatprep.mubr.bf16.mxu0 %v214
  %1019 = vmatmul.mubr.bf16.gmra.mrb[0].mxu0 %v213
  %v1020 = vpop.f32.mrb[0].mxu0
  %v1021 = vadd.f32 %v980, %v1020
  %v1022 = vpop.f32.mrb[0].mxu0
  %v1023 = vadd.f32 %v982, %v1022
  %v1024 = vpop.f32.mrb[0].mxu0
  %v1025 = vpop.f32.mrb[0].mxu0
  %1026 = vdwg.mxu0
  %v1027 = vmax.f32 %v1021, 0.0
  %v1028 = vmax.f32 %v1023, 0.0
  %v1029 = vpack.c.bf16 %v1027, %v1027
  %v1030 = vpack.c.bf16 %v1028, %v1028
  %v1031 = vld [vmem:[%s4] sm:$0xff]
  %v1032 = vld [vmem:[%s4 + $0x8] sm:$0xff]
  %v1033 = vld [vmem:[%s4 + $0x10] sm:$0xff]
  %v1034 = vld [vmem:[%s4 + $0x18] sm:$0xff]
  %v1035 = vld [vmem:[%s4 + $0x20] sm:$0xff]
  %v1036 = vld [vmem:[%s4 + $0x28] sm:$0xff]
  %v1037 = vld [vmem:[%s4 + $0x30] sm:$0xff]
  %v1038 = vld [vmem:[%s4 + $0x38] sm:$0xff]
  %v1039 = vld [vmem:[%s4 + $0x40] sm:$0xff]
  %v1040 = vld [vmem:[%s4 + $0x48] sm:$0xff]
  %v1041 = vld [vmem:[%s4 + $0x50] sm:$0xff]
  %v1042 = vld [vmem:[%s4 + $0x58] sm:$0xff]
  %v1043 = vld [vmem:[%s4 + $0x60] sm:$0xff]
  %v1044 = vld [vmem:[%s4 + $0x68] sm:$0xff]
  %v1045 = vld [vmem:[%s4 + $0x70] sm:$0xff]
  %v1046 = vld [vmem:[%s4 + $0x78] sm:$0xff]
  %v1047 = vld [vmem:[%s4 + $0x80] sm:$0xff]
  %v1048 = vld [vmem:[%s4 + $0x88] sm:$0xff]
  %v1049 = vld [vmem:[%s4 + $0x90] sm:$0xff]
  %v1050 = vld [vmem:[%s4 + $0x98] sm:$0xff]
  %v1051 = vld [vmem:[%s4 + $0xa0] sm:$0xff]
  %v1052 = vld [vmem:[%s4 + $0xa8] sm:$0xff]
  %v1053 = vld [vmem:[%s4 + $0xb0] sm:$0xff]
  %v1054 = vld [vmem:[%s4 + $0xb8] sm:$0xff]
  %s1055 = scalar_lea.vmem %s0, 32
  %v1056 = vld [vmem:[%s1055] sm:$0xff]
  %v1057 = vld [vmem:[%s1055 + $0x8] sm:$0xff]
  %v1058 = vld [vmem:[%s1055 + $0x10] sm:$0xff]
  %v1059 = vld [vmem:[%s1055 + $0x18] sm:$0xff]
  %v1064 = vunpack.c.l.b16 %v1056
  %v1065 = vunpack.c.h.b16 %v1056
  %v1066 = vunpack.c.l.b16 %v1057
  %v1067 = vunpack.c.h.b16 %v1057
  %v1068 = vunpack.c.l.b16 %v1058
  %v1069 = vunpack.c.h.b16 %v1058
  %v1070 = vunpack.c.l.b16 %v1059
  %v1071 = vunpack.c.h.b16 %v1059
  %v1072 = vpack.c.b16 %v1064, %v1064
  %v1073 = vpack.c.b16 %v1065, %v1065
  %v1074 = vpack.c.b16 %v1066, %v1066
  %v1075 = vpack.c.b16 %v1067, %v1067
  %v1076 = vpack.c.b16 %v1068, %v1068
  %v1077 = vpack.c.b16 %v1069, %v1069
  %v1078 = vpack.c.b16 %v1070, %v1070
  %v1079 = vpack.c.b16 %v1071, %v1071
  %1088 = vmatprep.subr.bf16.mxu0 %v608
  %1089 = vmatpush1.bf16.msra.mxu0 %v607
  %1090 = vmatprep.subr.bf16.mxu0 %v610
  %1091 = vmatpush1.bf16.msra.mxu0 %v609
  %1092 = vmatprep.subr.bf16.mxu0 %v612
  %1093 = vmatpush1.bf16.msra.mxu0 %v611
  %1094 = vmatprep.subr.bf16.mxu0 %v614
  %1095 = vmatpush1.bf16.msra.mxu0 %v613
  %1096 = vmatprep.subr.bf16.mxu0 %v616
  %1097 = vmatpush1.bf16.msra.mxu0 %v615
  %1098 = vmatprep.subr.bf16.mxu0 %v618
  %1099 = vmatpush1.bf16.msra.mxu0 %v617
  %1100 = vmatprep.subr.bf16.mxu0 %v620
  %1101 = vmatpush1.bf16.msra.mxu0 %v619
  %1102 = vmatprep.subr.bf16.mxu0 %v622
  %1103 = vmatpush1.bf16.msra.mxu0 %v621
  %1104 = vmatprep.subr.bf16.mxu0 %v624
  %1105 = vmatpush1.bf16.msra.mxu0 %v623
  %1106 = vmatprep.subr.bf16.mxu0 %v626
  %1107 = vmatpush1.bf16.msra.mxu0 %v625
  %1108 = vmatprep.subr.bf16.mxu0 %v628
  %1109 = vmatpush1.bf16.msra.mxu0 %v627
  %1110 = vmatprep.subr.bf16.mxu0 %v630
  %1111 = vmatpush1.bf16.msra.mxu0 %v629
  %1112 = vmatprep.subr.bf16.mxu0 %v632
  %1113 = vmatpush1.bf16.msra.mxu0 %v631
  %1114 = vmatprep.subr.bf16.mxu0 %v634
  %1115 = vmatpush1.bf16.msra.mxu0 %v633
  %1116 = vmatprep.subr.bf16.mxu0 %v636
  %1117 = vmatpush1.bf16.msra.mxu0 %v635
  %1118 = vmatprep.subr.bf16.mxu0 %v638
  %1119 = vmatpush1.bf16.msra.mxu0 %v637
  %1120 = vmatprep.mubr.bf16.mxu0 %v1073
  %1121 = vmatmul.mubr.bf16.gmra.mrb[0].mxu0 %v1072
  %v1122 = vpop.f32.mrb[0].mxu0
  %v1123 = vadd.f32 %v188, %v1122
  %v1124 = vpop.f32.mrb[0].mxu0
  %v1125 = vadd.f32 %v192, %v1124
  %v1126 = vpop.f32.mrb[0].mxu0
  %v1127 = vpop.f32.mrb[0].mxu0
  %1128 = vdwg.mxu0
  %1129 = vmatprep.subr.bf16.mxu0 %v640
  %1130 = vmatpush1.bf16.msra.mxu0 %v639
  %1131 = vmatprep.subr.bf16.mxu0 %v642
  %1132 = vmatpush1.bf16.msra.mxu0 %v641
  %1133 = vmatprep.subr.bf16.mxu0 %v644
  %1134 = vmatpush1.bf16.msra.mxu0 %v643
  %1135 = vmatprep.subr.bf16.mxu0 %v646
  %1136 = vmatpush1.bf16.msra.mxu0 %v645
  %1137 = vmatprep.subr.bf16.mxu0 %v648
  %1138 = vmatpush1.bf16.msra.mxu0 %v647
  %1139 = vmatprep.subr.bf16.mxu0 %v650
  %1140 = vmatpush1.bf16.msra.mxu0 %v649
  %1141 = vmatprep.subr.bf16.mxu0 %v652
  %1142 = vmatpush1.bf16.msra.mxu0 %v651
  %1143 = vmatprep.subr.bf16.mxu0 %v654
  %1144 = vmatpush1.bf16.msra.mxu0 %v653
  %1145 = vmatprep.subr.bf16.mxu0 %v656
  %1146 = vmatpush1.bf16.msra.mxu0 %v655
  %1147 = vmatprep.subr.bf16.mxu0 %v658
  %1148 = vmatpush1.bf16.msra.mxu0 %v657
  %1149 = vmatprep.subr.bf16.mxu0 %v660
  %1150 = vmatpush1.bf16.msra.mxu0 %v659
  %1151 = vmatprep.subr.bf16.mxu0 %v662
  %1152 = vmatpush1.bf16.msra.mxu0 %v661
  %1153 = vmatprep.subr.bf16.mxu0 %v664
  %1154 = vmatpush1.bf16.msra.mxu0 %v663
  %1155 = vmatprep.subr.bf16.mxu0 %v666
  %1156 = vmatpush1.bf16.msra.mxu0 %v665
  %1157 = vmatprep.subr.bf16.mxu0 %v668
  %1158 = vmatpush1.bf16.msra.mxu0 %v667
  %1159 = vmatprep.subr.bf16.mxu0 %v670
  %1160 = vmatpush1.bf16.msra.mxu0 %v669
  %1161 = vmatprep.mubr.bf16.mxu0 %v1075
  %1162 = vmatmul.mubr.bf16.gmra.mrb[0].mxu0 %v1074
  %v1163 = vpop.f32.mrb[0].mxu0
  %v1164 = vadd.f32 %v1123, %v1163
  %v1165 = vpop.f32.mrb[0].mxu0
  %v1166 = vadd.f32 %v1125, %v1165
  %v1167 = vpop.f32.mrb[0].mxu0
  %v1168 = vpop.f32.mrb[0].mxu0
  %1169 = vdwg.mxu0
  %1170 = vmatprep.subr.bf16.mxu0 %v672
  %1171 = vmatpush1.bf16.msra.mxu0 %v671
  %1172 = vmatprep.subr.bf16.mxu0 %v674
  %1173 = vmatpush1.bf16.msra.mxu0 %v673
  %1174 = vmatprep.subr.bf16.mxu0 %v676
  %1175 = vmatpush1.bf16.msra.mxu0 %v675
  %1176 = vmatprep.subr.bf16.mxu0 %v678
  %1177 = vmatpush1.bf16.msra.mxu0 %v677
  %1178 = vmatprep.subr.bf16.mxu0 %v680
  %1179 = vmatpush1.bf16.msra.mxu0 %v679
  %1180 = vmatprep.subr.bf16.mxu0 %v682
  %1181 = vmatpush1.bf16.msra.mxu0 %v681
  %1182 = vmatprep.subr.bf16.mxu0 %v684
  %1183 = vmatpush1.bf16.msra.mxu0 %v683
  %1184 = vmatprep.subr.bf16.mxu0 %v686
  %1185 = vmatpush1.bf16.msra.mxu0 %v685
  %1186 = vmatprep.subr.bf16.mxu0 %v688
  %1187 = vmatpush1.bf16.msra.mxu0 %v687
  %1188 = vmatprep.subr.bf16.mxu0 %v690
  %1189 = vmatpush1.bf16.msra.mxu0 %v689
  %1190 = vmatprep.subr.bf16.mxu0 %v692
  %1191 = vmatpush1.bf16.msra.mxu0 %v691
  %1192 = vmatprep.subr.bf16.mxu0 %v694
  %1193 = vmatpush1.bf16.msra.mxu0 %v693
  %1194 = vmatprep.subr.bf16.mxu0 %v696
  %1195 = vmatpush1.bf16.msra.mxu0 %v695
  %1196 = vmatprep.subr.bf16.mxu0 %v698
  %1197 = vmatpush1.bf16.msra.mxu0 %v697
  %1198 = vmatprep.subr.bf16.mxu0 %v700
  %1199 = vmatpush1.bf16.msra.mxu0 %v699
  %1200 = vmatprep.subr.bf16.mxu0 %v702
  %1201 = vmatpush1.bf16.msra.mxu0 %v701
  %1202 = vmatprep.mubr.bf16.mxu0 %v1077
  %1203 = vmatmul.mubr.bf16.gmra.mrb[0].mxu0 %v1076
  %v1204 = vpop.f32.mrb[0].mxu0
  %v1205 = vadd.f32 %v1164, %v1204
  %v1206 = vpop.f32.mrb[0].mxu0
  %v1207 = vadd.f32 %v1166, %v1206
  %v1208 = vpop.f32.mrb[0].mxu0
  %v1209 = vpop.f32.mrb[0].mxu0
  %1210 = vdwg.mxu0
  %1211 = vmatprep.subr.bf16.mxu0 %v704
  %1212 = vmatpush1.bf16.msra.mxu0 %v703
  %1213 = vmatprep.subr.bf16.mxu0 %v706
  %1214 = vmatpush1.bf16.msra.mxu0 %v705
  %1215 = vmatprep.subr.bf16.mxu0 %v708
  %1216 = vmatpush1.bf16.msra.mxu0 %v707
  %1217 = vmatprep.subr.bf16.mxu0 %v710
  %1218 = vmatpush1.bf16.msra.mxu0 %v709
  %1219 = vmatprep.subr.bf16.mxu0 %v712
  %1220 = vmatpush1.bf16.msra.mxu0 %v711
  %1221 = vmatprep.subr.bf16.mxu0 %v714
  %1222 = vmatpush1.bf16.msra.mxu0 %v713
  %1223 = vmatprep.subr.bf16.mxu0 %v716
  %1224 = vmatpush1.bf16.msra.mxu0 %v715
  %1225 = vmatprep.subr.bf16.mxu0 %v718
  %1226 = vmatpush1.bf16.msra.mxu0 %v717
  %1227 = vmatprep.subr.bf16.mxu0 %v720
  %1228 = vmatpush1.bf16.msra.mxu0 %v719
  %1229 = vmatprep.subr.bf16.mxu0 %v722
  %1230 = vmatpush1.bf16.msra.mxu0 %v721
  %1231 = vmatprep.subr.bf16.mxu0 %v724
  %1232 = vmatpush1.bf16.msra.mxu0 %v723
  %1233 = vmatprep.subr.bf16.mxu0 %v726
  %1234 = vmatpush1.bf16.msra.mxu0 %v725
  %1235 = vmatprep.subr.bf16.mxu0 %v728
  %1236 = vmatpush1.bf16.msra.mxu0 %v727
  %1237 = vmatprep.subr.bf16.mxu0 %v730
  %1238 = vmatpush1.bf16.msra.mxu0 %v729
  %1239 = vmatprep.subr.bf16.mxu0 %v732
  %1240 = vmatpush1.bf16.msra.mxu0 %v731
  %1241 = vmatprep.subr.bf16.mxu0 %v734
  %1242 = vmatpush1.bf16.msra.mxu0 %v733
  %1243 = vmatprep.mubr.bf16.mxu0 %v1079
  %1244 = vmatmul.mubr.bf16.gmra.mrb[0].mxu0 %v1078
  %v1245 = vpop.f32.mrb[0].mxu0
  %v1246 = vadd.f32 %v1205, %v1245
  %v1247 = vpop.f32.mrb[0].mxu0
  %v1248 = vadd.f32 %v1207, %v1247
  %v1249 = vpop.f32.mrb[0].mxu0
  %v1250 = vpop.f32.mrb[0].mxu0
  %1251 = vdwg.mxu0
  %v1252 = vmax.f32 %v1246, 0.0
  %v1253 = vmax.f32 %v1248, 0.0
  %v1254 = vpack.c.bf16 %v1252, %v1252
  %v1255 = vpack.c.bf16 %v1253, %v1253
  %s1256 = scalar_lea.vmem %s4, 192
  %v1257 = vld [vmem:[%s1256] sm:$0xff]
  %v1258 = vld [vmem:[%s1256 + $0x8] sm:$0xff]
  %v1259 = vld [vmem:[%s1256 + $0x10] sm:$0xff]
  %v1260 = vld [vmem:[%s1256 + $0x18] sm:$0xff]
  %v1261 = vld [vmem:[%s1256 + $0x20] sm:$0xff]
  %v1262 = vld [vmem:[%s1256 + $0x28] sm:$0xff]
  %v1263 = vld [vmem:[%s1256 + $0x30] sm:$0xff]
  %v1264 = vld [vmem:[%s1256 + $0x38] sm:$0xff]
  %v1265 = vld [vmem:[%s1256 + $0x40] sm:$0xff]
  %v1266 = vld [vmem:[%s1256 + $0x48] sm:$0xff]
  %v1267 = vld [vmem:[%s1256 + $0x50] sm:$0xff]
  %v1268 = vld [vmem:[%s1256 + $0x58] sm:$0xff]
  %v1269 = vld [vmem:[%s1256 + $0x60] sm:$0xff]
  %v1270 = vld [vmem:[%s1256 + $0x68] sm:$0xff]
  %v1271 = vld [vmem:[%s1256 + $0x70] sm:$0xff]
  %v1272 = vld [vmem:[%s1256 + $0x78] sm:$0xff]
  %v1273 = vld [vmem:[%s1256 + $0x80] sm:$0xff]
  %v1274 = vld [vmem:[%s1256 + $0x88] sm:$0xff]
  %v1275 = vld [vmem:[%s1256 + $0x90] sm:$0xff]
  %v1276 = vld [vmem:[%s1256 + $0x98] sm:$0xff]
  %v1277 = vld [vmem:[%s1256 + $0xa0] sm:$0xff]
  %v1278 = vld [vmem:[%s1256 + $0xa8] sm:$0xff]
  %v1279 = vld [vmem:[%s1256 + $0xb0] sm:$0xff]
  %v1280 = vld [vmem:[%s1256 + $0xb8] sm:$0xff]
  %v1305 = vunpack.c.l.b16 %v1257
  %v1306 = vunpack.c.h.b16 %v1257
  %v1307 = vunpack.c.l.b16 %v1258
  %v1308 = vunpack.c.h.b16 %v1258
  %v1309 = vunpack.c.l.b16 %v1259
  %v1310 = vunpack.c.h.b16 %v1259
  %v1311 = vunpack.c.l.b16 %v1260
  %v1312 = vunpack.c.h.b16 %v1260
  %v1313 = vunpack.c.l.b16 %v1261
  %v1314 = vunpack.c.h.b16 %v1261
  %v1315 = vunpack.c.l.b16 %v1262
  %v1316 = vunpack.c.h.b16 %v1262
  %v1317 = vunpack.c.l.b16 %v1263
  %v1318 = vunpack.c.h.b16 %v1263
  %v1319 = vunpack.c.l.b16 %v1264
  %v1320 = vunpack.c.h.b16 %v1264
  %v1321 = vunpack.c.l.b16 %v1265
  %v1322 = vunpack.c.h.b16 %v1265
  %v1323 = vunpack.c.l.b16 %v1266
  %v1324 = vunpack.c.h.b16 %v1266
  %v1325 = vunpack.c.l.b16 %v1267
  %v1326 = vunpack.c.h.b16 %v1267
  %v1327 = vunpack.c.l.b16 %v1268
  %v1328 = vunpack.c.h.b16 %v1268
  %v1329 = vunpack.c.l.b16 %v1269
  %v1330 = vunpack.c.h.b16 %v1269
  %v1331 = vunpack.c.l.b16 %v1270
  %v1332 = vunpack.c.h.b16 %v1270
  %v1333 = vunpack.c.l.b16 %v1271
  %v1334 = vunpack.c.h.b16 %v1271
  %v1335 = vunpack.c.l.b16 %v1272
  %v1336 = vunpack.c.h.b16 %v1272
  %v1337 = vunpack.c.l.b16 %v1273
  %v1338 = vunpack.c.h.b16 %v1273
  %v1339 = vunpack.c.l.b16 %v1274
  %v1340 = vunpack.c.h.b16 %v1274
  %v1341 = vunpack.c.l.b16 %v1275
  %v1342 = vunpack.c.h.b16 %v1275
  %v1343 = vunpack.c.l.b16 %v1276
  %v1344 = vunpack.c.h.b16 %v1276
  %v1345 = vunpack.c.l.b16 %v1277
  %v1346 = vunpack.c.h.b16 %v1277
  %v1347 = vunpack.c.l.b16 %v1278
  %v1348 = vunpack.c.h.b16 %v1278
  %v1349 = vunpack.c.l.b16 %v1279
  %v1350 = vunpack.c.h.b16 %v1279
  %v1351 = vunpack.c.l.b16 %v1280
  %v1352 = vunpack.c.h.b16 %v1280
  %v1353 = vpack.c.b16 %v1307, %v1305
  %v1354 = vpack.c.b16 %v1308, %v1306
  %v1355 = vpack.c.b16 %v1311, %v1309
  %v1356 = vpack.c.b16 %v1312, %v1310
  %v1357 = vpack.c.b16 %v1315, %v1313
  %v1358 = vpack.c.b16 %v1316, %v1314
  %v1359 = vpack.c.b16 %v1319, %v1317
  %v1360 = vpack.c.b16 %v1320, %v1318
  %v1361 = vpack.c.b16 %v1323, %v1321
  %v1362 = vpack.c.b16 %v1324, %v1322
  %v1363 = vpack.c.b16 %v1327, %v1325
  %v1364 = vpack.c.b16 %v1328, %v1326
  %v1365 = vpack.c.b16 %v1331, %v1329
  %v1366 = vpack.c.b16 %v1332, %v1330
  %v1367 = vpack.c.b16 %v1335, %v1333
  %v1368 = vpack.c.b16 %v1336, %v1334
  %v1369 = vpack.c.b16 %v1339, %v1337
  %v1370 = vpack.c.b16 %v1340, %v1338
  %v1371 = vpack.c.b16 %v1343, %v1341
  %v1372 = vpack.c.b16 %v1344, %v1342
  %v1373 = vpack.c.b16 %v1347, %v1345
  %v1374 = vpack.c.b16 %v1348, %v1346
  %v1375 = vpack.c.b16 %v1351, %v1349
  %v1376 = vpack.c.b16 %v1352, %v1350
  %vm1401 = vcmask 523264
  %v1403 = vsel %vm1401, %v1255, 0
  %1405 = vmatprep.subr.bf16.mxu0 %v1354
  %1406 = vmatpush1.bf16.msra.mxu0 %v1353
  %1407 = vmatprep.subr.bf16.mxu0 %v1356
  %1408 = vmatpush1.bf16.msra.mxu0 %v1355
  %1409 = vmatprep.subr.bf16.mxu0 %v1358
  %1410 = vmatpush1.bf16.msra.mxu0 %v1357
  %1411 = vmatprep.subr.bf16.mxu0 %v1360
  %1412 = vmatpush1.bf16.msra.mxu0 %v1359
  %1413 = vmatprep.subr.bf16.mxu0 %v1362
  %1414 = vmatpush1.bf16.msra.mxu0 %v1361
  %1415 = vmatprep.subr.bf16.mxu0 %v1364
  %1416 = vmatpush1.bf16.msra.mxu0 %v1363
  %1417 = vmatprep.subr.bf16.mxu0 %v1366
  %1418 = vmatpush1.bf16.msra.mxu0 %v1365
  %1419 = vmatprep.subr.bf16.mxu0 %v1368
  %1420 = vmatpush1.bf16.msra.mxu0 %v1367
  %1421 = vmatprep.subr.bf16.mxu0 %v1370
  %1422 = vmatpush1.bf16.msra.mxu0 %v1369
  %1423 = vmatprep.subr.bf16.mxu0 %v1372
  %1424 = vmatpush1.bf16.msra.mxu0 %v1371
  %1425 = vmatprep.subr.bf16.mxu0 %v1374
  %1426 = vmatpush1.bf16.msra.mxu0 %v1373
  %1427 = vmatprep.subr.bf16.mxu0 %v1376
  %1428 = vmatpush1.bf16.msra.mxu0 %v1375
  %1429 = vmatprep.subr.bf16.mxu0 0
  %1430 = vmatpush1.bf16.msra.mxu0 0
  %1431 = vmatprep.subr.bf16.mxu0 0
  %1432 = vmatpush1.bf16.msra.mxu0 0
  %1433 = vmatprep.subr.bf16.mxu0 0
  %1434 = vmatpush1.bf16.msra.mxu0 0
  %1435 = vmatprep.subr.bf16.mxu0 0
  %1436 = vmatpush1.bf16.msra.mxu0 0
  %1437 = vmatprep.mubr.bf16.mxu0 %v1403
  %1438 = vmatmul.mubr.bf16.gmra.mrb[0].mxu0 %v1254
  %v1439 = vpop.f32.mrb[0].mxu0
  %v1440 = vadd.f32 0.0, %v1439
  %v1441 = vpop.f32.mrb[0].mxu0
  %v1442 = vadd.f32 0.0, %v1441
  %v1443 = vpop.f32.mrb[0].mxu0
  %v1444 = vpop.f32.mrb[0].mxu0
  %1445 = vdwg.mxu0
  %v1470 = vunpack.c.l.b16 %v1031
  %v1471 = vunpack.c.h.b16 %v1031
  %v1472 = vunpack.c.l.b16 %v1032
  %v1473 = vunpack.c.h.b16 %v1032
  %v1474 = vunpack.c.l.b16 %v1033
  %v1475 = vunpack.c.h.b16 %v1033
  %v1476 = vunpack.c.l.b16 %v1034
  %v1477 = vunpack.c.h.b16 %v1034
  %v1478 = vunpack.c.l.b16 %v1035
  %v1479 = vunpack.c.h.b16 %v1035
  %v1480 = vunpack.c.l.b16 %v1036
  %v1481 = vunpack.c.h.b16 %v1036
  %v1482 = vunpack.c.l.b16 %v1037
  %v1483 = vunpack.c.h.b16 %v1037
  %v1484 = vunpack.c.l.b16 %v1038
  %v1485 = vunpack.c.h.b16 %v1038
  %v1486 = vunpack.c.l.b16 %v1039
  %v1487 = vunpack.c.h.b16 %v1039
  %v1488 = vunpack.c.l.b16 %v1040
  %v1489 = vunpack.c.h.b16 %v1040
  %v1490 = vunpack.c.l.b16 %v1041
  %v1491 = vunpack.c.h.b16 %v1041
  %v1492 = vunpack.c.l.b16 %v1042
  %v1493 = vunpack.c.h.b16 %v1042
  %v1494 = vunpack.c.l.b16 %v1043
  %v1495 = vunpack.c.h.b16 %v1043
  %v1496 = vunpack.c.l.b16 %v1044
  %v1497 = vunpack.c.h.b16 %v1044
  %v1498 = vunpack.c.l.b16 %v1045
  %v1499 = vunpack.c.h.b16 %v1045
  %v1500 = vunpack.c.l.b16 %v1046
  %v1501 = vunpack.c.h.b16 %v1046
  %v1502 = vunpack.c.l.b16 %v1047
  %v1503 = vunpack.c.h.b16 %v1047
  %v1504 = vunpack.c.l.b16 %v1048
  %v1505 = vunpack.c.h.b16 %v1048
  %v1506 = vunpack.c.l.b16 %v1049
  %v1507 = vunpack.c.h.b16 %v1049
  %v1508 = vunpack.c.l.b16 %v1050
  %v1509 = vunpack.c.h.b16 %v1050
  %v1510 = vunpack.c.l.b16 %v1051
  %v1511 = vunpack.c.h.b16 %v1051
  %v1512 = vunpack.c.l.b16 %v1052
  %v1513 = vunpack.c.h.b16 %v1052
  %v1514 = vunpack.c.l.b16 %v1053
  %v1515 = vunpack.c.h.b16 %v1053
  %v1516 = vunpack.c.l.b16 %v1054
  %v1517 = vunpack.c.h.b16 %v1054
  %v1518 = vpack.c.b16 %v1472, %v1470
  %v1519 = vpack.c.b16 %v1473, %v1471
  %v1520 = vpack.c.b16 %v1476, %v1474
  %v1521 = vpack.c.b16 %v1477, %v1475
  %v1522 = vpack.c.b16 %v1480, %v1478
  %v1523 = vpack.c.b16 %v1481, %v1479
  %v1524 = vpack.c.b16 %v1484, %v1482
  %v1525 = vpack.c.b16 %v1485, %v1483
  %v1526 = vpack.c.b16 %v1488, %v1486
  %v1527 = vpack.c.b16 %v1489, %v1487
  %v1528 = vpack.c.b16 %v1492, %v1490
  %v1529 = vpack.c.b16 %v1493, %v1491
  %v1530 = vpack.c.b16 %v1496, %v1494
  %v1531 = vpack.c.b16 %v1497, %v1495
  %v1532 = vpack.c.b16 %v1500, %v1498
  %v1533 = vpack.c.b16 %v1501, %v1499
  %v1534 = vpack.c.b16 %v1504, %v1502
  %v1535 = vpack.c.b16 %v1505, %v1503
  %v1536 = vpack.c.b16 %v1508, %v1506
  %v1537 = vpack.c.b16 %v1509, %v1507
  %v1538 = vpack.c.b16 %v1512, %v1510
  %v1539 = vpack.c.b16 %v1513, %v1511
  %v1540 = vpack.c.b16 %v1516, %v1514
  %v1541 = vpack.c.b16 %v1517, %v1515
  %v1567 = vsel %vm1401, %v1030, 0
  %1569 = vmatprep.subr.bf16.mxu0 %v1519
  %1570 = vmatpush1.bf16.msra.mxu0 %v1518
  %1571 = vmatprep.subr.bf16.mxu0 %v1521
  %1572 = vmatpush1.bf16.msra.mxu0 %v1520
  %1573 = vmatprep.subr.bf16.mxu0 %v1523
  %1574 = vmatpush1.bf16.msra.mxu0 %v1522
  %1575 = vmatprep.subr.bf16.mxu0 %v1525
  %1576 = vmatpush1.bf16.msra.mxu0 %v1524
  %1577 = vmatprep.subr.bf16.mxu0 %v1527
  %1578 = vmatpush1.bf16.msra.mxu0 %v1526
  %1579 = vmatprep.subr.bf16.mxu0 %v1529
  %1580 = vmatpush1.bf16.msra.mxu0 %v1528
  %1581 = vmatprep.subr.bf16.mxu0 %v1531
  %1582 = vmatpush1.bf16.msra.mxu0 %v1530
  %1583 = vmatprep.subr.bf16.mxu0 %v1533
  %1584 = vmatpush1.bf16.msra.mxu0 %v1532
  %1585 = vmatprep.subr.bf16.mxu0 %v1535
  %1586 = vmatpush1.bf16.msra.mxu0 %v1534
  %1587 = vmatprep.subr.bf16.mxu0 %v1537
  %1588 = vmatpush1.bf16.msra.mxu0 %v1536
  %1589 = vmatprep.subr.bf16.mxu0 %v1539
  %1590 = vmatpush1.bf16.msra.mxu0 %v1538
  %1591 = vmatprep.subr.bf16.mxu0 %v1541
  %1592 = vmatpush1.bf16.msra.mxu0 %v1540
  %1593 = vmatprep.subr.bf16.mxu0 0
  %1594 = vmatpush1.bf16.msra.mxu0 0
  %1595 = vmatprep.subr.bf16.mxu0 0
  %1596 = vmatpush1.bf16.msra.mxu0 0
  %1597 = vmatprep.subr.bf16.mxu0 0
  %1598 = vmatpush1.bf16.msra.mxu0 0
  %1599 = vmatprep.subr.bf16.mxu0 0
  %1600 = vmatpush1.bf16.msra.mxu0 0
  %1601 = vmatprep.mubr.bf16.mxu0 %v1567
  %1602 = vmatmul.mubr.bf16.gmra.mrb[0].mxu0 %v1029
  %v1603 = vpop.f32.mrb[0].mxu0
  %v1604 = vadd.f32 %v1440, %v1603
  %v1605 = vpop.f32.mrb[0].mxu0
  %v1606 = vadd.f32 %v1442, %v1605
  %v1607 = vpop.f32.mrb[0].mxu0
  %v1608 = vpop.f32.mrb[0].mxu0
  %1609 = vdwg.mxu0
  %s1610 = scalar_lea.vmem %s0, 64
  %v1611 = vld [vmem:[%s1610] sm:$0xff]
  %v1612 = vld [vmem:[%s1610 + $0x8] sm:$0xff]
  %v1613 = vld [vmem:[%s1610 + $0x10] sm:$0xff]
  %v1614 = vld [vmem:[%s1610 + $0x18] sm:$0xff]
  %v1619 = vunpack.c.l.b16 %v1611
  %v1620 = vunpack.c.h.b16 %v1611
  %v1621 = vunpack.c.l.b16 %v1612
  %v1622 = vunpack.c.h.b16 %v1612
  %v1623 = vunpack.c.l.b16 %v1613
  %v1624 = vunpack.c.h.b16 %v1613
  %v1625 = vunpack.c.l.b16 %v1614
  %v1626 = vunpack.c.h.b16 %v1614
  %v1627 = vpack.c.b16 %v1619, %v1619
  %v1628 = vpack.c.b16 %v1620, %v1620
  %v1629 = vpack.c.b16 %v1621, %v1621
  %v1630 = vpack.c.b16 %v1622, %v1622
  %v1631 = vpack.c.b16 %v1623, %v1623
  %v1632 = vpack.c.b16 %v1624, %v1624
  %v1633 = vpack.c.b16 %v1625, %v1625
  %v1634 = vpack.c.b16 %v1626, %v1626
  %1643 = vmatprep.subr.bf16.mxu0 %v608
  %1644 = vmatpush1.bf16.msra.mxu0 %v607
  %1645 = vmatprep.subr.bf16.mxu0 %v610
  %1646 = vmatpush1.bf16.msra.mxu0 %v609
  %1647 = vmatprep.subr.bf16.mxu0 %v612
  %1648 = vmatpush1.bf16.msra.mxu0 %v611
  %1649 = vmatprep.subr.bf16.mxu0 %v614
  %1650 = vmatpush1.bf16.msra.mxu0 %v613
  %1651 = vmatprep.subr.bf16.mxu0 %v616
  %1652 = vmatpush1.bf16.msra.mxu0 %v615
  %1653 = vmatprep.subr.bf16.mxu0 %v618
  %1654 = vmatpush1.bf16.msra.mxu0 %v617
  %1655 = vmatprep.subr.bf16.mxu0 %v620
  %1656 = vmatpush1.bf16.msra.mxu0 %v619
  %1657 = vmatprep.subr.bf16.mxu0 %v622
  %1658 = vmatpush1.bf16.msra.mxu0 %v621
  %1659 = vmatprep.subr.bf16.mxu0 %v624
  %1660 = vmatpush1.bf16.msra.mxu0 %v623
  %1661 = vmatprep.subr.bf16.mxu0 %v626
  %1662 = vmatpush1.bf16.msra.mxu0 %v625
  %1663 = vmatprep.subr.bf16.mxu0 %v628
  %1664 = vmatpush1.bf16.msra.mxu0 %v627
  %1665 = vmatprep.subr.bf16.mxu0 %v630
  %1666 = vmatpush1.bf16.msra.mxu0 %v629
  %1667 = vmatprep.subr.bf16.mxu0 %v632
  %1668 = vmatpush1.bf16.msra.mxu0 %v631
  %1669 = vmatprep.subr.bf16.mxu0 %v634
  %1670 = vmatpush1.bf16.msra.mxu0 %v633
  %1671 = vmatprep.subr.bf16.mxu0 %v636
  %1672 = vmatpush1.bf16.msra.mxu0 %v635
  %1673 = vmatprep.subr.bf16.mxu0 %v638
  %1674 = vmatpush1.bf16.msra.mxu0 %v637
  %1675 = vmatprep.mubr.bf16.mxu0 %v1628
  %1676 = vmatmul.mubr.bf16.gmra.mrb[0].mxu0 %v1627
  %v1677 = vpop.f32.mrb[0].mxu0
  %v1678 = vadd.f32 %v188, %v1677
  %v1679 = vpop.f32.mrb[0].mxu0
  %v1680 = vadd.f32 %v192, %v1679
  %v1681 = vpop.f32.mrb[0].mxu0
  %v1682 = vpop.f32.mrb[0].mxu0
  %1683 = vdwg.mxu0
  %1684 = vmatprep.subr.bf16.mxu0 %v640
  %1685 = vmatpush1.bf16.msra.mxu0 %v639
  %1686 = vmatprep.subr.bf16.mxu0 %v642
  %1687 = vmatpush1.bf16.msra.mxu0 %v641
  %1688 = vmatprep.subr.bf16.mxu0 %v644
  %1689 = vmatpush1.bf16.msra.mxu0 %v643
  %1690 = vmatprep.subr.bf16.mxu0 %v646
  %1691 = vmatpush1.bf16.msra.mxu0 %v645
  %1692 = vmatprep.subr.bf16.mxu0 %v648
  %1693 = vmatpush1.bf16.msra.mxu0 %v647
  %1694 = vmatprep.subr.bf16.mxu0 %v650
  %1695 = vmatpush1.bf16.msra.mxu0 %v649
  %1696 = vmatprep.subr.bf16.mxu0 %v652
  %1697 = vmatpush1.bf16.msra.mxu0 %v651
  %1698 = vmatprep.subr.bf16.mxu0 %v654
  %1699 = vmatpush1.bf16.msra.mxu0 %v653
  %1700 = vmatprep.subr.bf16.mxu0 %v656
  %1701 = vmatpush1.bf16.msra.mxu0 %v655
  %1702 = vmatprep.subr.bf16.mxu0 %v658
  %1703 = vmatpush1.bf16.msra.mxu0 %v657
  %1704 = vmatprep.subr.bf16.mxu0 %v660
  %1705 = vmatpush1.bf16.msra.mxu0 %v659
  %1706 = vmatprep.subr.bf16.mxu0 %v662
  %1707 = vmatpush1.bf16.msra.mxu0 %v661
  %1708 = vmatprep.subr.bf16.mxu0 %v664
  %1709 = vmatpush1.bf16.msra.mxu0 %v663
  %1710 = vmatprep.subr.bf16.mxu0 %v666
  %1711 = vmatpush1.bf16.msra.mxu0 %v665
  %1712 = vmatprep.subr.bf16.mxu0 %v668
  %1713 = vmatpush1.bf16.msra.mxu0 %v667
  %1714 = vmatprep.subr.bf16.mxu0 %v670
  %1715 = vmatpush1.bf16.msra.mxu0 %v669
  %1716 = vmatprep.mubr.bf16.mxu0 %v1630
  %1717 = vmatmul.mubr.bf16.gmra.mrb[0].mxu0 %v1629
  %v1718 = vpop.f32.mrb[0].mxu0
  %v1719 = vadd.f32 %v1678, %v1718
  %v1720 = vpop.f32.mrb[0].mxu0
  %v1721 = vadd.f32 %v1680, %v1720
  %v1722 = vpop.f32.mrb[0].mxu0
  %v1723 = vpop.f32.mrb[0].mxu0
  %1724 = vdwg.mxu0
  %1725 = vmatprep.subr.bf16.mxu0 %v672
  %1726 = vmatpush1.bf16.msra.mxu0 %v671
  %1727 = vmatprep.subr.bf16.mxu0 %v674
  %1728 = vmatpush1.bf16.msra.mxu0 %v673
  %1729 = vmatprep.subr.bf16.mxu0 %v676
  %1730 = vmatpush1.bf16.msra.mxu0 %v675
  %1731 = vmatprep.subr.bf16.mxu0 %v678
  %1732 = vmatpush1.bf16.msra.mxu0 %v677
  %1733 = vmatprep.subr.bf16.mxu0 %v680
  %1734 = vmatpush1.bf16.msra.mxu0 %v679
  %1735 = vmatprep.subr.bf16.mxu0 %v682
  %1736 = vmatpush1.bf16.msra.mxu0 %v681
  %1737 = vmatprep.subr.bf16.mxu0 %v684
  %1738 = vmatpush1.bf16.msra.mxu0 %v683
  %1739 = vmatprep.subr.bf16.mxu0 %v686
  %1740 = vmatpush1.bf16.msra.mxu0 %v685
  %1741 = vmatprep.subr.bf16.mxu0 %v688
  %1742 = vmatpush1.bf16.msra.mxu0 %v687
  %1743 = vmatprep.subr.bf16.mxu0 %v690
  %1744 = vmatpush1.bf16.msra.mxu0 %v689
  %1745 = vmatprep.subr.bf16.mxu0 %v692
  %1746 = vmatpush1.bf16.msra.mxu0 %v691
  %1747 = vmatprep.subr.bf16.mxu0 %v694
  %1748 = vmatpush1.bf16.msra.mxu0 %v693
  %1749 = vmatprep.subr.bf16.mxu0 %v696
  %1750 = vmatpush1.bf16.msra.mxu0 %v695
  %1751 = vmatprep.subr.bf16.mxu0 %v698
  %1752 = vmatpush1.bf16.msra.mxu0 %v697
  %1753 = vmatprep.subr.bf16.mxu0 %v700
  %1754 = vmatpush1.bf16.msra.mxu0 %v699
  %1755 = vmatprep.subr.bf16.mxu0 %v702
  %1756 = vmatpush1.bf16.msra.mxu0 %v701
  %1757 = vmatprep.mubr.bf16.mxu0 %v1632
  %1758 = vmatmul.mubr.bf16.gmra.mrb[0].mxu0 %v1631
  %v1759 = vpop.f32.mrb[0].mxu0
  %v1760 = vadd.f32 %v1719, %v1759
  %v1761 = vpop.f32.mrb[0].mxu0
  %v1762 = vadd.f32 %v1721, %v1761
  %v1763 = vpop.f32.mrb[0].mxu0
  %v1764 = vpop.f32.mrb[0].mxu0
  %1765 = vdwg.mxu0
  %1766 = vmatprep.subr.bf16.mxu0 %v704
  %1767 = vmatpush1.bf16.msra.mxu0 %v703
  %1768 = vmatprep.subr.bf16.mxu0 %v706
  %1769 = vmatpush1.bf16.msra.mxu0 %v705
  %1770 = vmatprep.subr.bf16.mxu0 %v708
  %1771 = vmatpush1.bf16.msra.mxu0 %v707
  %1772 = vmatprep.subr.bf16.mxu0 %v710
  %1773 = vmatpush1.bf16.msra.mxu0 %v709
  %1774 = vmatprep.subr.bf16.mxu0 %v712
  %1775 = vmatpush1.bf16.msra.mxu0 %v711
  %1776 = vmatprep.subr.bf16.mxu0 %v714
  %1777 = vmatpush1.bf16.msra.mxu0 %v713
  %1778 = vmatprep.subr.bf16.mxu0 %v716
  %1779 = vmatpush1.bf16.msra.mxu0 %v715
  %1780 = vmatprep.subr.bf16.mxu0 %v718
  %1781 = vmatpush1.bf16.msra.mxu0 %v717
  %1782 = vmatprep.subr.bf16.mxu0 %v720
  %1783 = vmatpush1.bf16.msra.mxu0 %v719
  %1784 = vmatprep.subr.bf16.mxu0 %v722
  %1785 = vmatpush1.bf16.msra.mxu0 %v721
  %1786 = vmatprep.subr.bf16.mxu0 %v724
  %1787 = vmatpush1.bf16.msra.mxu0 %v723
  %1788 = vmatprep.subr.bf16.mxu0 %v726
  %1789 = vmatpush1.bf16.msra.mxu0 %v725
  %1790 = vmatprep.subr.bf16.mxu0 %v728
  %1791 = vmatpush1.bf16.msra.mxu0 %v727
  %1792 = vmatprep.subr.bf16.mxu0 %v730
  %1793 = vmatpush1.bf16.msra.mxu0 %v729
  %1794 = vmatprep.subr.bf16.mxu0 %v732
  %1795 = vmatpush1.bf16.msra.mxu0 %v731
  %1796 = vmatprep.subr.bf16.mxu0 %v734
  %1797 = vmatpush1.bf16.msra.mxu0 %v733
  %1798 = vmatprep.mubr.bf16.mxu0 %v1634
  %1799 = vmatmul.mubr.bf16.gmra.mrb[0].mxu0 %v1633
  %v1800 = vpop.f32.mrb[0].mxu0
  %v1801 = vadd.f32 %v1760, %v1800
  %v1802 = vpop.f32.mrb[0].mxu0
  %v1803 = vadd.f32 %v1762, %v1802
  %v1804 = vpop.f32.mrb[0].mxu0
  %v1805 = vpop.f32.mrb[0].mxu0
  %1806 = vdwg.mxu0
  %v1807 = vmax.f32 %v1801, 0.0
  %v1808 = vmax.f32 %v1803, 0.0
  %v1809 = vpack.c.bf16 %v1807, %v1807
  %v1810 = vpack.c.bf16 %v1808, %v1808
  %s1811 = scalar_lea.vmem %s4, 384
  %v1812 = vld [vmem:[%s1811] sm:$0xff]
  %v1813 = vld [vmem:[%s1811 + $0x8] sm:$0xff]
  %v1814 = vld [vmem:[%s1811 + $0x10] sm:$0xff]
  %v1815 = vld [vmem:[%s1811 + $0x18] sm:$0xff]
  %v1816 = vld [vmem:[%s1811 + $0x20] sm:$0xff]
  %v1817 = vld [vmem:[%s1811 + $0x28] sm:$0xff]
  %v1818 = vld [vmem:[%s1811 + $0x30] sm:$0xff]
  %v1819 = vld [vmem:[%s1811 + $0x38] sm:$0xff]
  %v1820 = vld [vmem:[%s1811 + $0x40] sm:$0xff]
  %v1821 = vld [vmem:[%s1811 + $0x48] sm:$0xff]
  %v1822 = vld [vmem:[%s1811 + $0x50] sm:$0xff]
  %v1823 = vld [vmem:[%s1811 + $0x58] sm:$0xff]
  %v1824 = vld [vmem:[%s1811 + $0x60] sm:$0xff]
  %v1825 = vld [vmem:[%s1811 + $0x68] sm:$0xff]
  %v1826 = vld [vmem:[%s1811 + $0x70] sm:$0xff]
  %v1827 = vld [vmem:[%s1811 + $0x78] sm:$0xff]
  %v1828 = vld [vmem:[%s1811 + $0x80] sm:$0xff]
  %v1829 = vld [vmem:[%s1811 + $0x88] sm:$0xff]
  %v1830 = vld [vmem:[%s1811 + $0x90] sm:$0xff]
  %v1831 = vld [vmem:[%s1811 + $0x98] sm:$0xff]
  %v1832 = vld [vmem:[%s1811 + $0xa0] sm:$0xff]
  %v1833 = vld [vmem:[%s1811 + $0xa8] sm:$0xff]
  %v1834 = vld [vmem:[%s1811 + $0xb0] sm:$0xff]
  %v1835 = vld [vmem:[%s1811 + $0xb8] sm:$0xff]
  %v1860 = vunpack.c.l.b16 %v1812
  %v1861 = vunpack.c.h.b16 %v1812
  %v1862 = vunpack.c.l.b16 %v1813
  %v1863 = vunpack.c.h.b16 %v1813
  %v1864 = vunpack.c.l.b16 %v1814
  %v1865 = vunpack.c.h.b16 %v1814
  %v1866 = vunpack.c.l.b16 %v1815
  %v1867 = vunpack.c.h.b16 %v1815
  %v1868 = vunpack.c.l.b16 %v1816
  %v1869 = vunpack.c.h.b16 %v1816
  %v1870 = vunpack.c.l.b16 %v1817
  %v1871 = vunpack.c.h.b16 %v1817
  %v1872 = vunpack.c.l.b16 %v1818
  %v1873 = vunpack.c.h.b16 %v1818
  %v1874 = vunpack.c.l.b16 %v1819
  %v1875 = vunpack.c.h.b16 %v1819
  %v1876 = vunpack.c.l.b16 %v1820
  %v1877 = vunpack.c.h.b16 %v1820
  %v1878 = vunpack.c.l.b16 %v1821
  %v1879 = vunpack.c.h.b16 %v1821
  %v1880 = vunpack.c.l.b16 %v1822
  %v1881 = vunpack.c.h.b16 %v1822
  %v1882 = vunpack.c.l.b16 %v1823
  %v1883 = vunpack.c.h.b16 %v1823
  %v1884 = vunpack.c.l.b16 %v1824
  %v1885 = vunpack.c.h.b16 %v1824
  %v1886 = vunpack.c.l.b16 %v1825
  %v1887 = vunpack.c.h.b16 %v1825
  %v1888 = vunpack.c.l.b16 %v1826
  %v1889 = vunpack.c.h.b16 %v1826
  %v1890 = vunpack.c.l.b16 %v1827
  %v1891 = vunpack.c.h.b16 %v1827
  %v1892 = vunpack.c.l.b16 %v1828
  %v1893 = vunpack.c.h.b16 %v1828
  %v1894 = vunpack.c.l.b16 %v1829
  %v1895 = vunpack.c.h.b16 %v1829
  %v1896 = vunpack.c.l.b16 %v1830
  %v1897 = vunpack.c.h.b16 %v1830
  %v1898 = vunpack.c.l.b16 %v1831
  %v1899 = vunpack.c.h.b16 %v1831
  %v1900 = vunpack.c.l.b16 %v1832
  %v1901 = vunpack.c.h.b16 %v1832
  %v1902 = vunpack.c.l.b16 %v1833
  %v1903 = vunpack.c.h.b16 %v1833
  %v1904 = vunpack.c.l.b16 %v1834
  %v1905 = vunpack.c.h.b16 %v1834
  %v1906 = vunpack.c.l.b16 %v1835
  %v1907 = vunpack.c.h.b16 %v1835
  %v1908 = vpack.c.b16 %v1862, %v1860
  %v1909 = vpack.c.b16 %v1863, %v1861
  %v1910 = vpack.c.b16 %v1866, %v1864
  %v1911 = vpack.c.b16 %v1867, %v1865
  %v1912 = vpack.c.b16 %v1870, %v1868
  %v1913 = vpack.c.b16 %v1871, %v1869
  %v1914 = vpack.c.b16 %v1874, %v1872
  %v1915 = vpack.c.b16 %v1875, %v1873
  %v1916 = vpack.c.b16 %v1878, %v1876
  %v1917 = vpack.c.b16 %v1879, %v1877
  %v1918 = vpack.c.b16 %v1882, %v1880
  %v1919 = vpack.c.b16 %v1883, %v1881
  %v1920 = vpack.c.b16 %v1886, %v1884
  %v1921 = vpack.c.b16 %v1887, %v1885
  %v1922 = vpack.c.b16 %v1890, %v1888
  %v1923 = vpack.c.b16 %v1891, %v1889
  %v1924 = vpack.c.b16 %v1894, %v1892
  %v1925 = vpack.c.b16 %v1895, %v1893
  %v1926 = vpack.c.b16 %v1898, %v1896
  %v1927 = vpack.c.b16 %v1899, %v1897
  %v1928 = vpack.c.b16 %v1902, %v1900
  %v1929 = vpack.c.b16 %v1903, %v1901
  %v1930 = vpack.c.b16 %v1906, %v1904
  %v1931 = vpack.c.b16 %v1907, %v1905
  %v1957 = vsel %vm1401, %v1810, 0
  %1959 = vmatprep.subr.bf16.mxu0 %v1909
  %1960 = vmatpush1.bf16.msra.mxu0 %v1908
  %1961 = vmatprep.subr.bf16.mxu0 %v1911
  %1962 = vmatpush1.bf16.msra.mxu0 %v1910
  %1963 = vmatprep.subr.bf16.mxu0 %v1913
  %1964 = vmatpush1.bf16.msra.mxu0 %v1912
  %1965 = vmatprep.subr.bf16.mxu0 %v1915
  %1966 = vmatpush1.bf16.msra.mxu0 %v1914
  %1967 = vmatprep.subr.bf16.mxu0 %v1917
  %1968 = vmatpush1.bf16.msra.mxu0 %v1916
  %1969 = vmatprep.subr.bf16.mxu0 %v1919
  %1970 = vmatpush1.bf16.msra.mxu0 %v1918
  %1971 = vmatprep.subr.bf16.mxu0 %v1921
  %1972 = vmatpush1.bf16.msra.mxu0 %v1920
  %1973 = vmatprep.subr.bf16.mxu0 %v1923
  %1974 = vmatpush1.bf16.msra.mxu0 %v1922
  %1975 = vmatprep.subr.bf16.mxu0 %v1925
  %1976 = vmatpush1.bf16.msra.mxu0 %v1924
  %1977 = vmatprep.subr.bf16.mxu0 %v1927
  %1978 = vmatpush1.bf16.msra.mxu0 %v1926
  %1979 = vmatprep.subr.bf16.mxu0 %v1929
  %1980 = vmatpush1.bf16.msra.mxu0 %v1928
  %1981 = vmatprep.subr.bf16.mxu0 %v1931
  %1982 = vmatpush1.bf16.msra.mxu0 %v1930
  %1983 = vmatprep.subr.bf16.mxu0 0
  %1984 = vmatpush1.bf16.msra.mxu0 0
  %1985 = vmatprep.subr.bf16.mxu0 0
  %1986 = vmatpush1.bf16.msra.mxu0 0
  %1987 = vmatprep.subr.bf16.mxu0 0
  %1988 = vmatpush1.bf16.msra.mxu0 0
  %1989 = vmatprep.subr.bf16.mxu0 0
  %1990 = vmatpush1.bf16.msra.mxu0 0
  %1991 = vmatprep.mubr.bf16.mxu0 %v1957
  %1992 = vmatmul.mubr.bf16.gmra.mrb[0].mxu0 %v1809
  %v1993 = vpop.f32.mrb[0].mxu0
  %v1994 = vadd.f32 0.0, %v1993
  %v1995 = vpop.f32.mrb[0].mxu0
  %v1996 = vadd.f32 0.0, %v1995
  %v1997 = vpop.f32.mrb[0].mxu0
  %v1998 = vpop.f32.mrb[0].mxu0
  %1999 = vdwg.mxu0
  %v2000 = vadd.f32 %v1604, %v1994
  %v2001 = vadd.f32 %v1606, %v1996
  %s2002 = scalar_lea.vmem %s0, 96
  %v2003 = vld [vmem:[%s2002] sm:$0xff]
  %v2004 = vld [vmem:[%s2002 + $0x8] sm:$0xff]
  %v2005 = vld [vmem:[%s2002 + $0x10] sm:$0xff]
  %v2006 = vld [vmem:[%s2002 + $0x18] sm:$0xff]
  %v2011 = vunpack.c.l.b16 %v2003
  %v2012 = vunpack.c.h.b16 %v2003
  %v2013 = vunpack.c.l.b16 %v2004
  %v2014 = vunpack.c.h.b16 %v2004
  %v2015 = vunpack.c.l.b16 %v2005
  %v2016 = vunpack.c.h.b16 %v2005
  %v2017 = vunpack.c.l.b16 %v2006
  %v2018 = vunpack.c.h.b16 %v2006
  %v2019 = vpack.c.b16 %v2011, %v2011
  %v2020 = vpack.c.b16 %v2012, %v2012
  %v2021 = vpack.c.b16 %v2013, %v2013
  %v2022 = vpack.c.b16 %v2014, %v2014
  %v2023 = vpack.c.b16 %v2015, %v2015
  %v2024 = vpack.c.b16 %v2016, %v2016
  %v2025 = vpack.c.b16 %v2017, %v2017
  %v2026 = vpack.c.b16 %v2018, %v2018
  %2035 = vmatprep.subr.bf16.mxu0 %v608
  %2036 = vmatpush1.bf16.msra.mxu0 %v607
  %2037 = vmatprep.subr.bf16.mxu0 %v610
  %2038 = vmatpush1.bf16.msra.mxu0 %v609
  %2039 = vmatprep.subr.bf16.mxu0 %v612
  %2040 = vmatpush1.bf16.msra.mxu0 %v611
  %2041 = vmatprep.subr.bf16.mxu0 %v614
  %2042 = vmatpush1.bf16.msra.mxu0 %v613
  %2043 = vmatprep.subr.bf16.mxu0 %v616
  %2044 = vmatpush1.bf16.msra.mxu0 %v615
  %2045 = vmatprep.subr.bf16.mxu0 %v618
  %2046 = vmatpush1.bf16.msra.mxu0 %v617
  %2047 = vmatprep.subr.bf16.mxu0 %v620
  %2048 = vmatpush1.bf16.msra.mxu0 %v619
  %2049 = vmatprep.subr.bf16.mxu0 %v622
  %2050 = vmatpush1.bf16.msra.mxu0 %v621
  %2051 = vmatprep.subr.bf16.mxu0 %v624
  %2052 = vmatpush1.bf16.msra.mxu0 %v623
  %2053 = vmatprep.subr.bf16.mxu0 %v626
  %2054 = vmatpush1.bf16.msra.mxu0 %v625
  %2055 = vmatprep.subr.bf16.mxu0 %v628
  %2056 = vmatpush1.bf16.msra.mxu0 %v627
  %2057 = vmatprep.subr.bf16.mxu0 %v630
  %2058 = vmatpush1.bf16.msra.mxu0 %v629
  %2059 = vmatprep.subr.bf16.mxu0 %v632
  %2060 = vmatpush1.bf16.msra.mxu0 %v631
  %2061 = vmatprep.subr.bf16.mxu0 %v634
  %2062 = vmatpush1.bf16.msra.mxu0 %v633
  %2063 = vmatprep.subr.bf16.mxu0 %v636
  %2064 = vmatpush1.bf16.msra.mxu0 %v635
  %2065 = vmatprep.subr.bf16.mxu0 %v638
  %2066 = vmatpush1.bf16.msra.mxu0 %v637
  %2067 = vmatprep.mubr.bf16.mxu0 %v2020
  %2068 = vmatmul.mubr.bf16.gmra.mrb[0].mxu0 %v2019
  %v2069 = vpop.f32.mrb[0].mxu0
  %v2070 = vadd.f32 %v188, %v2069
  %v2071 = vpop.f32.mrb[0].mxu0
  %v2072 = vadd.f32 %v192, %v2071
  %v2073 = vpop.f32.mrb[0].mxu0
  %v2074 = vpop.f32.mrb[0].mxu0
  %2075 = vdwg.mxu0
  %2076 = vmatprep.subr.bf16.mxu0 %v640
  %2077 = vmatpush1.bf16.msra.mxu0 %v639
  %2078 = vmatprep.subr.bf16.mxu0 %v642
  %2079 = vmatpush1.bf16.msra.mxu0 %v641
  %2080 = vmatprep.subr.bf16.mxu0 %v644
  %2081 = vmatpush1.bf16.msra.mxu0 %v643
  %2082 = vmatprep.subr.bf16.mxu0 %v646
  %2083 = vmatpush1.bf16.msra.mxu0 %v645
  %2084 = vmatprep.subr.bf16.mxu0 %v648
  %2085 = vmatpush1.bf16.msra.mxu0 %v647
  %2086 = vmatprep.subr.bf16.mxu0 %v650
  %2087 = vmatpush1.bf16.msra.mxu0 %v649
  %2088 = vmatprep.subr.bf16.mxu0 %v652
  %2089 = vmatpush1.bf16.msra.mxu0 %v651
  %2090 = vmatprep.subr.bf16.mxu0 %v654
  %2091 = vmatpush1.bf16.msra.mxu0 %v653
  %2092 = vmatprep.subr.bf16.mxu0 %v656
  %2093 = vmatpush1.bf16.msra.mxu0 %v655
  %2094 = vmatprep.subr.bf16.mxu0 %v658
  %2095 = vmatpush1.bf16.msra.mxu0 %v657
  %2096 = vmatprep.subr.bf16.mxu0 %v660
  %2097 = vmatpush1.bf16.msra.mxu0 %v659
  %2098 = vmatprep.subr.bf16.mxu0 %v662
  %2099 = vmatpush1.bf16.msra.mxu0 %v661
  %2100 = vmatprep.subr.bf16.mxu0 %v664
  %2101 = vmatpush1.bf16.msra.mxu0 %v663
  %2102 = vmatprep.subr.bf16.mxu0 %v666
  %2103 = vmatpush1.bf16.msra.mxu0 %v665
  %2104 = vmatprep.subr.bf16.mxu0 %v668
  %2105 = vmatpush1.bf16.msra.mxu0 %v667
  %2106 = vmatprep.subr.bf16.mxu0 %v670
  %2107 = vmatpush1.bf16.msra.mxu0 %v669
  %2108 = vmatprep.mubr.bf16.mxu0 %v2022
  %2109 = vmatmul.mubr.bf16.gmra.mrb[0].mxu0 %v2021
  %v2110 = vpop.f32.mrb[0].mxu0
  %v2111 = vadd.f32 %v2070, %v2110
  %v2112 = vpop.f32.mrb[0].mxu0
  %v2113 = vadd.f32 %v2072, %v2112
  %v2114 = vpop.f32.mrb[0].mxu0
  %v2115 = vpop.f32.mrb[0].mxu0
  %2116 = vdwg.mxu0
  %2117 = vmatprep.subr.bf16.mxu0 %v672
  %2118 = vmatpush1.bf16.msra.mxu0 %v671
  %2119 = vmatprep.subr.bf16.mxu0 %v674
  %2120 = vmatpush1.bf16.msra.mxu0 %v673
  %2121 = vmatprep.subr.bf16.mxu0 %v676
  %2122 = vmatpush1.bf16.msra.mxu0 %v675
  %2123 = vmatprep.subr.bf16.mxu0 %v678
  %2124 = vmatpush1.bf16.msra.mxu0 %v677
  %2125 = vmatprep.subr.bf16.mxu0 %v680
  %2126 = vmatpush1.bf16.msra.mxu0 %v679
  %2127 = vmatprep.subr.bf16.mxu0 %v682
  %2128 = vmatpush1.bf16.msra.mxu0 %v681
  %2129 = vmatprep.subr.bf16.mxu0 %v684
  %2130 = vmatpush1.bf16.msra.mxu0 %v683
  %2131 = vmatprep.subr.bf16.mxu0 %v686
  %2132 = vmatpush1.bf16.msra.mxu0 %v685
  %2133 = vmatprep.subr.bf16.mxu0 %v688
  %2134 = vmatpush1.bf16.msra.mxu0 %v687
  %2135 = vmatprep.subr.bf16.mxu0 %v690
  %2136 = vmatpush1.bf16.msra.mxu0 %v689
  %2137 = vmatprep.subr.bf16.mxu0 %v692
  %2138 = vmatpush1.bf16.msra.mxu0 %v691
  %2139 = vmatprep.subr.bf16.mxu0 %v694
  %2140 = vmatpush1.bf16.msra.mxu0 %v693
  %2141 = vmatprep.subr.bf16.mxu0 %v696
  %2142 = vmatpush1.bf16.msra.mxu0 %v695
  %2143 = vmatprep.subr.bf16.mxu0 %v698
  %2144 = vmatpush1.bf16.msra.mxu0 %v697
  %2145 = vmatprep.subr.bf16.mxu0 %v700
  %2146 = vmatpush1.bf16.msra.mxu0 %v699
  %2147 = vmatprep.subr.bf16.mxu0 %v702
  %2148 = vmatpush1.bf16.msra.mxu0 %v701
  %2149 = vmatprep.mubr.bf16.mxu0 %v2024
  %2150 = vmatmul.mubr.bf16.gmra.mrb[0].mxu0 %v2023
  %v2151 = vpop.f32.mrb[0].mxu0
  %v2152 = vadd.f32 %v2111, %v2151
  %v2153 = vpop.f32.mrb[0].mxu0
  %v2154 = vadd.f32 %v2113, %v2153
  %v2155 = vpop.f32.mrb[0].mxu0
  %v2156 = vpop.f32.mrb[0].mxu0
  %2157 = vdwg.mxu0
  %2158 = vmatprep.subr.bf16.mxu0 %v704
  %2159 = vmatpush1.bf16.msra.mxu0 %v703
  %2160 = vmatprep.subr.bf16.mxu0 %v706
  %2161 = vmatpush1.bf16.msra.mxu0 %v705
  %2162 = vmatprep.subr.bf16.mxu0 %v708
  %2163 = vmatpush1.bf16.msra.mxu0 %v707
  %2164 = vmatprep.subr.bf16.mxu0 %v710
  %2165 = vmatpush1.bf16.msra.mxu0 %v709
  %2166 = vmatprep.subr.bf16.mxu0 %v712
  %2167 = vmatpush1.bf16.msra.mxu0 %v711
  %2168 = vmatprep.subr.bf16.mxu0 %v714
  %2169 = vmatpush1.bf16.msra.mxu0 %v713
  %2170 = vmatprep.subr.bf16.mxu0 %v716
  %2171 = vmatpush1.bf16.msra.mxu0 %v715
  %2172 = vmatprep.subr.bf16.mxu0 %v718
  %2173 = vmatpush1.bf16.msra.mxu0 %v717
  %2174 = vmatprep.subr.bf16.mxu0 %v720
  %2175 = vmatpush1.bf16.msra.mxu0 %v719
  %2176 = vmatprep.subr.bf16.mxu0 %v722
  %2177 = vmatpush1.bf16.msra.mxu0 %v721
  %2178 = vmatprep.subr.bf16.mxu0 %v724
  %2179 = vmatpush1.bf16.msra.mxu0 %v723
  %2180 = vmatprep.subr.bf16.mxu0 %v726
  %2181 = vmatpush1.bf16.msra.mxu0 %v725
  %2182 = vmatprep.subr.bf16.mxu0 %v728
  %2183 = vmatpush1.bf16.msra.mxu0 %v727
  %2184 = vmatprep.subr.bf16.mxu0 %v730
  %2185 = vmatpush1.bf16.msra.mxu0 %v729
  %2186 = vmatprep.subr.bf16.mxu0 %v732
  %2187 = vmatpush1.bf16.msra.mxu0 %v731
  %2188 = vmatprep.subr.bf16.mxu0 %v734
  %2189 = vmatpush1.bf16.msra.mxu0 %v733
  %2190 = vmatprep.mubr.bf16.mxu0 %v2026
  %2191 = vmatmul.mubr.bf16.gmra.mrb[0].mxu0 %v2025
  %v2192 = vpop.f32.mrb[0].mxu0
  %v2193 = vadd.f32 %v2152, %v2192
  %v2194 = vpop.f32.mrb[0].mxu0
  %v2195 = vadd.f32 %v2154, %v2194
  %v2196 = vpop.f32.mrb[0].mxu0
  %v2197 = vpop.f32.mrb[0].mxu0
  %2198 = vdwg.mxu0
  %v2199 = vmax.f32 %v2193, 0.0
  %v2200 = vmax.f32 %v2195, 0.0
  %v2201 = vpack.c.bf16 %v2199, %v2199
  %v2202 = vpack.c.bf16 %v2200, %v2200
  %s2203 = scalar_lea.vmem %s4, 576
  %v2204 = vld [vmem:[%s2203] sm:$0xff]
  %v2205 = vld [vmem:[%s2203 + $0x8] sm:$0xff]
  %v2206 = vld [vmem:[%s2203 + $0x10] sm:$0xff]
  %v2207 = vld [vmem:[%s2203 + $0x18] sm:$0xff]
  %v2208 = vld [vmem:[%s2203 + $0x20] sm:$0xff]
  %v2209 = vld [vmem:[%s2203 + $0x28] sm:$0xff]
  %v2210 = vld [vmem:[%s2203 + $0x30] sm:$0xff]
  %v2211 = vld [vmem:[%s2203 + $0x38] sm:$0xff]
  %v2212 = vld [vmem:[%s2203 + $0x40] sm:$0xff]
  %v2213 = vld [vmem:[%s2203 + $0x48] sm:$0xff]
  %v2214 = vld [vmem:[%s2203 + $0x50] sm:$0xff]
  %v2215 = vld [vmem:[%s2203 + $0x58] sm:$0xff]
  %v2216 = vld [vmem:[%s2203 + $0x60] sm:$0xff]
  %v2217 = vld [vmem:[%s2203 + $0x68] sm:$0xff]
  %v2218 = vld [vmem:[%s2203 + $0x70] sm:$0xff]
  %v2219 = vld [vmem:[%s2203 + $0x78] sm:$0xff]
  %v2220 = vld [vmem:[%s2203 + $0x80] sm:$0xff]
  %v2221 = vld [vmem:[%s2203 + $0x88] sm:$0xff]
  %v2222 = vld [vmem:[%s2203 + $0x90] sm:$0xff]
  %v2223 = vld [vmem:[%s2203 + $0x98] sm:$0xff]
  %v2224 = vld [vmem:[%s2203 + $0xa0] sm:$0xff]
  %v2225 = vld [vmem:[%s2203 + $0xa8] sm:$0xff]
  %v2226 = vld [vmem:[%s2203 + $0xb0] sm:$0xff]
  %v2227 = vld [vmem:[%s2203 + $0xb8] sm:$0xff]
  %v2252 = vunpack.c.l.b16 %v2204
  %v2253 = vunpack.c.h.b16 %v2204
  %v2254 = vunpack.c.l.b16 %v2205
  %v2255 = vunpack.c.h.b16 %v2205
  %v2256 = vunpack.c.l.b16 %v2206
  %v2257 = vunpack.c.h.b16 %v2206
  %v2258 = vunpack.c.l.b16 %v2207
  %v2259 = vunpack.c.h.b16 %v2207
  %v2260 = vunpack.c.l.b16 %v2208
  %v2261 = vunpack.c.h.b16 %v2208
  %v2262 = vunpack.c.l.b16 %v2209
  %v2263 = vunpack.c.h.b16 %v2209
  %v2264 = vunpack.c.l.b16 %v2210
  %v2265 = vunpack.c.h.b16 %v2210
  %v2266 = vunpack.c.l.b16 %v2211
  %v2267 = vunpack.c.h.b16 %v2211
  %v2268 = vunpack.c.l.b16 %v2212
  %v2269 = vunpack.c.h.b16 %v2212
  %v2270 = vunpack.c.l.b16 %v2213
  %v2271 = vunpack.c.h.b16 %v2213
  %v2272 = vunpack.c.l.b16 %v2214
  %v2273 = vunpack.c.h.b16 %v2214
  %v2274 = vunpack.c.l.b16 %v2215
  %v2275 = vunpack.c.h.b16 %v2215
  %v2276 = vunpack.c.l.b16 %v2216
  %v2277 = vunpack.c.h.b16 %v2216
  %v2278 = vunpack.c.l.b16 %v2217
  %v2279 = vunpack.c.h.b16 %v2217
  %v2280 = vunpack.c.l.b16 %v2218
  %v2281 = vunpack.c.h.b16 %v2218
  %v2282 = vunpack.c.l.b16 %v2219
  %v2283 = vunpack.c.h.b16 %v2219
  %v2284 = vunpack.c.l.b16 %v2220
  %v2285 = vunpack.c.h.b16 %v2220
  %v2286 = vunpack.c.l.b16 %v2221
  %v2287 = vunpack.c.h.b16 %v2221
  %v2288 = vunpack.c.l.b16 %v2222
  %v2289 = vunpack.c.h.b16 %v2222
  %v2290 = vunpack.c.l.b16 %v2223
  %v2291 = vunpack.c.h.b16 %v2223
  %v2292 = vunpack.c.l.b16 %v2224
  %v2293 = vunpack.c.h.b16 %v2224
  %v2294 = vunpack.c.l.b16 %v2225
  %v2295 = vunpack.c.h.b16 %v2225
  %v2296 = vunpack.c.l.b16 %v2226
  %v2297 = vunpack.c.h.b16 %v2226
  %v2298 = vunpack.c.l.b16 %v2227
  %v2299 = vunpack.c.h.b16 %v2227
  %v2300 = vpack.c.b16 %v2254, %v2252
  %v2301 = vpack.c.b16 %v2255, %v2253
  %v2302 = vpack.c.b16 %v2258, %v2256
  %v2303 = vpack.c.b16 %v2259, %v2257
  %v2304 = vpack.c.b16 %v2262, %v2260
  %v2305 = vpack.c.b16 %v2263, %v2261
  %v2306 = vpack.c.b16 %v2266, %v2264
  %v2307 = vpack.c.b16 %v2267, %v2265
  %v2308 = vpack.c.b16 %v2270, %v2268
  %v2309 = vpack.c.b16 %v2271, %v2269
  %v2310 = vpack.c.b16 %v2274, %v2272
  %v2311 = vpack.c.b16 %v2275, %v2273
  %v2312 = vpack.c.b16 %v2278, %v2276
  %v2313 = vpack.c.b16 %v2279, %v2277
  %v2314 = vpack.c.b16 %v2282, %v2280
  %v2315 = vpack.c.b16 %v2283, %v2281
  %v2316 = vpack.c.b16 %v2286, %v2284
  %v2317 = vpack.c.b16 %v2287, %v2285
  %v2318 = vpack.c.b16 %v2290, %v2288
  %v2319 = vpack.c.b16 %v2291, %v2289
  %v2320 = vpack.c.b16 %v2294, %v2292
  %v2321 = vpack.c.b16 %v2295, %v2293
  %v2322 = vpack.c.b16 %v2298, %v2296
  %v2323 = vpack.c.b16 %v2299, %v2297
  %v2349 = vsel %vm1401, %v2202, 0
  %2351 = vmatprep.subr.bf16.mxu0 %v2301
  %2352 = vmatpush1.bf16.msra.mxu0 %v2300
  %2353 = vmatprep.subr.bf16.mxu0 %v2303
  %2354 = vmatpush1.bf16.msra.mxu0 %v2302
  %2355 = vmatprep.subr.bf16.mxu0 %v2305
  %2356 = vmatpush1.bf16.msra.mxu0 %v2304
  %2357 = vmatprep.subr.bf16.mxu0 %v2307
  %2358 = vmatpush1.bf16.msra.mxu0 %v2306
  %2359 = vmatprep.subr.bf16.mxu0 %v2309
  %2360 = vmatpush1.bf16.msra.mxu0 %v2308
  %2361 = vmatprep.subr.bf16.mxu0 %v2311
  %2362 = vmatpush1.bf16.msra.mxu0 %v2310
  %2363 = vmatprep.subr.bf16.mxu0 %v2313
  %2364 = vmatpush1.bf16.msra.mxu0 %v2312
  %2365 = vmatprep.subr.bf16.mxu0 %v2315
  %2366 = vmatpush1.bf16.msra.mxu0 %v2314
  %2367 = vmatprep.subr.bf16.mxu0 %v2317
  %2368 = vmatpush1.bf16.msra.mxu0 %v2316
  %2369 = vmatprep.subr.bf16.mxu0 %v2319
  %2370 = vmatpush1.bf16.msra.mxu0 %v2318
  %2371 = vmatprep.subr.bf16.mxu0 %v2321
  %2372 = vmatpush1.bf16.msra.mxu0 %v2320
  %2373 = vmatprep.subr.bf16.mxu0 %v2323
  %2374 = vmatpush1.bf16.msra.mxu0 %v2322
  %2375 = vmatprep.subr.bf16.mxu0 0
  %2376 = vmatpush1.bf16.msra.mxu0 0
  %2377 = vmatprep.subr.bf16.mxu0 0
  %2378 = vmatpush1.bf16.msra.mxu0 0
  %2379 = vmatprep.subr.bf16.mxu0 0
  %2380 = vmatpush1.bf16.msra.mxu0 0
  %2381 = vmatprep.subr.bf16.mxu0 0
  %2382 = vmatpush1.bf16.msra.mxu0 0
  %2383 = vmatprep.mubr.bf16.mxu0 %v2349
  %2384 = vmatmul.mubr.bf16.gmra.mrb[0].mxu0 %v2201
  %v2385 = vpop.f32.mrb[0].mxu0
  %v2386 = vadd.f32 0.0, %v2385
  %v2387 = vpop.f32.mrb[0].mxu0
  %v2388 = vadd.f32 0.0, %v2387
  %v2389 = vpop.f32.mrb[0].mxu0
  %v2390 = vpop.f32.mrb[0].mxu0
  %2391 = vdwg.mxu0
  %v2392 = vadd.f32 %v2000, %v2386
  %v2393 = vadd.f32 %v2001, %v2388
  %s2394 = scalar_lea.vmem %s0, 128
  %v2395 = vld [vmem:[%s2394] sm:$0xff]
  %v2396 = vld [vmem:[%s2394 + $0x8] sm:$0xff]
  %v2397 = vld [vmem:[%s2394 + $0x10] sm:$0xff]
  %v2398 = vld [vmem:[%s2394 + $0x18] sm:$0xff]
  %v2403 = vunpack.c.l.b16 %v2395
  %v2404 = vunpack.c.h.b16 %v2395
  %v2405 = vunpack.c.l.b16 %v2396
  %v2406 = vunpack.c.h.b16 %v2396
  %v2407 = vunpack.c.l.b16 %v2397
  %v2408 = vunpack.c.h.b16 %v2397
  %v2409 = vunpack.c.l.b16 %v2398
  %v2410 = vunpack.c.h.b16 %v2398
  %v2411 = vpack.c.b16 %v2403, %v2403
  %v2412 = vpack.c.b16 %v2404, %v2404
  %v2413 = vpack.c.b16 %v2405, %v2405
  %v2414 = vpack.c.b16 %v2406, %v2406
  %v2415 = vpack.c.b16 %v2407, %v2407
  %v2416 = vpack.c.b16 %v2408, %v2408
  %v2417 = vpack.c.b16 %v2409, %v2409
  %v2418 = vpack.c.b16 %v2410, %v2410
  %2427 = vmatprep.subr.bf16.mxu0 %v608
  %2428 = vmatpush1.bf16.msra.mxu0 %v607
  %2429 = vmatprep.subr.bf16.mxu0 %v610
  %2430 = vmatpush1.bf16.msra.mxu0 %v609
  %2431 = vmatprep.subr.bf16.mxu0 %v612
  %2432 = vmatpush1.bf16.msra.mxu0 %v611
  %2433 = vmatprep.subr.bf16.mxu0 %v614
  %2434 = vmatpush1.bf16.msra.mxu0 %v613
  %2435 = vmatprep.subr.bf16.mxu0 %v616
  %2436 = vmatpush1.bf16.msra.mxu0 %v615
  %2437 = vmatprep.subr.bf16.mxu0 %v618
  %2438 = vmatpush1.bf16.msra.mxu0 %v617
  %2439 = vmatprep.subr.bf16.mxu0 %v620
  %2440 = vmatpush1.bf16.msra.mxu0 %v619
  %2441 = vmatprep.subr.bf16.mxu0 %v622
  %2442 = vmatpush1.bf16.msra.mxu0 %v621
  %2443 = vmatprep.subr.bf16.mxu0 %v624
  %2444 = vmatpush1.bf16.msra.mxu0 %v623
  %2445 = vmatprep.subr.bf16.mxu0 %v626
  %2446 = vmatpush1.bf16.msra.mxu0 %v625
  %2447 = vmatprep.subr.bf16.mxu0 %v628
  %2448 = vmatpush1.bf16.msra.mxu0 %v627
  %2449 = vmatprep.subr.bf16.mxu0 %v630
  %2450 = vmatpush1.bf16.msra.mxu0 %v629
  %2451 = vmatprep.subr.bf16.mxu0 %v632
  %2452 = vmatpush1.bf16.msra.mxu0 %v631
  %2453 = vmatprep.subr.bf16.mxu0 %v634
  %2454 = vmatpush1.bf16.msra.mxu0 %v633
  %2455 = vmatprep.subr.bf16.mxu0 %v636
  %2456 = vmatpush1.bf16.msra.mxu0 %v635
  %2457 = vmatprep.subr.bf16.mxu0 %v638
  %2458 = vmatpush1.bf16.msra.mxu0 %v637
  %2459 = vmatprep.mubr.bf16.mxu0 %v2412
  %2460 = vmatmul.mubr.bf16.gmra.mrb[0].mxu0 %v2411
  %v2461 = vpop.f32.mrb[0].mxu0
  %v2462 = vadd.f32 %v188, %v2461
  %v2463 = vpop.f32.mrb[0].mxu0
  %v2464 = vadd.f32 %v192, %v2463
  %v2465 = vpop.f32.mrb[0].mxu0
  %v2466 = vpop.f32.mrb[0].mxu0
  %2467 = vdwg.mxu0
  %2468 = vmatprep.subr.bf16.mxu0 %v640
  %2469 = vmatpush1.bf16.msra.mxu0 %v639
  %2470 = vmatprep.subr.bf16.mxu0 %v642
  %2471 = vmatpush1.bf16.msra.mxu0 %v641
  %2472 = vmatprep.subr.bf16.mxu0 %v644
  %2473 = vmatpush1.bf16.msra.mxu0 %v643
  %2474 = vmatprep.subr.bf16.mxu0 %v646
  %2475 = vmatpush1.bf16.msra.mxu0 %v645
  %2476 = vmatprep.subr.bf16.mxu0 %v648
  %2477 = vmatpush1.bf16.msra.mxu0 %v647
  %2478 = vmatprep.subr.bf16.mxu0 %v650
  %2479 = vmatpush1.bf16.msra.mxu0 %v649
  %2480 = vmatprep.subr.bf16.mxu0 %v652
  %2481 = vmatpush1.bf16.msra.mxu0 %v651
  %2482 = vmatprep.subr.bf16.mxu0 %v654
  %2483 = vmatpush1.bf16.msra.mxu0 %v653
  %2484 = vmatprep.subr.bf16.mxu0 %v656
  %2485 = vmatpush1.bf16.msra.mxu0 %v655
  %2486 = vmatprep.subr.bf16.mxu0 %v658
  %2487 = vmatpush1.bf16.msra.mxu0 %v657
  %2488 = vmatprep.subr.bf16.mxu0 %v660
  %2489 = vmatpush1.bf16.msra.mxu0 %v659
  %2490 = vmatprep.subr.bf16.mxu0 %v662
  %2491 = vmatpush1.bf16.msra.mxu0 %v661
  %2492 = vmatprep.subr.bf16.mxu0 %v664
  %2493 = vmatpush1.bf16.msra.mxu0 %v663
  %2494 = vmatprep.subr.bf16.mxu0 %v666
  %2495 = vmatpush1.bf16.msra.mxu0 %v665
  %2496 = vmatprep.subr.bf16.mxu0 %v668
  %2497 = vmatpush1.bf16.msra.mxu0 %v667
  %2498 = vmatprep.subr.bf16.mxu0 %v670
  %2499 = vmatpush1.bf16.msra.mxu0 %v669
  %2500 = vmatprep.mubr.bf16.mxu0 %v2414
  %2501 = vmatmul.mubr.bf16.gmra.mrb[0].mxu0 %v2413
  %v2502 = vpop.f32.mrb[0].mxu0
  %v2503 = vadd.f32 %v2462, %v2502
  %v2504 = vpop.f32.mrb[0].mxu0
  %v2505 = vadd.f32 %v2464, %v2504
  %v2506 = vpop.f32.mrb[0].mxu0
  %v2507 = vpop.f32.mrb[0].mxu0
  %2508 = vdwg.mxu0
  %2509 = vmatprep.subr.bf16.mxu0 %v672
  %2510 = vmatpush1.bf16.msra.mxu0 %v671
  %2511 = vmatprep.subr.bf16.mxu0 %v674
  %2512 = vmatpush1.bf16.msra.mxu0 %v673
  %2513 = vmatprep.subr.bf16.mxu0 %v676
  %2514 = vmatpush1.bf16.msra.mxu0 %v675
  %2515 = vmatprep.subr.bf16.mxu0 %v678
  %2516 = vmatpush1.bf16.msra.mxu0 %v677
  %2517 = vmatprep.subr.bf16.mxu0 %v680
  %2518 = vmatpush1.bf16.msra.mxu0 %v679
  %2519 = vmatprep.subr.bf16.mxu0 %v682
  %2520 = vmatpush1.bf16.msra.mxu0 %v681
  %2521 = vmatprep.subr.bf16.mxu0 %v684
  %2522 = vmatpush1.bf16.msra.mxu0 %v683
  %2523 = vmatprep.subr.bf16.mxu0 %v686
  %2524 = vmatpush1.bf16.msra.mxu0 %v685
  %2525 = vmatprep.subr.bf16.mxu0 %v688
  %2526 = vmatpush1.bf16.msra.mxu0 %v687
  %2527 = vmatprep.subr.bf16.mxu0 %v690
  %2528 = vmatpush1.bf16.msra.mxu0 %v689
  %2529 = vmatprep.subr.bf16.mxu0 %v692
  %2530 = vmatpush1.bf16.msra.mxu0 %v691
  %2531 = vmatprep.subr.bf16.mxu0 %v694
  %2532 = vmatpush1.bf16.msra.mxu0 %v693
  %2533 = vmatprep.subr.bf16.mxu0 %v696
  %2534 = vmatpush1.bf16.msra.mxu0 %v695
  %2535 = vmatprep.subr.bf16.mxu0 %v698
  %2536 = vmatpush1.bf16.msra.mxu0 %v697
  %2537 = vmatprep.subr.bf16.mxu0 %v700
  %2538 = vmatpush1.bf16.msra.mxu0 %v699
  %2539 = vmatprep.subr.bf16.mxu0 %v702
  %2540 = vmatpush1.bf16.msra.mxu0 %v701
  %2541 = vmatprep.mubr.bf16.mxu0 %v2416
  %2542 = vmatmul.mubr.bf16.gmra.mrb[0].mxu0 %v2415
  %v2543 = vpop.f32.mrb[0].mxu0
  %v2544 = vadd.f32 %v2503, %v2543
  %v2545 = vpop.f32.mrb[0].mxu0
  %v2546 = vadd.f32 %v2505, %v2545
  %v2547 = vpop.f32.mrb[0].mxu0
  %v2548 = vpop.f32.mrb[0].mxu0
  %2549 = vdwg.mxu0
  %2550 = vmatprep.subr.bf16.mxu0 %v704
  %2551 = vmatpush1.bf16.msra.mxu0 %v703
  %2552 = vmatprep.subr.bf16.mxu0 %v706
  %2553 = vmatpush1.bf16.msra.mxu0 %v705
  %2554 = vmatprep.subr.bf16.mxu0 %v708
  %2555 = vmatpush1.bf16.msra.mxu0 %v707
  %2556 = vmatprep.subr.bf16.mxu0 %v710
  %2557 = vmatpush1.bf16.msra.mxu0 %v709
  %2558 = vmatprep.subr.bf16.mxu0 %v712
  %2559 = vmatpush1.bf16.msra.mxu0 %v711
  %2560 = vmatprep.subr.bf16.mxu0 %v714
  %2561 = vmatpush1.bf16.msra.mxu0 %v713
  %2562 = vmatprep.subr.bf16.mxu0 %v716
  %2563 = vmatpush1.bf16.msra.mxu0 %v715
  %2564 = vmatprep.subr.bf16.mxu0 %v718
  %2565 = vmatpush1.bf16.msra.mxu0 %v717
  %2566 = vmatprep.subr.bf16.mxu0 %v720
  %2567 = vmatpush1.bf16.msra.mxu0 %v719
  %2568 = vmatprep.subr.bf16.mxu0 %v722
  %2569 = vmatpush1.bf16.msra.mxu0 %v721
  %2570 = vmatprep.subr.bf16.mxu0 %v724
  %2571 = vmatpush1.bf16.msra.mxu0 %v723
  %2572 = vmatprep.subr.bf16.mxu0 %v726
  %2573 = vmatpush1.bf16.msra.mxu0 %v725
  %2574 = vmatprep.subr.bf16.mxu0 %v728
  %2575 = vmatpush1.bf16.msra.mxu0 %v727
  %2576 = vmatprep.subr.bf16.mxu0 %v730
  %2577 = vmatpush1.bf16.msra.mxu0 %v729
  %2578 = vmatprep.subr.bf16.mxu0 %v732
  %2579 = vmatpush1.bf16.msra.mxu0 %v731
  %2580 = vmatprep.subr.bf16.mxu0 %v734
  %2581 = vmatpush1.bf16.msra.mxu0 %v733
  %2582 = vmatprep.mubr.bf16.mxu0 %v2418
  %2583 = vmatmul.mubr.bf16.gmra.mrb[0].mxu0 %v2417
  %v2584 = vpop.f32.mrb[0].mxu0
  %v2585 = vadd.f32 %v2544, %v2584
  %v2586 = vpop.f32.mrb[0].mxu0
  %v2587 = vadd.f32 %v2546, %v2586
  %v2588 = vpop.f32.mrb[0].mxu0
  %v2589 = vpop.f32.mrb[0].mxu0
  %2590 = vdwg.mxu0
  %v2591 = vmax.f32 %v2585, 0.0
  %v2592 = vmax.f32 %v2587, 0.0
  %v2593 = vpack.c.bf16 %v2591, %v2591
  %v2594 = vpack.c.bf16 %v2592, %v2592
  %s2595 = scalar_lea.vmem %s4, 768
  %v2596 = vld [vmem:[%s2595] sm:$0xff]
  %v2597 = vld [vmem:[%s2595 + $0x8] sm:$0xff]
  %v2598 = vld [vmem:[%s2595 + $0x10] sm:$0xff]
  %v2599 = vld [vmem:[%s2595 + $0x18] sm:$0xff]
  %v2600 = vld [vmem:[%s2595 + $0x20] sm:$0xff]
  %v2601 = vld [vmem:[%s2595 + $0x28] sm:$0xff]
  %v2602 = vld [vmem:[%s2595 + $0x30] sm:$0xff]
  %v2603 = vld [vmem:[%s2595 + $0x38] sm:$0xff]
  %v2604 = vld [vmem:[%s2595 + $0x40] sm:$0xff]
  %v2605 = vld [vmem:[%s2595 + $0x48] sm:$0xff]
  %v2606 = vld [vmem:[%s2595 + $0x50] sm:$0xff]
  %v2607 = vld [vmem:[%s2595 + $0x58] sm:$0xff]
  %v2608 = vld [vmem:[%s2595 + $0x60] sm:$0xff]
  %v2609 = vld [vmem:[%s2595 + $0x68] sm:$0xff]
  %v2610 = vld [vmem:[%s2595 + $0x70] sm:$0xff]
  %v2611 = vld [vmem:[%s2595 + $0x78] sm:$0xff]
  %v2612 = vld [vmem:[%s2595 + $0x80] sm:$0xff]
  %v2613 = vld [vmem:[%s2595 + $0x88] sm:$0xff]
  %v2614 = vld [vmem:[%s2595 + $0x90] sm:$0xff]
  %v2615 = vld [vmem:[%s2595 + $0x98] sm:$0xff]
  %v2616 = vld [vmem:[%s2595 + $0xa0] sm:$0xff]
  %v2617 = vld [vmem:[%s2595 + $0xa8] sm:$0xff]
  %v2618 = vld [vmem:[%s2595 + $0xb0] sm:$0xff]
  %v2619 = vld [vmem:[%s2595 + $0xb8] sm:$0xff]
  %v2644 = vunpack.c.l.b16 %v2596
  %v2645 = vunpack.c.h.b16 %v2596
  %v2646 = vunpack.c.l.b16 %v2597
  %v2647 = vunpack.c.h.b16 %v2597
  %v2648 = vunpack.c.l.b16 %v2598
  %v2649 = vunpack.c.h.b16 %v2598
  %v2650 = vunpack.c.l.b16 %v2599
  %v2651 = vunpack.c.h.b16 %v2599
  %v2652 = vunpack.c.l.b16 %v2600
  %v2653 = vunpack.c.h.b16 %v2600
  %v2654 = vunpack.c.l.b16 %v2601
  %v2655 = vunpack.c.h.b16 %v2601
  %v2656 = vunpack.c.l.b16 %v2602
  %v2657 = vunpack.c.h.b16 %v2602
  %v2658 = vunpack.c.l.b16 %v2603
  %v2659 = vunpack.c.h.b16 %v2603
  %v2660 = vunpack.c.l.b16 %v2604
  %v2661 = vunpack.c.h.b16 %v2604
  %v2662 = vunpack.c.l.b16 %v2605
  %v2663 = vunpack.c.h.b16 %v2605
  %v2664 = vunpack.c.l.b16 %v2606
  %v2665 = vunpack.c.h.b16 %v2606
  %v2666 = vunpack.c.l.b16 %v2607
  %v2667 = vunpack.c.h.b16 %v2607
  %v2668 = vunpack.c.l.b16 %v2608
  %v2669 = vunpack.c.h.b16 %v2608
  %v2670 = vunpack.c.l.b16 %v2609
  %v2671 = vunpack.c.h.b16 %v2609
  %v2672 = vunpack.c.l.b16 %v2610
  %v2673 = vunpack.c.h.b16 %v2610
  %v2674 = vunpack.c.l.b16 %v2611
  %v2675 = vunpack.c.h.b16 %v2611
  %v2676 = vunpack.c.l.b16 %v2612
  %v2677 = vunpack.c.h.b16 %v2612
  %v2678 = vunpack.c.l.b16 %v2613
  %v2679 = vunpack.c.h.b16 %v2613
  %v2680 = vunpack.c.l.b16 %v2614
  %v2681 = vunpack.c.h.b16 %v2614
  %v2682 = vunpack.c.l.b16 %v2615
  %v2683 = vunpack.c.h.b16 %v2615
  %v2684 = vunpack.c.l.b16 %v2616
  %v2685 = vunpack.c.h.b16 %v2616
  %v2686 = vunpack.c.l.b16 %v2617
  %v2687 = vunpack.c.h.b16 %v2617
  %v2688 = vunpack.c.l.b16 %v2618
  %v2689 = vunpack.c.h.b16 %v2618
  %v2690 = vunpack.c.l.b16 %v2619
  %v2691 = vunpack.c.h.b16 %v2619
  %v2692 = vpack.c.b16 %v2646, %v2644
  %v2693 = vpack.c.b16 %v2647, %v2645
  %v2694 = vpack.c.b16 %v2650, %v2648
  %v2695 = vpack.c.b16 %v2651, %v2649
  %v2696 = vpack.c.b16 %v2654, %v2652
  %v2697 = vpack.c.b16 %v2655, %v2653
  %v2698 = vpack.c.b16 %v2658, %v2656
  %v2699 = vpack.c.b16 %v2659, %v2657
  %v2700 = vpack.c.b16 %v2662, %v2660
  %v2701 = vpack.c.b16 %v2663, %v2661
  %v2702 = vpack.c.b16 %v2666, %v2664
  %v2703 = vpack.c.b16 %v2667, %v2665
  %v2704 = vpack.c.b16 %v2670, %v2668
  %v2705 = vpack.c.b16 %v2671, %v2669
  %v2706 = vpack.c.b16 %v2674, %v2672
  %v2707 = vpack.c.b16 %v2675, %v2673
  %v2708 = vpack.c.b16 %v2678, %v2676
  %v2709 = vpack.c.b16 %v2679, %v2677
  %v2710 = vpack.c.b16 %v2682, %v2680
  %v2711 = vpack.c.b16 %v2683, %v2681
  %v2712 = vpack.c.b16 %v2686, %v2684
  %v2713 = vpack.c.b16 %v2687, %v2685
  %v2714 = vpack.c.b16 %v2690, %v2688
  %v2715 = vpack.c.b16 %v2691, %v2689
  %v2741 = vsel %vm1401, %v2594, 0
  %2743 = vmatprep.subr.bf16.mxu0 %v2693
  %2744 = vmatpush1.bf16.msra.mxu0 %v2692
  %2745 = vmatprep.subr.bf16.mxu0 %v2695
  %2746 = vmatpush1.bf16.msra.mxu0 %v2694
  %2747 = vmatprep.subr.bf16.mxu0 %v2697
  %2748 = vmatpush1.bf16.msra.mxu0 %v2696
  %2749 = vmatprep.subr.bf16.mxu0 %v2699
  %2750 = vmatpush1.bf16.msra.mxu0 %v2698
  %2751 = vmatprep.subr.bf16.mxu0 %v2701
  %2752 = vmatpush1.bf16.msra.mxu0 %v2700
  %2753 = vmatprep.subr.bf16.mxu0 %v2703
  %2754 = vmatpush1.bf16.msra.mxu0 %v2702
  %2755 = vmatprep.subr.bf16.mxu0 %v2705
  %2756 = vmatpush1.bf16.msra.mxu0 %v2704
  %2757 = vmatprep.subr.bf16.mxu0 %v2707
  %2758 = vmatpush1.bf16.msra.mxu0 %v2706
  %2759 = vmatprep.subr.bf16.mxu0 %v2709
  %2760 = vmatpush1.bf16.msra.mxu0 %v2708
  %2761 = vmatprep.subr.bf16.mxu0 %v2711
  %2762 = vmatpush1.bf16.msra.mxu0 %v2710
  %2763 = vmatprep.subr.bf16.mxu0 %v2713
  %2764 = vmatpush1.bf16.msra.mxu0 %v2712
  %2765 = vmatprep.subr.bf16.mxu0 %v2715
  %2766 = vmatpush1.bf16.msra.mxu0 %v2714
  %2767 = vmatprep.subr.bf16.mxu0 0
  %2768 = vmatpush1.bf16.msra.mxu0 0
  %2769 = vmatprep.subr.bf16.mxu0 0
  %2770 = vmatpush1.bf16.msra.mxu0 0
  %2771 = vmatprep.subr.bf16.mxu0 0
  %2772 = vmatpush1.bf16.msra.mxu0 0
  %2773 = vmatprep.subr.bf16.mxu0 0
  %2774 = vmatpush1.bf16.msra.mxu0 0
  %2775 = vmatprep.mubr.bf16.mxu0 %v2741
  %2776 = vmatmul.mubr.bf16.gmra.mrb[0].mxu0 %v2593
  %v2777 = vpop.f32.mrb[0].mxu0
  %v2778 = vadd.f32 0.0, %v2777
  %v2779 = vpop.f32.mrb[0].mxu0
  %v2780 = vadd.f32 0.0, %v2779
  %v2781 = vpop.f32.mrb[0].mxu0
  %v2782 = vpop.f32.mrb[0].mxu0
  %2783 = vdwg.mxu0
  %v2784 = vadd.f32 %v2392, %v2778
  %v2785 = vadd.f32 %v2393, %v2780
  %s2786 = scalar_lea.vmem %s0, 160
  %v2787 = vld [vmem:[%s2786] sm:$0xff]
  %v2788 = vld [vmem:[%s2786 + $0x8] sm:$0xff]
  %v2789 = vld [vmem:[%s2786 + $0x10] sm:$0xff]
  %v2790 = vld [vmem:[%s2786 + $0x18] sm:$0xff]
  %v2795 = vunpack.c.l.b16 %v2787
  %v2796 = vunpack.c.h.b16 %v2787
  %v2797 = vunpack.c.l.b16 %v2788
  %v2798 = vunpack.c.h.b16 %v2788
  %v2799 = vunpack.c.l.b16 %v2789
  %v2800 = vunpack.c.h.b16 %v2789
  %v2801 = vunpack.c.l.b16 %v2790
  %v2802 = vunpack.c.h.b16 %v2790
  %v2803 = vpack.c.b16 %v2795, %v2795
  %v2804 = vpack.c.b16 %v2796, %v2796
  %v2805 = vpack.c.b16 %v2797, %v2797
  %v2806 = vpack.c.b16 %v2798, %v2798
  %v2807 = vpack.c.b16 %v2799, %v2799
  %v2808 = vpack.c.b16 %v2800, %v2800
  %v2809 = vpack.c.b16 %v2801, %v2801
  %v2810 = vpack.c.b16 %v2802, %v2802
  %2819 = vmatprep.subr.bf16.mxu0 %v608
  %2820 = vmatpush1.bf16.msra.mxu0 %v607
  %2821 = vmatprep.subr.bf16.mxu0 %v610
  %2822 = vmatpush1.bf16.msra.mxu0 %v609
  %2823 = vmatprep.subr.bf16.mxu0 %v612
  %2824 = vmatpush1.bf16.msra.mxu0 %v611
  %2825 = vmatprep.subr.bf16.mxu0 %v614
  %2826 = vmatpush1.bf16.msra.mxu0 %v613
  %2827 = vmatprep.subr.bf16.mxu0 %v616
  %2828 = vmatpush1.bf16.msra.mxu0 %v615
  %2829 = vmatprep.subr.bf16.mxu0 %v618
  %2830 = vmatpush1.bf16.msra.mxu0 %v617
  %2831 = vmatprep.subr.bf16.mxu0 %v620
  %2832 = vmatpush1.bf16.msra.mxu0 %v619
  %2833 = vmatprep.subr.bf16.mxu0 %v622
  %2834 = vmatpush1.bf16.msra.mxu0 %v621
  %2835 = vmatprep.subr.bf16.mxu0 %v624
  %2836 = vmatpush1.bf16.msra.mxu0 %v623
  %2837 = vmatprep.subr.bf16.mxu0 %v626
  %2838 = vmatpush1.bf16.msra.mxu0 %v625
  %2839 = vmatprep.subr.bf16.mxu0 %v628
  %2840 = vmatpush1.bf16.msra.mxu0 %v627
  %2841 = vmatprep.subr.bf16.mxu0 %v630
  %2842 = vmatpush1.bf16.msra.mxu0 %v629
  %2843 = vmatprep.subr.bf16.mxu0 %v632
  %2844 = vmatpush1.bf16.msra.mxu0 %v631
  %2845 = vmatprep.subr.bf16.mxu0 %v634
  %2846 = vmatpush1.bf16.msra.mxu0 %v633
  %2847 = vmatprep.subr.bf16.mxu0 %v636
  %2848 = vmatpush1.bf16.msra.mxu0 %v635
  %2849 = vmatprep.subr.bf16.mxu0 %v638
  %2850 = vmatpush1.bf16.msra.mxu0 %v637
  %2851 = vmatprep.mubr.bf16.mxu0 %v2804
  %2852 = vmatmul.mubr.bf16.gmra.mrb[0].mxu0 %v2803
  %v2853 = vpop.f32.mrb[0].mxu0
  %v2854 = vadd.f32 %v188, %v2853
  %v2855 = vpop.f32.mrb[0].mxu0
  %v2856 = vadd.f32 %v192, %v2855
  %v2857 = vpop.f32.mrb[0].mxu0
  %v2858 = vpop.f32.mrb[0].mxu0
  %2859 = vdwg.mxu0
  %2860 = vmatprep.subr.bf16.mxu0 %v640
  %2861 = vmatpush1.bf16.msra.mxu0 %v639
  %2862 = vmatprep.subr.bf16.mxu0 %v642
  %2863 = vmatpush1.bf16.msra.mxu0 %v641
  %2864 = vmatprep.subr.bf16.mxu0 %v644
  %2865 = vmatpush1.bf16.msra.mxu0 %v643
  %2866 = vmatprep.subr.bf16.mxu0 %v646
  %2867 = vmatpush1.bf16.msra.mxu0 %v645
  %2868 = vmatprep.subr.bf16.mxu0 %v648
  %2869 = vmatpush1.bf16.msra.mxu0 %v647
  %2870 = vmatprep.subr.bf16.mxu0 %v650
  %2871 = vmatpush1.bf16.msra.mxu0 %v649
  %2872 = vmatprep.subr.bf16.mxu0 %v652
  %2873 = vmatpush1.bf16.msra.mxu0 %v651
  %2874 = vmatprep.subr.bf16.mxu0 %v654
  %2875 = vmatpush1.bf16.msra.mxu0 %v653
  %2876 = vmatprep.subr.bf16.mxu0 %v656
  %2877 = vmatpush1.bf16.msra.mxu0 %v655
  %2878 = vmatprep.subr.bf16.mxu0 %v658
  %2879 = vmatpush1.bf16.msra.mxu0 %v657
  %2880 = vmatprep.subr.bf16.mxu0 %v660
  %2881 = vmatpush1.bf16.msra.mxu0 %v659
  %2882 = vmatprep.subr.bf16.mxu0 %v662
  %2883 = vmatpush1.bf16.msra.mxu0 %v661
  %2884 = vmatprep.subr.bf16.mxu0 %v664
  %2885 = vmatpush1.bf16.msra.mxu0 %v663
  %2886 = vmatprep.subr.bf16.mxu0 %v666
  %2887 = vmatpush1.bf16.msra.mxu0 %v665
  %2888 = vmatprep.subr.bf16.mxu0 %v668
  %2889 = vmatpush1.bf16.msra.mxu0 %v667
  %2890 = vmatprep.subr.bf16.mxu0 %v670
  %2891 = vmatpush1.bf16.msra.mxu0 %v669
  %2892 = vmatprep.mubr.bf16.mxu0 %v2806
  %2893 = vmatmul.mubr.bf16.gmra.mrb[0].mxu0 %v2805
  %v2894 = vpop.f32.mrb[0].mxu0
  %v2895 = vadd.f32 %v2854, %v2894
  %v2896 = vpop.f32.mrb[0].mxu0
  %v2897 = vadd.f32 %v2856, %v2896
  %v2898 = vpop.f32.mrb[0].mxu0
  %v2899 = vpop.f32.mrb[0].mxu0
  %2900 = vdwg.mxu0
  %2901 = vmatprep.subr.bf16.mxu0 %v672
  %2902 = vmatpush1.bf16.msra.mxu0 %v671
  %2903 = vmatprep.subr.bf16.mxu0 %v674
  %2904 = vmatpush1.bf16.msra.mxu0 %v673
  %2905 = vmatprep.subr.bf16.mxu0 %v676
  %2906 = vmatpush1.bf16.msra.mxu0 %v675
  %2907 = vmatprep.subr.bf16.mxu0 %v678
  %2908 = vmatpush1.bf16.msra.mxu0 %v677
  %2909 = vmatprep.subr.bf16.mxu0 %v680
  %2910 = vmatpush1.bf16.msra.mxu0 %v679
  %2911 = vmatprep.subr.bf16.mxu0 %v682
  %2912 = vmatpush1.bf16.msra.mxu0 %v681
  %2913 = vmatprep.subr.bf16.mxu0 %v684
  %2914 = vmatpush1.bf16.msra.mxu0 %v683
  %2915 = vmatprep.subr.bf16.mxu0 %v686
  %2916 = vmatpush1.bf16.msra.mxu0 %v685
  %2917 = vmatprep.subr.bf16.mxu0 %v688
  %2918 = vmatpush1.bf16.msra.mxu0 %v687
  %2919 = vmatprep.subr.bf16.mxu0 %v690
  %2920 = vmatpush1.bf16.msra.mxu0 %v689
  %2921 = vmatprep.subr.bf16.mxu0 %v692
  %2922 = vmatpush1.bf16.msra.mxu0 %v691
  %2923 = vmatprep.subr.bf16.mxu0 %v694
  %2924 = vmatpush1.bf16.msra.mxu0 %v693
  %2925 = vmatprep.subr.bf16.mxu0 %v696
  %2926 = vmatpush1.bf16.msra.mxu0 %v695
  %2927 = vmatprep.subr.bf16.mxu0 %v698
  %2928 = vmatpush1.bf16.msra.mxu0 %v697
  %2929 = vmatprep.subr.bf16.mxu0 %v700
  %2930 = vmatpush1.bf16.msra.mxu0 %v699
  %2931 = vmatprep.subr.bf16.mxu0 %v702
  %2932 = vmatpush1.bf16.msra.mxu0 %v701
  %2933 = vmatprep.mubr.bf16.mxu0 %v2808
  %2934 = vmatmul.mubr.bf16.gmra.mrb[0].mxu0 %v2807
  %v2935 = vpop.f32.mrb[0].mxu0
  %v2936 = vadd.f32 %v2895, %v2935
  %v2937 = vpop.f32.mrb[0].mxu0
  %v2938 = vadd.f32 %v2897, %v2937
  %v2939 = vpop.f32.mrb[0].mxu0
  %v2940 = vpop.f32.mrb[0].mxu0
  %2941 = vdwg.mxu0
  %2942 = vmatprep.subr.bf16.mxu0 %v704
  %2943 = vmatpush1.bf16.msra.mxu0 %v703
  %2944 = vmatprep.subr.bf16.mxu0 %v706
  %2945 = vmatpush1.bf16.msra.mxu0 %v705
  %2946 = vmatprep.subr.bf16.mxu0 %v708
  %2947 = vmatpush1.bf16.msra.mxu0 %v707
  %2948 = vmatprep.subr.bf16.mxu0 %v710
  %2949 = vmatpush1.bf16.msra.mxu0 %v709
  %2950 = vmatprep.subr.bf16.mxu0 %v712
  %2951 = vmatpush1.bf16.msra.mxu0 %v711
  %2952 = vmatprep.subr.bf16.mxu0 %v714
  %2953 = vmatpush1.bf16.msra.mxu0 %v713
  %2954 = vmatprep.subr.bf16.mxu0 %v716
  %2955 = vmatpush1.bf16.msra.mxu0 %v715
  %2956 = vmatprep.subr.bf16.mxu0 %v718
  %2957 = vmatpush1.bf16.msra.mxu0 %v717
  %2958 = vmatprep.subr.bf16.mxu0 %v720
  %2959 = vmatpush1.bf16.msra.mxu0 %v719
  %2960 = vmatprep.subr.bf16.mxu0 %v722
  %2961 = vmatpush1.bf16.msra.mxu0 %v721
  %2962 = vmatprep.subr.bf16.mxu0 %v724
  %2963 = vmatpush1.bf16.msra.mxu0 %v723
  %2964 = vmatprep.subr.bf16.mxu0 %v726
  %2965 = vmatpush1.bf16.msra.mxu0 %v725
  %2966 = vmatprep.subr.bf16.mxu0 %v728
  %2967 = vmatpush1.bf16.msra.mxu0 %v727
  %2968 = vmatprep.subr.bf16.mxu0 %v730
  %2969 = vmatpush1.bf16.msra.mxu0 %v729
  %2970 = vmatprep.subr.bf16.mxu0 %v732
  %2971 = vmatpush1.bf16.msra.mxu0 %v731
  %2972 = vmatprep.subr.bf16.mxu0 %v734
  %2973 = vmatpush1.bf16.msra.mxu0 %v733
  %2974 = vmatprep.mubr.bf16.mxu0 %v2810
  %2975 = vmatmul.mubr.bf16.gmra.mrb[0].mxu0 %v2809
  %v2976 = vpop.f32.mrb[0].mxu0
  %v2977 = vadd.f32 %v2936, %v2976
  %v2978 = vpop.f32.mrb[0].mxu0
  %v2979 = vadd.f32 %v2938, %v2978
  %v2980 = vpop.f32.mrb[0].mxu0
  %v2981 = vpop.f32.mrb[0].mxu0
  %2982 = vdwg.mxu0
  %v2983 = vmax.f32 %v2977, 0.0
  %v2984 = vmax.f32 %v2979, 0.0
  %v2985 = vpack.c.bf16 %v2983, %v2983
  %v2986 = vpack.c.bf16 %v2984, %v2984
  %s2987 = scalar_lea.vmem %s4, 960
  %v2988 = vld [vmem:[%s2987] sm:$0xff]
  %v2989 = vld [vmem:[%s2987 + $0x8] sm:$0xff]
  %v2990 = vld [vmem:[%s2987 + $0x10] sm:$0xff]
  %v2991 = vld [vmem:[%s2987 + $0x18] sm:$0xff]
  %v2992 = vld [vmem:[%s2987 + $0x20] sm:$0xff]
  %v2993 = vld [vmem:[%s2987 + $0x28] sm:$0xff]
  %v2994 = vld [vmem:[%s2987 + $0x30] sm:$0xff]
  %v2995 = vld [vmem:[%s2987 + $0x38] sm:$0xff]
  %v2996 = vld [vmem:[%s2987 + $0x40] sm:$0xff]
  %v2997 = vld [vmem:[%s2987 + $0x48] sm:$0xff]
  %v2998 = vld [vmem:[%s2987 + $0x50] sm:$0xff]
  %v2999 = vld [vmem:[%s2987 + $0x58] sm:$0xff]
  %v3000 = vld [vmem:[%s2987 + $0x60] sm:$0xff]
  %v3001 = vld [vmem:[%s2987 + $0x68] sm:$0xff]
  %v3002 = vld [vmem:[%s2987 + $0x70] sm:$0xff]
  %v3003 = vld [vmem:[%s2987 + $0x78] sm:$0xff]
  %v3004 = vld [vmem:[%s2987 + $0x80] sm:$0xff]
  %v3005 = vld [vmem:[%s2987 + $0x88] sm:$0xff]
  %v3006 = vld [vmem:[%s2987 + $0x90] sm:$0xff]
  %v3007 = vld [vmem:[%s2987 + $0x98] sm:$0xff]
  %v3008 = vld [vmem:[%s2987 + $0xa0] sm:$0xff]
  %v3009 = vld [vmem:[%s2987 + $0xa8] sm:$0xff]
  %v3010 = vld [vmem:[%s2987 + $0xb0] sm:$0xff]
  %v3011 = vld [vmem:[%s2987 + $0xb8] sm:$0xff]
  %v3036 = vunpack.c.l.b16 %v2988
  %v3037 = vunpack.c.h.b16 %v2988
  %v3038 = vunpack.c.l.b16 %v2989
  %v3039 = vunpack.c.h.b16 %v2989
  %v3040 = vunpack.c.l.b16 %v2990
  %v3041 = vunpack.c.h.b16 %v2990
  %v3042 = vunpack.c.l.b16 %v2991
  %v3043 = vunpack.c.h.b16 %v2991
  %v3044 = vunpack.c.l.b16 %v2992
  %v3045 = vunpack.c.h.b16 %v2992
  %v3046 = vunpack.c.l.b16 %v2993
  %v3047 = vunpack.c.h.b16 %v2993
  %v3048 = vunpack.c.l.b16 %v2994
  %v3049 = vunpack.c.h.b16 %v2994
  %v3050 = vunpack.c.l.b16 %v2995
  %v3051 = vunpack.c.h.b16 %v2995
  %v3052 = vunpack.c.l.b16 %v2996
  %v3053 = vunpack.c.h.b16 %v2996
  %v3054 = vunpack.c.l.b16 %v2997
  %v3055 = vunpack.c.h.b16 %v2997
  %v3056 = vunpack.c.l.b16 %v2998
  %v3057 = vunpack.c.h.b16 %v2998
  %v3058 = vunpack.c.l.b16 %v2999
  %v3059 = vunpack.c.h.b16 %v2999
  %v3060 = vunpack.c.l.b16 %v3000
  %v3061 = vunpack.c.h.b16 %v3000
  %v3062 = vunpack.c.l.b16 %v3001
  %v3063 = vunpack.c.h.b16 %v3001
  %v3064 = vunpack.c.l.b16 %v3002
  %v3065 = vunpack.c.h.b16 %v3002
  %v3066 = vunpack.c.l.b16 %v3003
  %v3067 = vunpack.c.h.b16 %v3003
  %v3068 = vunpack.c.l.b16 %v3004
  %v3069 = vunpack.c.h.b16 %v3004
  %v3070 = vunpack.c.l.b16 %v3005
  %v3071 = vunpack.c.h.b16 %v3005
  %v3072 = vunpack.c.l.b16 %v3006
  %v3073 = vunpack.c.h.b16 %v3006
  %v3074 = vunpack.c.l.b16 %v3007
  %v3075 = vunpack.c.h.b16 %v3007
  %v3076 = vunpack.c.l.b16 %v3008
  %v3077 = vunpack.c.h.b16 %v3008
  %v3078 = vunpack.c.l.b16 %v3009
  %v3079 = vunpack.c.h.b16 %v3009
  %v3080 = vunpack.c.l.b16 %v3010
  %v3081 = vunpack.c.h.b16 %v3010
  %v3082 = vunpack.c.l.b16 %v3011
  %v3083 = vunpack.c.h.b16 %v3011
  %v3084 = vpack.c.b16 %v3038, %v3036
  %v3085 = vpack.c.b16 %v3039, %v3037
  %v3086 = vpack.c.b16 %v3042, %v3040
  %v3087 = vpack.c.b16 %v3043, %v3041
  %v3088 = vpack.c.b16 %v3046, %v3044
  %v3089 = vpack.c.b16 %v3047, %v3045
  %v3090 = vpack.c.b16 %v3050, %v3048
  %v3091 = vpack.c.b16 %v3051, %v3049
  %v3092 = vpack.c.b16 %v3054, %v3052
  %v3093 = vpack.c.b16 %v3055, %v3053
  %v3094 = vpack.c.b16 %v3058, %v3056
  %v3095 = vpack.c.b16 %v3059, %v3057
  %v3096 = vpack.c.b16 %v3062, %v3060
  %v3097 = vpack.c.b16 %v3063, %v3061
  %v3098 = vpack.c.b16 %v3066, %v3064
  %v3099 = vpack.c.b16 %v3067, %v3065
  %v3100 = vpack.c.b16 %v3070, %v3068
  %v3101 = vpack.c.b16 %v3071, %v3069
  %v3102 = vpack.c.b16 %v3074, %v3072
  %v3103 = vpack.c.b16 %v3075, %v3073
  %v3104 = vpack.c.b16 %v3078, %v3076
  %v3105 = vpack.c.b16 %v3079, %v3077
  %v3106 = vpack.c.b16 %v3082, %v3080
  %v3107 = vpack.c.b16 %v3083, %v3081
  %v3133 = vsel %vm1401, %v2986, 0
  %3135 = vmatprep.subr.bf16.mxu0 %v3085
  %3136 = vmatpush1.bf16.msra.mxu0 %v3084
  %3137 = vmatprep.subr.bf16.mxu0 %v3087
  %3138 = vmatpush1.bf16.msra.mxu0 %v3086
  %3139 = vmatprep.subr.bf16.mxu0 %v3089
  %3140 = vmatpush1.bf16.msra.mxu0 %v3088
  %3141 = vmatprep.subr.bf16.mxu0 %v3091
  %3142 = vmatpush1.bf16.msra.mxu0 %v3090
  %3143 = vmatprep.subr.bf16.mxu0 %v3093
  %3144 = vmatpush1.bf16.msra.mxu0 %v3092
  %3145 = vmatprep.subr.bf16.mxu0 %v3095
  %3146 = vmatpush1.bf16.msra.mxu0 %v3094
  %3147 = vmatprep.subr.bf16.mxu0 %v3097
  %3148 = vmatpush1.bf16.msra.mxu0 %v3096
  %3149 = vmatprep.subr.bf16.mxu0 %v3099
  %3150 = vmatpush1.bf16.msra.mxu0 %v3098
  %3151 = vmatprep.subr.bf16.mxu0 %v3101
  %3152 = vmatpush1.bf16.msra.mxu0 %v3100
  %3153 = vmatprep.subr.bf16.mxu0 %v3103
  %3154 = vmatpush1.bf16.msra.mxu0 %v3102
  %3155 = vmatprep.subr.bf16.mxu0 %v3105
  %3156 = vmatpush1.bf16.msra.mxu0 %v3104
  %3157 = vmatprep.subr.bf16.mxu0 %v3107
  %3158 = vmatpush1.bf16.msra.mxu0 %v3106
  %3159 = vmatprep.subr.bf16.mxu0 0
  %3160 = vmatpush1.bf16.msra.mxu0 0
  %3161 = vmatprep.subr.bf16.mxu0 0
  %3162 = vmatpush1.bf16.msra.mxu0 0
  %3163 = vmatprep.subr.bf16.mxu0 0
  %3164 = vmatpush1.bf16.msra.mxu0 0
  %3165 = vmatprep.subr.bf16.mxu0 0
  %3166 = vmatpush1.bf16.msra.mxu0 0
  %3167 = vmatprep.mubr.bf16.mxu0 %v3133
  %3168 = vmatmul.mubr.bf16.gmra.mrb[0].mxu0 %v2985
  %v3169 = vpop.f32.mrb[0].mxu0
  %v3170 = vadd.f32 0.0, %v3169
  %v3171 = vpop.f32.mrb[0].mxu0
  %v3172 = vadd.f32 0.0, %v3171
  %v3173 = vpop.f32.mrb[0].mxu0
  %v3174 = vpop.f32.mrb[0].mxu0
  %3175 = vdwg.mxu0
  %v3176 = vadd.f32 %v2784, %v3170
  %v3177 = vadd.f32 %v2785, %v3172
  %v3178 = vld [vmem:[%s5] sm:$0x3]
  %v3180 = vlaneseq
  %v3181 = vshrl.u32 %v3180, 7
  %v3182 = vsub.s32 0, %v3181
  %v3183 = vrot.slane %v3178, %v3182
  %v3184 = vlaneseq
  %v3185 = vshrl.u32 %v3184, 7
  %v3186 = vsub.s32 1, %v3185
  %v3187 = vrot.slane %v3178, %v3186
  %v3190 = vadd.f32 %v3176, %v3183
  %v3191 = vadd.f32 %v3177, %v3187
  %v3192 = vmax.f32 %v3190, 0.0
  %v3193 = vmax.f32 %v3191, 0.0
  %v3194 = vpack.c.bf16 %v3192, %v3192
  %v3195 = vpack.c.bf16 %v3193, %v3193
  %v3196 = vld [vmem:[%s6] sm:$0xf]
  %v3197 = vld [vmem:[%s6 + $0x4] sm:$0xf]
  %v3198 = vld [vmem:[%s6 + $0x8] sm:$0xf]
  %v3199 = vld [vmem:[%s6 + $0xc] sm:$0xf]
  %v3200 = vld [vmem:[%s6 + $0x10] sm:$0xf]
  %v3201 = vld [vmem:[%s6 + $0x14] sm:$0xf]
  %v3202 = vld [vmem:[%s6 + $0x18] sm:$0xf]
  %v3203 = vld [vmem:[%s6 + $0x1c] sm:$0xf]
  %v3204 = vld [vmem:[%s6 + $0x20] sm:$0xf]
  %v3205 = vld [vmem:[%s6 + $0x24] sm:$0xf]
  %v3206 = vld [vmem:[%s6 + $0x28] sm:$0xf]
  %v3207 = vld [vmem:[%s6 + $0x2c] sm:$0xf]
  %v3208 = vld [vmem:[%s6 + $0x30] sm:$0xf]
  %v3209 = vld [vmem:[%s6 + $0x34] sm:$0xf]
  %v3210 = vld [vmem:[%s6 + $0x38] sm:$0xf]
  %v3211 = vld [vmem:[%s6 + $0x3c] sm:$0xf]
  %v3212 = vld [vmem:[%s6 + $0x40] sm:$0xf]
  %v3213 = vld [vmem:[%s6 + $0x44] sm:$0xf]
  %v3214 = vld [vmem:[%s6 + $0x48] sm:$0xf]
  %v3215 = vld [vmem:[%s6 + $0x4c] sm:$0xf]
  %v3216 = vld [vmem:[%s6 + $0x50] sm:$0xf]
  %v3217 = vld [vmem:[%s6 + $0x54] sm:$0xf]
  %v3218 = vld [vmem:[%s6 + $0x58] sm:$0xf]
  %v3219 = vld [vmem:[%s6 + $0x5c] sm:$0xf]
  %v3220 = vld [vmem:[%s6 + $0x60] sm:$0xf]
  %v3221 = vld [vmem:[%s6 + $0x64] sm:$0xf]
  %v3222 = vld [vmem:[%s6 + $0x68] sm:$0xf]
  %v3223 = vld [vmem:[%s6 + $0x6c] sm:$0xf]
  %v3224 = vld [vmem:[%s6 + $0x70] sm:$0xf]
  %v3225 = vld [vmem:[%s6 + $0x74] sm:$0xf]
  %v3226 = vld [vmem:[%s6 + $0x78] sm:$0xf]
  %v3227 = vld [vmem:[%s6 + $0x7c] sm:$0xf]
  %v3228 = vld [vmem:[%s7] sm:$0x1]
  %v3230 = vlaneseq
  %v3231 = vshrl.u32 %v3230, 7
  %v3232 = vsub.s32 0, %v3231
  %v3233 = vrot.slane %v3228, %v3232
  %v3267 = vunpack.c.l.b16 %v3196
  %v3268 = vunpack.c.l.b16 %v3197
  %v3269 = vunpack.c.l.b16 %v3198
  %v3270 = vunpack.c.l.b16 %v3199
  %v3271 = vunpack.c.l.b16 %v3200
  %v3272 = vunpack.c.l.b16 %v3201
  %v3273 = vunpack.c.l.b16 %v3202
  %v3274 = vunpack.c.l.b16 %v3203
  %v3275 = vunpack.c.l.b16 %v3204
  %v3276 = vunpack.c.l.b16 %v3205
  %v3277 = vunpack.c.l.b16 %v3206
  %v3278 = vunpack.c.l.b16 %v3207
  %v3279 = vunpack.c.l.b16 %v3208
  %v3280 = vunpack.c.l.b16 %v3209
  %v3281 = vunpack.c.l.b16 %v3210
  %v3282 = vunpack.c.l.b16 %v3211
  %v3283 = vunpack.c.l.b16 %v3212
  %v3284 = vunpack.c.l.b16 %v3213
  %v3285 = vunpack.c.l.b16 %v3214
  %v3286 = vunpack.c.l.b16 %v3215
  %v3287 = vunpack.c.l.b16 %v3216
  %v3288 = vunpack.c.l.b16 %v3217
  %v3289 = vunpack.c.l.b16 %v3218
  %v3290 = vunpack.c.l.b16 %v3219
  %v3291 = vunpack.c.l.b16 %v3220
  %v3292 = vunpack.c.l.b16 %v3221
  %v3293 = vunpack.c.l.b16 %v3222
  %v3294 = vunpack.c.l.b16 %v3223
  %v3295 = vunpack.c.l.b16 %v3224
  %v3296 = vunpack.c.l.b16 %v3225
  %v3297 = vunpack.c.l.b16 %v3226
  %v3298 = vunpack.c.l.b16 %v3227
  %v3299 = vpack.c.b16 %v3268, %v3267
  %v3300 = vpack.c.b16 %v3270, %v3269
  %v3301 = vpack.c.b16 %v3272, %v3271
  %v3302 = vpack.c.b16 %v3274, %v3273
  %v3303 = vpack.c.b16 %v3276, %v3275
  %v3304 = vpack.c.b16 %v3278, %v3277
  %v3305 = vpack.c.b16 %v3280, %v3279
  %v3306 = vpack.c.b16 %v3282, %v3281
  %v3307 = vpack.c.b16 %v3284, %v3283
  %v3308 = vpack.c.b16 %v3286, %v3285
  %v3309 = vpack.c.b16 %v3288, %v3287
  %v3310 = vpack.c.b16 %v3290, %v3289
  %v3311 = vpack.c.b16 %v3292, %v3291
  %v3312 = vpack.c.b16 %v3294, %v3293
  %v3313 = vpack.c.b16 %v3296, %v3295
  %v3314 = vpack.c.b16 %v3298, %v3297
  %3331 = vmatprep.subr.bf16.mxu0 0
  %3332 = vmatpush1.bf16.msra.mxu0 %v3299
  %3333 = vmatprep.subr.bf16.mxu0 0
  %3334 = vmatpush1.bf16.msra.mxu0 %v3300
  %3335 = vmatprep.subr.bf16.mxu0 0
  %3336 = vmatpush1.bf16.msra.mxu0 %v3301
  %3337 = vmatprep.subr.bf16.mxu0 0
  %3338 = vmatpush1.bf16.msra.mxu0 %v3302
  %3339 = vmatprep.subr.bf16.mxu0 0
  %3340 = vmatpush1.bf16.msra.mxu0 %v3303
  %3341 = vmatprep.subr.bf16.mxu0 0
  %3342 = vmatpush1.bf16.msra.mxu0 %v3304
  %3343 = vmatprep.subr.bf16.mxu0 0
  %3344 = vmatpush1.bf16.msra.mxu0 %v3305
  %3345 = vmatprep.subr.bf16.mxu0 0
  %3346 = vmatpush1.bf16.msra.mxu0 %v3306
  %3347 = vmatprep.subr.bf16.mxu0 0
  %3348 = vmatpush1.bf16.msra.mxu0 %v3307
  %3349 = vmatprep.subr.bf16.mxu0 0
  %3350 = vmatpush1.bf16.msra.mxu0 %v3308
  %3351 = vmatprep.subr.bf16.mxu0 0
  %3352 = vmatpush1.bf16.msra.mxu0 %v3309
  %3353 = vmatprep.subr.bf16.mxu0 0
  %3354 = vmatpush1.bf16.msra.mxu0 %v3310
  %3355 = vmatprep.subr.bf16.mxu0 0
  %3356 = vmatpush1.bf16.msra.mxu0 %v3311
  %3357 = vmatprep.subr.bf16.mxu0 0
  %3358 = vmatpush1.bf16.msra.mxu0 %v3312
  %3359 = vmatprep.subr.bf16.mxu0 0
  %3360 = vmatpush1.bf16.msra.mxu0 %v3313
  %3361 = vmatprep.subr.bf16.mxu0 0
  %3362 = vmatpush1.bf16.msra.mxu0 %v3314
  %3363 = vmatprep.mubr.bf16.mxu0 %v3195
  %3364 = vmatmul.mubr.bf16.gmra.mrb[0].mxu0 %v3194
  %v3365 = vpop.f32.mrb[0].mxu0
  %v3366 = vadd.f32 %v3233, %v3365
  %v3367 = vpop.f32.mrb[0].mxu0
  %v3368 = vpop.f32.mrb[0].mxu0
  %v3369 = vpop.f32.mrb[0].mxu0
  %3370 = vdwg.mxu0
  %v3371 = vmax.f32 %v3366, 0.0
  %v3372 = vpack.c.bf16 %v3371, %v3371
  %v3373 = vld [vmem:[%s1] sm:$0xf]
  %v3374 = vld [vmem:[%s8] sm:$0xf]
  %v3375 = vld [vmem:[%s8 + $0x4] sm:$0xf]
  %v3376 = vld [vmem:[%s9] sm:$0x1]
  %v3378 = vlaneseq
  %v3379 = vshrl.u32 %v3378, 7
  %v3380 = vsub.s32 0, %v3379
  %v3381 = vrot.slane %v3376, %v3380
  %v3385 = vunpack.c.l.b16 %v3374
  %v3386 = vunpack.c.l.b16 %v3375
  %v3387 = vpack.c.b16 %v3386, %v3385
  %vm3389 = vcmask 130048
  %v3391 = vsel %vm3389, %v3373, 0
  %3393 = vmatprep.subr.bf16.mxu0 0
  %3394 = vmatpush1.bf16.msra.mxu0 %v3387
  %3395 = vmatprep.subr.bf16.mxu0 0
  %3396 = vmatpush1.bf16.msra.mxu0 0
  %3397 = vmatprep.subr.bf16.mxu0 0
  %3398 = vmatpush1.bf16.msra.mxu0 0
  %3399 = vmatprep.subr.bf16.mxu0 0
  %3400 = vmatpush1.bf16.msra.mxu0 0
  %3401 = vmatprep.subr.bf16.mxu0 0
  %3402 = vmatpush1.bf16.msra.mxu0 0
  %3403 = vmatprep.subr.bf16.mxu0 0
  %3404 = vmatpush1.bf16.msra.mxu0 0
  %3405 = vmatprep.subr.bf16.mxu0 0
  %3406 = vmatpush1.bf16.msra.mxu0 0
  %3407 = vmatprep.subr.bf16.mxu0 0
  %3408 = vmatpush1.bf16.msra.mxu0 0
  %3409 = vmatprep.subr.bf16.mxu0 0
  %3410 = vmatpush1.bf16.msra.mxu0 0
  %3411 = vmatprep.subr.bf16.mxu0 0
  %3412 = vmatpush1.bf16.msra.mxu0 0
  %3413 = vmatprep.subr.bf16.mxu0 0
  %3414 = vmatpush1.bf16.msra.mxu0 0
  %3415 = vmatprep.subr.bf16.mxu0 0
  %3416 = vmatpush1.bf16.msra.mxu0 0
  %3417 = vmatprep.subr.bf16.mxu0 0
  %3418 = vmatpush1.bf16.msra.mxu0 0
  %3419 = vmatprep.subr.bf16.mxu0 0
  %3420 = vmatpush1.bf16.msra.mxu0 0
  %3421 = vmatprep.subr.bf16.mxu0 0
  %3422 = vmatpush1.bf16.msra.mxu0 0
  %3423 = vmatprep.subr.bf16.mxu0 0
  %3424 = vmatpush1.bf16.msra.mxu0 0
  %3425 = vmatprep.mubr.bf16.mxu0 0
  %3426 = vmatmul.mubr.bf16.gmra.mrb[0].mxu0 %v3391
  %v3427 = vpop.f32.mrb[0].mxu0
  %v3428 = vadd.f32 %v3381, %v3427
  %v3429 = vpop.f32.mrb[0].mxu0
  %v3430 = vpop.f32.mrb[0].mxu0
  %v3431 = vpop.f32.mrb[0].mxu0
  %3432 = vdwg.mxu0
  %v3433 = vtanh.pop %v3428
  %v3434 = vpack.c.bf16 %v3433, %v3433
  %v3435 = vld [vmem:[%s10] sm:$0xf]
  %v3436 = vld [vmem:[%s10 + $0x4] sm:$0xf]
  %v3437 = vld [vmem:[%s10 + $0x8] sm:$0xf]
  %v3438 = vld [vmem:[%s10 + $0xc] sm:$0xf]
  %v3439 = vld [vmem:[%s10 + $0x10] sm:$0xf]
  %v3440 = vld [vmem:[%s10 + $0x14] sm:$0xf]
  %v3441 = vld [vmem:[%s10 + $0x18] sm:$0xf]
  %v3442 = vld [vmem:[%s10 + $0x1c] sm:$0xf]
  %v3443 = vld [vmem:[%s10 + $0x20] sm:$0xf]
  %v3444 = vld [vmem:[%s10 + $0x24] sm:$0xf]
  %v3445 = vld [vmem:[%s10 + $0x28] sm:$0xf]
  %v3446 = vld [vmem:[%s10 + $0x2c] sm:$0xf]
  %v3447 = vld [vmem:[%s10 + $0x30] sm:$0xf]
  %v3448 = vld [vmem:[%s10 + $0x34] sm:$0xf]
  %v3449 = vld [vmem:[%s10 + $0x38] sm:$0xf]
  %v3450 = vld [vmem:[%s10 + $0x3c] sm:$0xf]
  %v3451 = vld [vmem:[%s11] sm:$0x1]
  %v3453 = vlaneseq
  %v3454 = vshrl.u32 %v3453, 7
  %v3455 = vsub.s32 0, %v3454
  %v3456 = vrot.slane %v3451, %v3455
  %v3474 = vunpack.c.l.b16 %v3435
  %v3475 = vunpack.c.l.b16 %v3436
  %v3476 = vunpack.c.l.b16 %v3437
  %v3477 = vunpack.c.l.b16 %v3438
  %v3478 = vunpack.c.l.b16 %v3439
  %v3479 = vunpack.c.l.b16 %v3440
  %v3480 = vunpack.c.l.b16 %v3441
  %v3481 = vunpack.c.l.b16 %v3442
  %v3482 = vunpack.c.l.b16 %v3443
  %v3483 = vunpack.c.l.b16 %v3444
  %v3484 = vunpack.c.l.b16 %v3445
  %v3485 = vunpack.c.l.b16 %v3446
  %v3486 = vunpack.c.l.b16 %v3447
  %v3487 = vunpack.c.l.b16 %v3448
  %v3488 = vunpack.c.l.b16 %v3449
  %v3489 = vunpack.c.l.b16 %v3450
  %v3490 = vpack.c.b16 %v3475, %v3474
  %v3491 = vpack.c.b16 %v3477, %v3476
  %v3492 = vpack.c.b16 %v3479, %v3478
  %v3493 = vpack.c.b16 %v3481, %v3480
  %v3494 = vpack.c.b16 %v3483, %v3482
  %v3495 = vpack.c.b16 %v3485, %v3484
  %v3496 = vpack.c.b16 %v3487, %v3486
  %v3497 = vpack.c.b16 %v3489, %v3488
  %3506 = vmatprep.subr.bf16.mxu0 0
  %3507 = vmatpush1.bf16.msra.mxu0 %v3490
  %3508 = vmatprep.subr.bf16.mxu0 0
  %3509 = vmatpush1.bf16.msra.mxu0 %v3491
  %3510 = vmatprep.subr.bf16.mxu0 0
  %3511 = vmatpush1.bf16.msra.mxu0 %v3492
  %3512 = vmatprep.subr.bf16.mxu0 0
  %3513 = vmatpush1.bf16.msra.mxu0 %v3493
  %3514 = vmatprep.subr.bf16.mxu0 0
  %3515 = vmatpush1.bf16.msra.mxu0 %v3494
  %3516 = vmatprep.subr.bf16.mxu0 0
  %3517 = vmatpush1.bf16.msra.mxu0 %v3495
  %3518 = vmatprep.subr.bf16.mxu0 0
  %3519 = vmatpush1.bf16.msra.mxu0 %v3496
  %3520 = vmatprep.subr.bf16.mxu0 0
  %3521 = vmatpush1.bf16.msra.mxu0 %v3497
  %3522 = vmatprep.subr.bf16.mxu0 0
  %3523 = vmatpush1.bf16.msra.mxu0 0
  %3524 = vmatprep.subr.bf16.mxu0 0
  %3525 = vmatpush1.bf16.msra.mxu0 0
  %3526 = vmatprep.subr.bf16.mxu0 0
  %3527 = vmatpush1.bf16.msra.mxu0 0
  %3528 = vmatprep.subr.bf16.mxu0 0
  %3529 = vmatpush1.bf16.msra.mxu0 0
  %3530 = vmatprep.subr.bf16.mxu0 0
  %3531 = vmatpush1.bf16.msra.mxu0 0
  %3532 = vmatprep.subr.bf16.mxu0 0
  %3533 = vmatpush1.bf16.msra.mxu0 0
  %3534 = vmatprep.subr.bf16.mxu0 0
  %3535 = vmatpush1.bf16.msra.mxu0 0
  %3536 = vmatprep.subr.bf16.mxu0 0
  %3537 = vmatpush1.bf16.msra.mxu0 0
  %3538 = vmatprep.mubr.bf16.mxu0 0
  %3539 = vmatmul.mubr.bf16.gmra.mrb[0].mxu0 %v3434
  %v3540 = vpop.f32.mrb[0].mxu0
  %v3541 = vadd.f32 %v3456, %v3540
  %v3542 = vpop.f32.mrb[0].mxu0
  %v3543 = vpop.f32.mrb[0].mxu0
  %v3544 = vpop.f32.mrb[0].mxu0
  %3545 = vdwg.mxu0
  %v3546 = vtanh.pop %v3541
  %v3547 = vpack.c.bf16 %v3546, %v3546
  %v3548 = vld [vmem:[%s12] sm:$0xf]
  %v3549 = vld [vmem:[%s12 + $0x4] sm:$0xf]
  %v3550 = vld [vmem:[%s12 + $0x8] sm:$0xf]
  %v3551 = vld [vmem:[%s12 + $0xc] sm:$0xf]
  %v3552 = vld [vmem:[%s12 + $0x10] sm:$0xf]
  %v3553 = vld [vmem:[%s12 + $0x14] sm:$0xf]
  %v3554 = vld [vmem:[%s12 + $0x18] sm:$0xf]
  %v3555 = vld [vmem:[%s12 + $0x1c] sm:$0xf]
  %v3556 = vld [vmem:[%s12 + $0x20] sm:$0xf]
  %v3557 = vld [vmem:[%s12 + $0x24] sm:$0xf]
  %v3558 = vld [vmem:[%s12 + $0x28] sm:$0xf]
  %v3559 = vld [vmem:[%s12 + $0x2c] sm:$0xf]
  %v3560 = vld [vmem:[%s12 + $0x30] sm:$0xf]
  %v3561 = vld [vmem:[%s12 + $0x34] sm:$0xf]
  %v3562 = vld [vmem:[%s12 + $0x38] sm:$0xf]
  %v3563 = vld [vmem:[%s12 + $0x3c] sm:$0xf]
  %v3564 = vld [vmem:[%s13] sm:$0xf]
  %v3565 = vld [vmem:[%s13 + $0x4] sm:$0xf]
  %v3566 = vld [vmem:[%s13 + $0x8] sm:$0xf]
  %v3567 = vld [vmem:[%s13 + $0xc] sm:$0xf]
  %v3568 = vld [vmem:[%s13 + $0x10] sm:$0xf]
  %v3569 = vld [vmem:[%s13 + $0x14] sm:$0xf]
  %v3570 = vld [vmem:[%s13 + $0x18] sm:$0xf]
  %v3571 = vld [vmem:[%s13 + $0x1c] sm:$0xf]
  %v3572 = vld [vmem:[%s13 + $0x20] sm:$0xf]
  %v3573 = vld [vmem:[%s13 + $0x24] sm:$0xf]
  %v3574 = vld [vmem:[%s13 + $0x28] sm:$0xf]
  %v3575 = vld [vmem:[%s13 + $0x2c] sm:$0xf]
  %v3576 = vld [vmem:[%s13 + $0x30] sm:$0xf]
  %v3577 = vld [vmem:[%s13 + $0x34] sm:$0xf]
  %v3578 = vld [vmem:[%s13 + $0x38] sm:$0xf]
  %v3579 = vld [vmem:[%s13 + $0x3c] sm:$0xf]
  %v3596 = vunpack.c.l.b16 %v3564
  %v3597 = vunpack.c.l.b16 %v3565
  %v3598 = vunpack.c.l.b16 %v3566
  %v3599 = vunpack.c.l.b16 %v3567
  %v3600 = vunpack.c.l.b16 %v3568
  %v3601 = vunpack.c.l.b16 %v3569
  %v3602 = vunpack.c.l.b16 %v3570
  %v3603 = vunpack.c.l.b16 %v3571
  %v3604 = vunpack.c.l.b16 %v3572
  %v3605 = vunpack.c.l.b16 %v3573
  %v3606 = vunpack.c.l.b16 %v3574
  %v3607 = vunpack.c.l.b16 %v3575
  %v3608 = vunpack.c.l.b16 %v3576
  %v3609 = vunpack.c.l.b16 %v3577
  %v3610 = vunpack.c.l.b16 %v3578
  %v3611 = vunpack.c.l.b16 %v3579
  %v3612 = vpack.c.b16 %v3597, %v3596
  %v3613 = vpack.c.b16 %v3599, %v3598
  %v3614 = vpack.c.b16 %v3601, %v3600
  %v3615 = vpack.c.b16 %v3603, %v3602
  %v3616 = vpack.c.b16 %v3605, %v3604
  %v3617 = vpack.c.b16 %v3607, %v3606
  %v3618 = vpack.c.b16 %v3609, %v3608
  %v3619 = vpack.c.b16 %v3611, %v3610
  %3628 = vmatprep.subr.bf16.mxu0 0
  %3629 = vmatpush1.bf16.msra.mxu0 %v3612
  %3630 = vmatprep.subr.bf16.mxu0 0
  %3631 = vmatpush1.bf16.msra.mxu0 %v3613
  %3632 = vmatprep.subr.bf16.mxu0 0
  %3633 = vmatpush1.bf16.msra.mxu0 %v3614
  %3634 = vmatprep.subr.bf16.mxu0 0
  %3635 = vmatpush1.bf16.msra.mxu0 %v3615
  %3636 = vmatprep.subr.bf16.mxu0 0
  %3637 = vmatpush1.bf16.msra.mxu0 %v3616
  %3638 = vmatprep.subr.bf16.mxu0 0
  %3639 = vmatpush1.bf16.msra.mxu0 %v3617
  %3640 = vmatprep.subr.bf16.mxu0 0
  %3641 = vmatpush1.bf16.msra.mxu0 %v3618
  %3642 = vmatprep.subr.bf16.mxu0 0
  %3643 = vmatpush1.bf16.msra.mxu0 %v3619
  %3644 = vmatprep.subr.bf16.mxu0 0
  %3645 = vmatpush1.bf16.msra.mxu0 0
  %3646 = vmatprep.subr.bf16.mxu0 0
  %3647 = vmatpush1.bf16.msra.mxu0 0
  %3648 = vmatprep.subr.bf16.mxu0 0
  %3649 = vmatpush1.bf16.msra.mxu0 0
  %3650 = vmatprep.subr.bf16.mxu0 0
  %3651 = vmatpush1.bf16.msra.mxu0 0
  %3652 = vmatprep.subr.bf16.mxu0 0
  %3653 = vmatpush1.bf16.msra.mxu0 0
  %3654 = vmatprep.subr.bf16.mxu0 0
  %3655 = vmatpush1.bf16.msra.mxu0 0
  %3656 = vmatprep.subr.bf16.mxu0 0
  %3657 = vmatpush1.bf16.msra.mxu0 0
  %3658 = vmatprep.subr.bf16.mxu0 0
  %3659 = vmatpush1.bf16.msra.mxu0 0
  %3660 = vmatprep.mubr.bf16.mxu0 0
  %3661 = vmatmul.mubr.bf16.gmra.mrb[0].mxu0 %v3547
  %v3662 = vpop.f32.mrb[0].mxu0
  %v3663 = vadd.f32 0.0, %v3662
  %v3664 = vpop.f32.mrb[0].mxu0
  %v3665 = vpop.f32.mrb[0].mxu0
  %v3666 = vpop.f32.mrb[0].mxu0
  %3667 = vdwg.mxu0
  %v3684 = vunpack.c.l.b16 %v3548
  %v3685 = vunpack.c.l.b16 %v3549
  %v3686 = vunpack.c.l.b16 %v3550
  %v3687 = vunpack.c.l.b16 %v3551
  %v3688 = vunpack.c.l.b16 %v3552
  %v3689 = vunpack.c.l.b16 %v3553
  %v3690 = vunpack.c.l.b16 %v3554
  %v3691 = vunpack.c.l.b16 %v3555
  %v3692 = vunpack.c.l.b16 %v3556
  %v3693 = vunpack.c.l.b16 %v3557
  %v3694 = vunpack.c.l.b16 %v3558
  %v3695 = vunpack.c.l.b16 %v3559
  %v3696 = vunpack.c.l.b16 %v3560
  %v3697 = vunpack.c.l.b16 %v3561
  %v3698 = vunpack.c.l.b16 %v3562
  %v3699 = vunpack.c.l.b16 %v3563
  %v3700 = vpack.c.b16 %v3685, %v3684
  %v3701 = vpack.c.b16 %v3687, %v3686
  %v3702 = vpack.c.b16 %v3689, %v3688
  %v3703 = vpack.c.b16 %v3691, %v3690
  %v3704 = vpack.c.b16 %v3693, %v3692
  %v3705 = vpack.c.b16 %v3695, %v3694
  %v3706 = vpack.c.b16 %v3697, %v3696
  %v3707 = vpack.c.b16 %v3699, %v3698
  %3716 = vmatprep.subr.bf16.mxu0 0
  %3717 = vmatpush1.bf16.msra.mxu0 %v3700
  %3718 = vmatprep.subr.bf16.mxu0 0
  %3719 = vmatpush1.bf16.msra.mxu0 %v3701
  %3720 = vmatprep.subr.bf16.mxu0 0
  %3721 = vmatpush1.bf16.msra.mxu0 %v3702
  %3722 = vmatprep.subr.bf16.mxu0 0
  %3723 = vmatpush1.bf16.msra.mxu0 %v3703
  %3724 = vmatprep.subr.bf16.mxu0 0
  %3725 = vmatpush1.bf16.msra.mxu0 %v3704
  %3726 = vmatprep.subr.bf16.mxu0 0
  %3727 = vmatpush1.bf16.msra.mxu0 %v3705
  %3728 = vmatprep.subr.bf16.mxu0 0
  %3729 = vmatpush1.bf16.msra.mxu0 %v3706
  %3730 = vmatprep.subr.bf16.mxu0 0
  %3731 = vmatpush1.bf16.msra.mxu0 %v3707
  %3732 = vmatprep.subr.bf16.mxu0 0
  %3733 = vmatpush1.bf16.msra.mxu0 0
  %3734 = vmatprep.subr.bf16.mxu0 0
  %3735 = vmatpush1.bf16.msra.mxu0 0
  %3736 = vmatprep.subr.bf16.mxu0 0
  %3737 = vmatpush1.bf16.msra.mxu0 0
  %3738 = vmatprep.subr.bf16.mxu0 0
  %3739 = vmatpush1.bf16.msra.mxu0 0
  %3740 = vmatprep.subr.bf16.mxu0 0
  %3741 = vmatpush1.bf16.msra.mxu0 0
  %3742 = vmatprep.subr.bf16.mxu0 0
  %3743 = vmatpush1.bf16.msra.mxu0 0
  %3744 = vmatprep.subr.bf16.mxu0 0
  %3745 = vmatpush1.bf16.msra.mxu0 0
  %3746 = vmatprep.subr.bf16.mxu0 0
  %3747 = vmatpush1.bf16.msra.mxu0 0
  %3748 = vmatprep.mubr.bf16.mxu0 0
  %3749 = vmatmul.mubr.bf16.gmra.mrb[0].mxu0 %v3372
  %v3750 = vpop.f32.mrb[0].mxu0
  %v3751 = vadd.f32 %v3663, %v3750
  %v3752 = vpop.f32.mrb[0].mxu0
  %v3753 = vpop.f32.mrb[0].mxu0
  %v3754 = vpop.f32.mrb[0].mxu0
  %3755 = vdwg.mxu0
  %v3756 = vld [vmem:[%s14] sm:$0x1]
  %v3758 = vlaneseq
  %v3759 = vshrl.u32 %v3758, 7
  %v3760 = vsub.s32 0, %v3759
  %v3761 = vrot.slane %v3756, %v3760
  %v3763 = vadd.f32 %v3751, %v3761
  %v3764 = vtanh.pop %v3763
  %3765 = vst [vmem:[%s15] sm:$0xff] %v3764
  // Predicated region
  $region62: #{net_forward.1} parent=0 // pred_check
    _
  $region63: #{net_forward.1} parent=0 // pred_check_branch
    %3767 = sbr.rel (0) target = $region65
  $region64: #{net_forward.1} parent=0 // pred_region
    _
  $region65: #{net_forward.1} parent=0 // pred_fallthru
    _
  // Predicated region
  $region66: #{net_forward.1} parent=0 // pred_check
    _
  $region67: #{net_forward.1} parent=0 // pred_check_branch
    %3769 = sbr.rel (0) target = $region69
  $region68: #{net_forward.1} parent=0 // pred_region
    _
  $region69: #{net_forward.1} parent=0 // pred_fallthru
    _

</llo_original>
